<compile_context>
chip_gen: v5e
topology: v5e:2x2
jax: 0.10.0
libtpu: 0.0.40
codegen_flags: <defaults>
</compile_context>

<pallas_src>
import functools

import jax
import jax.numpy as jnp
from jax import lax
from jax.experimental import pallas as pl
from jax.experimental.pallas import tpu as pltpu

HIDDEN = 128  # LSTM hidden size per direction (fixed by the module)


def _phi_psi_kernel(pre_f_ref, pre_b_ref, whh_f_ref, whh_b_ref,
                    whead_ref, bhead_ref, out_ref,
                    hf_hist, hb_hist, hf_c, cf_c, hb_c, cb_c,
                    *, T, tT, block_b):
    # Grid: (batch block b [parallel], time block t [arbitrary, innermost]).
    #   pre_f_ref / pre_b_ref : (tT, block_b, 4H) streamed per time block (bwd reversed)
    #   whh_*                 : (H, 4H) bf16, resident
    #   whead (2H, 2), bhead (1, 2)
    #   out_ref               : (T, block_b, 2), written once on the last time block
    #   hf_hist / hb_hist     : (T*block_b, H) f32 scratch, resident across time blocks
    #   *_c                   : (block_b, H) f32 carries, persist across time blocks
    H = HIDDEN
    t_blk = pl.program_id(1)
    nT = pl.num_programs(1)

    # Fresh (h, c) for both directions at the start of each batch block's time sweep.
    @pl.when(t_blk == 0)
    def _():
        z = jnp.zeros((block_b, H), jnp.float32)
        hf_c[...] = z
        cf_c[...] = z
        hb_c[...] = z
        cb_c[...] = z

    def cell(pre_t, h, c, whh_ref):
        # PyTorch gate order: i, f, g, o.  Whh is bf16, h cast at the dot site, f32 accum.
        gates = pre_t + jnp.dot(h.astype(jnp.bfloat16), whh_ref[...],
                                preferred_element_type=jnp.float32)
        i = jax.nn.sigmoid(gates[:, 0 * H:1 * H])
        f = jax.nn.sigmoid(gates[:, 1 * H:2 * H])
        g = jnp.tanh(gates[:, 2 * H:3 * H])
        o = jax.nn.sigmoid(gates[:, 3 * H:4 * H])
        c_new = f * c + i * g
        h_new = o * jnp.tanh(c_new)
        return h_new, c_new

    t0_f = t_blk * tT               # first global time step this block handles (forward)
    t0_b = (nT - 1 - t_blk) * tT    # first global time index of this backward pre block

    # Fused forward/backward recurrence: two independent dependency chains per iteration.
    def body(s, carry):
        h_f, c_f, h_b, c_b = carry
        h_f, c_f = cell(pre_f_ref[s], h_f, c_f, whh_f_ref)
        h_b, c_b = cell(pre_b_ref[tT - 1 - s], h_b, c_b, whh_b_ref)
        row_f = pl.multiple_of((t0_f + s) * block_b, block_b)
        row_b = pl.multiple_of((t0_b + tT - 1 - s) * block_b, block_b)
        hf_hist[pl.ds(row_f, block_b), :] = h_f
        hb_hist[pl.ds(row_b, block_b), :] = h_b
        return (h_f, c_f, h_b, c_b)

    carry = (hf_c[...], cf_c[...], hb_c[...], cb_c[...])
    carry = lax.fori_loop(0, tT, body, carry, unroll=min(tT, 8))
    hf_c[...], cf_c[...], hb_c[...], cb_c[...] = carry

    # Head: split big-M matmul over the two directions (no concat), once, at the end.
    @pl.when(t_blk == nT - 1)
    def _():
        out2d = (jnp.dot(hf_hist[...], whead_ref[0:H, :],
                         preferred_element_type=jnp.float32)
                 + jnp.dot(hb_hist[...], whead_ref[H:2 * H, :],
                           preferred_element_type=jnp.float32)
                 + bhead_ref[...])
        out_ref[...] = out2d.reshape(T, block_b, 2)


def _pick_time_block(T, cap=64):
    if T <= cap:
        return T
    for cand in range(cap, 0, -1):
        if T % cand == 0:
            return cand
    return T


def phi_psi_predictor(x, params, *, block_b=8, time_block_cap=64):
    """x: (B, T, D) float32 (batch_first, like PyTorch). Returns (B, T, 2)."""
    B, T, D = x.shape
    H = HIDDEN
    assert block_b % 8 == 0
    Bp = ((B + block_b - 1) // block_b) * block_b
    nB = Bp // block_b
    tT = _pick_time_block(T, time_block_cap)
    nT = T // tT

    x_tm = jnp.transpose(x, (1, 0, 2)).astype(jnp.float32)   # (T, B, D), time-major
    if Bp != B:
        x_tm = jnp.pad(x_tm, ((0, 0), (0, Bp - B), (0, 0)))  # (T, Bp, D)

    # Input projection + biases hoisted fully off the serial chain (plain XLA matmuls);
    # the kernel streams these per time block.
    pre_f = jnp.einsum("tbd,dg->tbg", x_tm, params["wih_f"]) + params["b_f"]  # (T,Bp,4H)
    pre_b = jnp.einsum("tbd,dg->tbg", x_tm, params["wih_b"]) + params["b_b"]  # (T,Bp,4H)

    # bf16 recurrent weights (f32 accumulation): biggest per-step MXU latency lever.
    whh_f = params["whh_f"].astype(jnp.bfloat16)
    whh_b = params["whh_b"].astype(jnp.bfloat16)

    # Scoped-VMEM budget from the real footprint + generous headroom.
    f32b = 4
    footprint = (
        2 * 2 * tT * block_b * 4 * H * f32b       # pre_f/pre_b blocks, double-buffered
        + 2 * T * block_b * H * f32b              # hf/hb histories (resident)
        + 2 * T * block_b * 128 * f32b            # out block (lane-padded), 2 buffers
        + 2 * H * 4 * H * 2                       # whh_f/whh_b (bf16)
        + 2 * H * 128 * f32b + 128 * f32b         # head weights/bias (lane-padded)
        + 4 * block_b * H * f32b)                 # (h, c) carries
    vmem_limit = int(min(100 * 1024 * 1024, footprint + (32 << 20)))

    kernel = functools.partial(_phi_psi_kernel, T=T, tT=tT, block_b=block_b)

    grid_spec = pltpu.PrefetchScalarGridSpec(
        num_scalar_prefetch=0,
        grid=(nB, nT),  # batch blocks (independent), time blocks (recurrence)
        in_specs=[
            pl.BlockSpec((tT, block_b, 4 * H), lambda b, t: (t, b, 0)),           # pre_f
            pl.BlockSpec((tT, block_b, 4 * H), lambda b, t: (nT - 1 - t, b, 0)),  # pre_b
            pl.BlockSpec((H, 4 * H), lambda b, t: (0, 0)),                        # whh_f
            pl.BlockSpec((H, 4 * H), lambda b, t: (0, 0)),                        # whh_b
            pl.BlockSpec((2 * H, 2), lambda b, t: (0, 0)),                        # w_head
            pl.BlockSpec((1, 2), lambda b, t: (0, 0)),                            # b_head
        ],
        out_specs=pl.BlockSpec((T, block_b, 2), lambda b, t: (0, b, 0)),
        scratch_shapes=[
            pltpu.VMEM((T * block_b, H), jnp.float32),   # forward hidden-state history
            pltpu.VMEM((T * block_b, H), jnp.float32),   # backward hidden-state history
            pltpu.VMEM((block_b, H), jnp.float32),       # h_fwd carry
            pltpu.VMEM((block_b, H), jnp.float32),       # c_fwd carry
            pltpu.VMEM((block_b, H), jnp.float32),       # h_bwd carry
            pltpu.VMEM((block_b, H), jnp.float32),       # c_bwd carry
        ],
    )

    out = pl.pallas_call(
        kernel,
        out_shape=jax.ShapeDtypeStruct((T, Bp, 2), jnp.float32),
        grid_spec=grid_spec,
        compiler_params=pltpu.CompilerParams(
            dimension_semantics=("parallel", "arbitrary"),
            vmem_limit_bytes=vmem_limit),
    )(pre_f, pre_b, whh_f, whh_b, params["w_head"], params["b_head"])

    out = out[:, :B, :]                    # drop padded batch rows -> (T, B, 2)
    return jnp.transpose(out, (1, 0, 2))   # (B, T, 2)


def init_params(key, input_dim=20, hidden=HIDDEN):
    """Deterministic synthetic parameters matching nn.LSTM / nn.Linear shapes.

    PyTorch shapes -> kernel layout:
      weight_ih_l0        (4H, D)  -> wih_f (D, 4H)
      weight_hh_l0        (4H, H)  -> whh_f (H, 4H)
      bias_ih_l0+bias_hh  (4H,)    -> b_f   (1, 4H)
      (same for *_reverse -> *_b)
      phi_head.weight (1, 2H), psi_head.weight (1, 2H) -> w_head (2H, 2)
      phi_head.bias (1,), psi_head.bias (1,)           -> b_head (1, 2)
    """
    k = 1.0 / jnp.sqrt(jnp.float32(hidden))
    keys = jax.random.split(key, 12)

    def u(kk, shape):
        return jax.random.uniform(kk, shape, jnp.float32, -k, k)

    params = {
        "wih_f": u(keys[0], (input_dim, 4 * hidden)),
        "whh_f": u(keys[1], (hidden, 4 * hidden)),
        "b_f":   u(keys[2], (1, 4 * hidden)) + u(keys[3], (1, 4 * hidden)),
        "wih_b": u(keys[4], (input_dim, 4 * hidden)),
        "whh_b": u(keys[5], (hidden, 4 * hidden)),
        "b_b":   u(keys[6], (1, 4 * hidden)) + u(keys[7], (1, 4 * hidden)),
        "w_head": jnp.stack(
            [u(keys[8], (2 * hidden,)), u(keys[9], (2 * hidden,))], axis=1),  # (2H, 2)
        "b_head": jnp.concatenate(
            [u(keys[10], (1, 1)), u(keys[11], (1, 1))], axis=1),              # (1, 2)
    }
    return params


def reference(x, params, hidden=HIDDEN):
    """Pure-JAX f32 reference of the same forward pass (for validation)."""
    B, T, D = x.shape
    H = hidden

    def cell(x_t, h, c, wih, whh, b):
        gates = x_t @ wih + h @ whh + b
        i = jax.nn.sigmoid(gates[:, 0 * H:1 * H])
        f = jax.nn.sigmoid(gates[:, 1 * H:2 * H])
        g = jnp.tanh(gates[:, 2 * H:3 * H])
        o = jax.nn.sigmoid(gates[:, 3 * H:4 * H])
        c_new = f * c + i * g
        h_new = o * jnp.tanh(c_new)
        return h_new, c_new

    def run_dir(xs, wih, whh, b):
        def step(carry, x_t):
            h, c = carry
            h, c = cell(x_t, h, c, wih, whh, b)
            return (h, c), h
        h0 = jnp.zeros((B, H), jnp.float32)
        c0 = jnp.zeros((B, H), jnp.float32)
        _, hs = lax.scan(step, (h0, c0), xs)
        return hs  # (T, B, H)

    x_tm = jnp.transpose(x, (1, 0, 2))
    hf = run_dir(x_tm, params["wih_f"], params["whh_f"], params["b_f"])
    hb = run_dir(x_tm[::-1], params["wih_b"], params["whh_b"], params["b_b"])[::-1]
    lstm_out = jnp.concatenate([hf, hb], axis=-1)            # (T, B, 2H)
    out = lstm_out @ params["w_head"] + params["b_head"]     # (T, B, 2)
    return jnp.transpose(out, (1, 0, 2))


if __name__ == "__main__":
    B, T, D = 2, 8, 20
    key = jax.random.PRNGKey(0)
    kx, kp = jax.random.split(key)
    x = jax.random.normal(kx, (B, T, D), jnp.float32)
    params = init_params(kp, input_dim=D)

    out = phi_psi_predictor(x, params)
    out = jax.block_until_ready(out)

    ref = reference(x, params)
    assert out.shape == (B, T, 2), out.shape
    # Tolerance relaxed (bf16 recurrent weights on the MXU, f32 accumulation).
    assert jnp.allclose(out, ref, atol=2e-2, rtol=2e-2), "mismatch vs reference"
    print("KERNEL_OK")
</pallas_src>

<mosaic_0001>
module attributes {stable_mosaic.version = 11 : i64} {
  func.func @_phi_psi_kernel(%arg0: i32, %arg1: i32, %arg2: memref<8x8x512xf32, #tpu.memory_space<vmem>>, %arg3: memref<8x8x512xf32, #tpu.memory_space<vmem>>, %arg4: memref<128x512xbf16, #tpu.memory_space<vmem>>, %arg5: memref<128x512xbf16, #tpu.memory_space<vmem>>, %arg6: memref<256x2xf32, #tpu.memory_space<vmem>>, %arg7: memref<1x2xf32, #tpu.memory_space<vmem>>, %arg8: memref<8x8x2xf32, #tpu.memory_space<vmem>>, %arg9: memref<64x128xf32, #tpu.memory_space<vmem>>, %arg10: memref<64x128xf32, #tpu.memory_space<vmem>>, %arg11: memref<8x128xf32, #tpu.memory_space<vmem>>, %arg12: memref<8x128xf32, #tpu.memory_space<vmem>>, %arg13: memref<8x128xf32, #tpu.memory_space<vmem>>, %arg14: memref<8x128xf32, #tpu.memory_space<vmem>>) attributes {dimension_semantics = [#tpu.dimension_semantics<parallel>, #tpu.dimension_semantics<arbitrary>], iteration_bounds = array<i64: 1, 1>, scalar_prefetch = 0 : i64, scratch_operands = 6 : i64, tpu.core_type = #tpu.core_type<tc>, window_params = [{transform_indices = @transform_0, window_bounds = array<i64: 8, 8, 512>}, {transform_indices = @transform_1, window_bounds = array<i64: 8, 8, 512>}, {pipeline_mode = #tpu.pipeline_mode<synchronous>, transform_indices = @transform_2, window_bounds = array<i64: 128, 512>}, {pipeline_mode = #tpu.pipeline_mode<synchronous>, transform_indices = @transform_3, window_bounds = array<i64: 128, 512>}, {pipeline_mode = #tpu.pipeline_mode<synchronous>, transform_indices = @transform_4, window_bounds = array<i64: 256, 2>}, {pipeline_mode = #tpu.pipeline_mode<synchronous>, transform_indices = @transform_5, window_bounds = array<i64: 1, 2>}, {transform_indices = @transform_6, window_bounds = array<i64: 8, 8, 2>}]} {
    %c0_i32 = arith.constant 0 : i32
    %0 = arith.cmpi eq, %arg1, %c0_i32 : i32
    %1 = arith.extui %0 : i1 to i32
    %c0_i32_0 = arith.constant 0 : i32
    %2 = arith.cmpi ne, %1, %c0_i32_0 : i32
    scf.if %2 {
      %cst_205 = arith.constant 0.000000e+00 : f32
      %633 = vector.broadcast %cst_205 : f32 to vector<8x128xf32>
      %c0_206 = arith.constant 0 : index
      %c0_207 = arith.constant 0 : index
      %634 = vector.load %arg11[%c0_206, %c0_207] : memref<8x128xf32, #tpu.memory_space<vmem>>, vector<8x128xf32>
      tpu.vector_store %arg11[%c0_206, %c0_207], %633 {strides = array<i32>} : memref<8x128xf32, #tpu.memory_space<vmem>>, vector<8x128xf32>,
      %c0_208 = arith.constant 0 : index
      %c0_209 = arith.constant 0 : index
      %635 = vector.load %arg12[%c0_208, %c0_209] : memref<8x128xf32, #tpu.memory_space<vmem>>, vector<8x128xf32>
      tpu.vector_store %arg12[%c0_208, %c0_209], %633 {strides = array<i32>} : memref<8x128xf32, #tpu.memory_space<vmem>>, vector<8x128xf32>,
      %c0_210 = arith.constant 0 : index
      %c0_211 = arith.constant 0 : index
      %636 = vector.load %arg13[%c0_210, %c0_211] : memref<8x128xf32, #tpu.memory_space<vmem>>, vector<8x128xf32>
      tpu.vector_store %arg13[%c0_210, %c0_211], %633 {strides = array<i32>} : memref<8x128xf32, #tpu.memory_space<vmem>>, vector<8x128xf32>,
      %c0_212 = arith.constant 0 : index
      %c0_213 = arith.constant 0 : index
      %637 = vector.load %arg14[%c0_212, %c0_213] : memref<8x128xf32, #tpu.memory_space<vmem>>, vector<8x128xf32>
      tpu.vector_store %arg14[%c0_212, %c0_213], %633 {strides = array<i32>} : memref<8x128xf32, #tpu.memory_space<vmem>>, vector<8x128xf32>,
    } else {
    }
    %c8_i32 = arith.constant 8 : i32
    %3 = arith.muli %arg1, %c8_i32 : i32
    %c0_i32_1 = arith.constant 0 : i32
    %4 = arith.subi %c0_i32_1, %arg1 : i32
    %c8_i32_2 = arith.constant 8 : i32
    %5 = arith.muli %4, %c8_i32_2 : i32
    %c0 = arith.constant 0 : index
    %c0_3 = arith.constant 0 : index
    %6 = vector.load %arg11[%c0, %c0_3] : memref<8x128xf32, #tpu.memory_space<vmem>>, vector<8x128xf32>
    %c0_4 = arith.constant 0 : index
    %c0_5 = arith.constant 0 : index
    %7 = vector.load %arg12[%c0_4, %c0_5] : memref<8x128xf32, #tpu.memory_space<vmem>>, vector<8x128xf32>
    %c0_6 = arith.constant 0 : index
    %c0_7 = arith.constant 0 : index
    %8 = vector.load %arg13[%c0_6, %c0_7] : memref<8x128xf32, #tpu.memory_space<vmem>>, vector<8x128xf32>
    %c0_8 = arith.constant 0 : index
    %c0_9 = arith.constant 0 : index
    %9 = vector.load %arg14[%c0_8, %c0_9] : memref<8x128xf32, #tpu.memory_space<vmem>>, vector<8x128xf32>
    %c0_i32_10 = arith.constant 0 : i32
    %10 = arith.index_cast %c0_i32_10 : i32 to index
    %c0_11 = arith.constant 0 : index
    %c0_12 = arith.constant 0 : index
    %11 = vector.load %arg2[%10, %c0_11, %c0_12] : memref<8x8x512xf32, #tpu.memory_space<vmem>>, vector<1x8x512xf32>
    %12 = vector.shape_cast %11 : vector<1x8x512xf32> to vector<8x512xf32>
    %13 = arith.truncf %6 : vector<8x128xf32> to vector<8x128xbf16>
    %c0_13 = arith.constant 0 : index
    %c0_14 = arith.constant 0 : index
    %14 = vector.load %arg4[%c0_13, %c0_14] : memref<128x512xbf16, #tpu.memory_space<vmem>>, vector<128x512xbf16>
    %cst = arith.constant dense<0.000000e+00> : vector<8x512xf32>
    %15 = tpu.matmul %13, %14, %cst {dimension_numbers = #tpu.dot_dimension_numbers<[1], [0], [0], [1], [0, 0, 1, 1], [], []>} : vector<8x128xbf16>, vector<128x512xbf16>, vector<8x512xf32> -> vector<8x512xf32>
    %16 = arith.addf %12, %15 : vector<8x512xf32>
    %17 = vector.extract_strided_slice %16 {offsets = [0, 0], sizes = [8, 128], strides = [1, 1]} : vector<8x512xf32> to vector<8x128xf32>
    %18 = arith.negf %17 : vector<8x128xf32>
    %19 = math.exp %18 : vector<8x128xf32>
    %cst_15 = arith.constant 1.000000e+00 : f32
    %20 = vector.broadcast %cst_15 : f32 to vector<8x128xf32>
    %21 = arith.addf %20, %19 : vector<8x128xf32>
    %22 = arith.divf %20, %21 : vector<8x128xf32>
    %23 = vector.extract_strided_slice %16 {offsets = [0, 128], sizes = [8, 128], strides = [1, 1]} : vector<8x512xf32> to vector<8x128xf32>
    %24 = arith.negf %23 : vector<8x128xf32>
    %25 = math.exp %24 : vector<8x128xf32>
    %cst_16 = arith.constant 1.000000e+00 : f32
    %26 = vector.broadcast %cst_16 : f32 to vector<8x128xf32>
    %27 = arith.addf %26, %25 : vector<8x128xf32>
    %28 = arith.divf %26, %27 : vector<8x128xf32>
    %29 = vector.extract_strided_slice %16 {offsets = [0, 256], sizes = [8, 128], strides = [1, 1]} : vector<8x512xf32> to vector<8x128xf32>
    %30 = math.tanh %29 : vector<8x128xf32>
    %31 = vector.extract_strided_slice %16 {offsets = [0, 384], sizes = [8, 128], strides = [1, 1]} : vector<8x512xf32> to vector<8x128xf32>
    %32 = arith.negf %31 : vector<8x128xf32>
    %33 = math.exp %32 : vector<8x128xf32>
    %cst_17 = arith.constant 1.000000e+00 : f32
    %34 = vector.broadcast %cst_17 : f32 to vector<8x128xf32>
    %35 = arith.addf %34, %33 : vector<8x128xf32>
    %36 = arith.divf %34, %35 : vector<8x128xf32>
    %37 = arith.mulf %28, %7 : vector<8x128xf32>
    %38 = arith.mulf %22, %30 : vector<8x128xf32>
    %39 = arith.addf %37, %38 : vector<8x128xf32>
    %40 = math.tanh %39 : vector<8x128xf32>
    %41 = arith.mulf %36, %40 : vector<8x128xf32>
    %c7_i32 = arith.constant 7 : i32
    %42 = arith.subi %c7_i32, %c0_i32_10 : i32
    %43 = arith.index_cast %42 : i32 to index
    %c0_18 = arith.constant 0 : index
    %c0_19 = arith.constant 0 : index
    %44 = vector.load %arg3[%43, %c0_18, %c0_19] : memref<8x8x512xf32, #tpu.memory_space<vmem>>, vector<1x8x512xf32>
    %45 = vector.shape_cast %44 : vector<1x8x512xf32> to vector<8x512xf32>
    %46 = arith.truncf %8 : vector<8x128xf32> to vector<8x128xbf16>
    %c0_20 = arith.constant 0 : index
    %c0_21 = arith.constant 0 : index
    %47 = vector.load %arg5[%c0_20, %c0_21] : memref<128x512xbf16, #tpu.memory_space<vmem>>, vector<128x512xbf16>
    %cst_22 = arith.constant dense<0.000000e+00> : vector<8x512xf32>
    %48 = tpu.matmul %46, %47, %cst_22 {dimension_numbers = #tpu.dot_dimension_numbers<[1], [0], [0], [1], [0, 0, 1, 1], [], []>} : vector<8x128xbf16>, vector<128x512xbf16>, vector<8x512xf32> -> vector<8x512xf32>
    %49 = arith.addf %45, %48 : vector<8x512xf32>
    %50 = vector.extract_strided_slice %49 {offsets = [0, 0], sizes = [8, 128], strides = [1, 1]} : vector<8x512xf32> to vector<8x128xf32>
    %51 = arith.negf %50 : vector<8x128xf32>
    %52 = math.exp %51 : vector<8x128xf32>
    %cst_23 = arith.constant 1.000000e+00 : f32
    %53 = vector.broadcast %cst_23 : f32 to vector<8x128xf32>
    %54 = arith.addf %53, %52 : vector<8x128xf32>
    %55 = arith.divf %53, %54 : vector<8x128xf32>
    %56 = vector.extract_strided_slice %49 {offsets = [0, 128], sizes = [8, 128], strides = [1, 1]} : vector<8x512xf32> to vector<8x128xf32>
    %57 = arith.negf %56 : vector<8x128xf32>
    %58 = math.exp %57 : vector<8x128xf32>
    %cst_24 = arith.constant 1.000000e+00 : f32
    %59 = vector.broadcast %cst_24 : f32 to vector<8x128xf32>
    %60 = arith.addf %59, %58 : vector<8x128xf32>
    %61 = arith.divf %59, %60 : vector<8x128xf32>
    %62 = vector.extract_strided_slice %49 {offsets = [0, 256], sizes = [8, 128], strides = [1, 1]} : vector<8x512xf32> to vector<8x128xf32>
    %63 = math.tanh %62 : vector<8x128xf32>
    %64 = vector.extract_strided_slice %49 {offsets = [0, 384], sizes = [8, 128], strides = [1, 1]} : vector<8x512xf32> to vector<8x128xf32>
    %65 = arith.negf %64 : vector<8x128xf32>
    %66 = math.exp %65 : vector<8x128xf32>
    %cst_25 = arith.constant 1.000000e+00 : f32
    %67 = vector.broadcast %cst_25 : f32 to vector<8x128xf32>
    %68 = arith.addf %67, %66 : vector<8x128xf32>
    %69 = arith.divf %67, %68 : vector<8x128xf32>
    %70 = arith.mulf %61, %9 : vector<8x128xf32>
    %71 = arith.mulf %55, %63 : vector<8x128xf32>
    %72 = arith.addf %70, %71 : vector<8x128xf32>
    %73 = math.tanh %72 : vector<8x128xf32>
    %74 = arith.mulf %69, %73 : vector<8x128xf32>
    %75 = arith.addi %3, %c0_i32_10 : i32
    %c8_i32_26 = arith.constant 8 : i32
    %76 = arith.muli %75, %c8_i32_26 : i32
    %77 = tpu.assume_multiple %76, 8 : i32
    %c8_i32_27 = arith.constant 8 : i32
    %78 = arith.addi %5, %c8_i32_27 : i32
    %c1_i32 = arith.constant 1 : i32
    %79 = arith.subi %78, %c1_i32 : i32
    %80 = arith.subi %79, %c0_i32_10 : i32
    %c8_i32_28 = arith.constant 8 : i32
    %81 = arith.muli %80, %c8_i32_28 : i32
    %82 = tpu.assume_multiple %81, 8 : i32
    %83 = arith.index_cast %77 : i32 to index
    %c0_29 = arith.constant 0 : index
    %84 = vector.load %arg9[%83, %c0_29] : memref<64x128xf32, #tpu.memory_space<vmem>>, vector<8x128xf32>
    tpu.vector_store %arg9[%83, %c0_29], %41 {strides = array<i32>} : memref<64x128xf32, #tpu.memory_space<vmem>>, vector<8x128xf32>,
    %85 = arith.index_cast %82 : i32 to index
    %c0_30 = arith.constant 0 : index
    %86 = vector.load %arg10[%85, %c0_30] : memref<64x128xf32, #tpu.memory_space<vmem>>, vector<8x128xf32>
    tpu.vector_store %arg10[%85, %c0_30], %74 {strides = array<i32>} : memref<64x128xf32, #tpu.memory_space<vmem>>, vector<8x128xf32>,
    %c1_i32_31 = arith.constant 1 : i32
    %87 = arith.index_cast %c1_i32_31 : i32 to index
    %c0_32 = arith.constant 0 : index
    %c0_33 = arith.constant 0 : index
    %88 = vector.load %arg2[%87, %c0_32, %c0_33] : memref<8x8x512xf32, #tpu.memory_space<vmem>>, vector<1x8x512xf32>
    %89 = vector.shape_cast %88 : vector<1x8x512xf32> to vector<8x512xf32>
    %90 = arith.truncf %41 : vector<8x128xf32> to vector<8x128xbf16>
    %c0_34 = arith.constant 0 : index
    %c0_35 = arith.constant 0 : index
    %91 = vector.load %arg4[%c0_34, %c0_35] : memref<128x512xbf16, #tpu.memory_space<vmem>>, vector<128x512xbf16>
    %cst_36 = arith.constant dense<0.000000e+00> : vector<8x512xf32>
    %92 = tpu.matmul %90, %91, %cst_36 {dimension_numbers = #tpu.dot_dimension_numbers<[1], [0], [0], [1], [0, 0, 1, 1], [], []>} : vector<8x128xbf16>, vector<128x512xbf16>, vector<8x512xf32> -> vector<8x512xf32>
    %93 = arith.addf %89, %92 : vector<8x512xf32>
    %94 = vector.extract_strided_slice %93 {offsets = [0, 0], sizes = [8, 128], strides = [1, 1]} : vector<8x512xf32> to vector<8x128xf32>
    %95 = arith.negf %94 : vector<8x128xf32>
    %96 = math.exp %95 : vector<8x128xf32>
    %cst_37 = arith.constant 1.000000e+00 : f32
    %97 = vector.broadcast %cst_37 : f32 to vector<8x128xf32>
    %98 = arith.addf %97, %96 : vector<8x128xf32>
    %99 = arith.divf %97, %98 : vector<8x128xf32>
    %100 = vector.extract_strided_slice %93 {offsets = [0, 128], sizes = [8, 128], strides = [1, 1]} : vector<8x512xf32> to vector<8x128xf32>
    %101 = arith.negf %100 : vector<8x128xf32>
    %102 = math.exp %101 : vector<8x128xf32>
    %cst_38 = arith.constant 1.000000e+00 : f32
    %103 = vector.broadcast %cst_38 : f32 to vector<8x128xf32>
    %104 = arith.addf %103, %102 : vector<8x128xf32>
    %105 = arith.divf %103, %104 : vector<8x128xf32>
    %106 = vector.extract_strided_slice %93 {offsets = [0, 256], sizes = [8, 128], strides = [1, 1]} : vector<8x512xf32> to vector<8x128xf32>
    %107 = math.tanh %106 : vector<8x128xf32>
    %108 = vector.extract_strided_slice %93 {offsets = [0, 384], sizes = [8, 128], strides = [1, 1]} : vector<8x512xf32> to vector<8x128xf32>
    %109 = arith.negf %108 : vector<8x128xf32>
    %110 = math.exp %109 : vector<8x128xf32>
    %cst_39 = arith.constant 1.000000e+00 : f32
    %111 = vector.broadcast %cst_39 : f32 to vector<8x128xf32>
    %112 = arith.addf %111, %110 : vector<8x128xf32>
    %113 = arith.divf %111, %112 : vector<8x128xf32>
    %114 = arith.mulf %105, %39 : vector<8x128xf32>
    %115 = arith.mulf %99, %107 : vector<8x128xf32>
    %116 = arith.addf %114, %115 : vector<8x128xf32>
    %117 = math.tanh %116 : vector<8x128xf32>
    %118 = arith.mulf %113, %117 : vector<8x128xf32>
    %c7_i32_40 = arith.constant 7 : i32
    %119 = arith.subi %c7_i32_40, %c1_i32_31 : i32
    %120 = arith.index_cast %119 : i32 to index
    %c0_41 = arith.constant 0 : index
    %c0_42 = arith.constant 0 : index
    %121 = vector.load %arg3[%120, %c0_41, %c0_42] : memref<8x8x512xf32, #tpu.memory_space<vmem>>, vector<1x8x512xf32>
    %122 = vector.shape_cast %121 : vector<1x8x512xf32> to vector<8x512xf32>
    %123 = arith.truncf %74 : vector<8x128xf32> to vector<8x128xbf16>
    %c0_43 = arith.constant 0 : index
    %c0_44 = arith.constant 0 : index
    %124 = vector.load %arg5[%c0_43, %c0_44] : memref<128x512xbf16, #tpu.memory_space<vmem>>, vector<128x512xbf16>
    %cst_45 = arith.constant dense<0.000000e+00> : vector<8x512xf32>
    %125 = tpu.matmul %123, %124, %cst_45 {dimension_numbers = #tpu.dot_dimension_numbers<[1], [0], [0], [1], [0, 0, 1, 1], [], []>} : vector<8x128xbf16>, vector<128x512xbf16>, vector<8x512xf32> -> vector<8x512xf32>
    %126 = arith.addf %122, %125 : vector<8x512xf32>
    %127 = vector.extract_strided_slice %126 {offsets = [0, 0], sizes = [8, 128], strides = [1, 1]} : vector<8x512xf32> to vector<8x128xf32>
    %128 = arith.negf %127 : vector<8x128xf32>
    %129 = math.exp %128 : vector<8x128xf32>
    %cst_46 = arith.constant 1.000000e+00 : f32
    %130 = vector.broadcast %cst_46 : f32 to vector<8x128xf32>
    %131 = arith.addf %130, %129 : vector<8x128xf32>
    %132 = arith.divf %130, %131 : vector<8x128xf32>
    %133 = vector.extract_strided_slice %126 {offsets = [0, 128], sizes = [8, 128], strides = [1, 1]} : vector<8x512xf32> to vector<8x128xf32>
    %134 = arith.negf %133 : vector<8x128xf32>
    %135 = math.exp %134 : vector<8x128xf32>
    %cst_47 = arith.constant 1.000000e+00 : f32
    %136 = vector.broadcast %cst_47 : f32 to vector<8x128xf32>
    %137 = arith.addf %136, %135 : vector<8x128xf32>
    %138 = arith.divf %136, %137 : vector<8x128xf32>
    %139 = vector.extract_strided_slice %126 {offsets = [0, 256], sizes = [8, 128], strides = [1, 1]} : vector<8x512xf32> to vector<8x128xf32>
    %140 = math.tanh %139 : vector<8x128xf32>
    %141 = vector.extract_strided_slice %126 {offsets = [0, 384], sizes = [8, 128], strides = [1, 1]} : vector<8x512xf32> to vector<8x128xf32>
    %142 = arith.negf %141 : vector<8x128xf32>
    %143 = math.exp %142 : vector<8x128xf32>
    %cst_48 = arith.constant 1.000000e+00 : f32
    %144 = vector.broadcast %cst_48 : f32 to vector<8x128xf32>
    %145 = arith.addf %144, %143 : vector<8x128xf32>
    %146 = arith.divf %144, %145 : vector<8x128xf32>
    %147 = arith.mulf %138, %72 : vector<8x128xf32>
    %148 = arith.mulf %132, %140 : vector<8x128xf32>
    %149 = arith.addf %147, %148 : vector<8x128xf32>
    %150 = math.tanh %149 : vector<8x128xf32>
    %151 = arith.mulf %146, %150 : vector<8x128xf32>
    %152 = arith.addi %3, %c1_i32_31 : i32
    %c8_i32_49 = arith.constant 8 : i32
    %153 = arith.muli %152, %c8_i32_49 : i32
    %154 = tpu.assume_multiple %153, 8 : i32
    %c8_i32_50 = arith.constant 8 : i32
    %155 = arith.addi %5, %c8_i32_50 : i32
    %c1_i32_51 = arith.constant 1 : i32
    %156 = arith.subi %155, %c1_i32_51 : i32
    %157 = arith.subi %156, %c1_i32_31 : i32
    %c8_i32_52 = arith.constant 8 : i32
    %158 = arith.muli %157, %c8_i32_52 : i32
    %159 = tpu.assume_multiple %158, 8 : i32
    %160 = arith.index_cast %154 : i32 to index
    %c0_53 = arith.constant 0 : index
    %161 = vector.load %arg9[%160, %c0_53] : memref<64x128xf32, #tpu.memory_space<vmem>>, vector<8x128xf32>
    tpu.vector_store %arg9[%160, %c0_53], %118 {strides = array<i32>} : memref<64x128xf32, #tpu.memory_space<vmem>>, vector<8x128xf32>,
    %162 = arith.index_cast %159 : i32 to index
    %c0_54 = arith.constant 0 : index
    %163 = vector.load %arg10[%162, %c0_54] : memref<64x128xf32, #tpu.memory_space<vmem>>, vector<8x128xf32>
    tpu.vector_store %arg10[%162, %c0_54], %151 {strides = array<i32>} : memref<64x128xf32, #tpu.memory_space<vmem>>, vector<8x128xf32>,
    %c2_i32 = arith.constant 2 : i32
    %164 = arith.index_cast %c2_i32 : i32 to index
    %c0_55 = arith.constant 0 : index
    %c0_56 = arith.constant 0 : index
    %165 = vector.load %arg2[%164, %c0_55, %c0_56] : memref<8x8x512xf32, #tpu.memory_space<vmem>>, vector<1x8x512xf32>
    %166 = vector.shape_cast %165 : vector<1x8x512xf32> to vector<8x512xf32>
    %167 = arith.truncf %118 : vector<8x128xf32> to vector<8x128xbf16>
    %c0_57 = arith.constant 0 : index
    %c0_58 = arith.constant 0 : index
    %168 = vector.load %arg4[%c0_57, %c0_58] : memref<128x512xbf16, #tpu.memory_space<vmem>>, vector<128x512xbf16>
    %cst_59 = arith.constant dense<0.000000e+00> : vector<8x512xf32>
    %169 = tpu.matmul %167, %168, %cst_59 {dimension_numbers = #tpu.dot_dimension_numbers<[1], [0], [0], [1], [0, 0, 1, 1], [], []>} : vector<8x128xbf16>, vector<128x512xbf16>, vector<8x512xf32> -> vector<8x512xf32>
    %170 = arith.addf %166, %169 : vector<8x512xf32>
    %171 = vector.extract_strided_slice %170 {offsets = [0, 0], sizes = [8, 128], strides = [1, 1]} : vector<8x512xf32> to vector<8x128xf32>
    %172 = arith.negf %171 : vector<8x128xf32>
    %173 = math.exp %172 : vector<8x128xf32>
    %cst_60 = arith.constant 1.000000e+00 : f32
    %174 = vector.broadcast %cst_60 : f32 to vector<8x128xf32>
    %175 = arith.addf %174, %173 : vector<8x128xf32>
    %176 = arith.divf %174, %175 : vector<8x128xf32>
    %177 = vector.extract_strided_slice %170 {offsets = [0, 128], sizes = [8, 128], strides = [1, 1]} : vector<8x512xf32> to vector<8x128xf32>
    %178 = arith.negf %177 : vector<8x128xf32>
    %179 = math.exp %178 : vector<8x128xf32>
    %cst_61 = arith.constant 1.000000e+00 : f32
    %180 = vector.broadcast %cst_61 : f32 to vector<8x128xf32>
    %181 = arith.addf %180, %179 : vector<8x128xf32>
    %182 = arith.divf %180, %181 : vector<8x128xf32>
    %183 = vector.extract_strided_slice %170 {offsets = [0, 256], sizes = [8, 128], strides = [1, 1]} : vector<8x512xf32> to vector<8x128xf32>
    %184 = math.tanh %183 : vector<8x128xf32>
    %185 = vector.extract_strided_slice %170 {offsets = [0, 384], sizes = [8, 128], strides = [1, 1]} : vector<8x512xf32> to vector<8x128xf32>
    %186 = arith.negf %185 : vector<8x128xf32>
    %187 = math.exp %186 : vector<8x128xf32>
    %cst_62 = arith.constant 1.000000e+00 : f32
    %188 = vector.broadcast %cst_62 : f32 to vector<8x128xf32>
    %189 = arith.addf %188, %187 : vector<8x128xf32>
    %190 = arith.divf %188, %189 : vector<8x128xf32>
    %191 = arith.mulf %182, %116 : vector<8x128xf32>
    %192 = arith.mulf %176, %184 : vector<8x128xf32>
    %193 = arith.addf %191, %192 : vector<8x128xf32>
    %194 = math.tanh %193 : vector<8x128xf32>
    %195 = arith.mulf %190, %194 : vector<8x128xf32>
    %c7_i32_63 = arith.constant 7 : i32
    %196 = arith.subi %c7_i32_63, %c2_i32 : i32
    %197 = arith.index_cast %196 : i32 to index
    %c0_64 = arith.constant 0 : index
    %c0_65 = arith.constant 0 : index
    %198 = vector.load %arg3[%197, %c0_64, %c0_65] : memref<8x8x512xf32, #tpu.memory_space<vmem>>, vector<1x8x512xf32>
    %199 = vector.shape_cast %198 : vector<1x8x512xf32> to vector<8x512xf32>
    %200 = arith.truncf %151 : vector<8x128xf32> to vector<8x128xbf16>
    %c0_66 = arith.constant 0 : index
    %c0_67 = arith.constant 0 : index
    %201 = vector.load %arg5[%c0_66, %c0_67] : memref<128x512xbf16, #tpu.memory_space<vmem>>, vector<128x512xbf16>
    %cst_68 = arith.constant dense<0.000000e+00> : vector<8x512xf32>
    %202 = tpu.matmul %200, %201, %cst_68 {dimension_numbers = #tpu.dot_dimension_numbers<[1], [0], [0], [1], [0, 0, 1, 1], [], []>} : vector<8x128xbf16>, vector<128x512xbf16>, vector<8x512xf32> -> vector<8x512xf32>
    %203 = arith.addf %199, %202 : vector<8x512xf32>
    %204 = vector.extract_strided_slice %203 {offsets = [0, 0], sizes = [8, 128], strides = [1, 1]} : vector<8x512xf32> to vector<8x128xf32>
    %205 = arith.negf %204 : vector<8x128xf32>
    %206 = math.exp %205 : vector<8x128xf32>
    %cst_69 = arith.constant 1.000000e+00 : f32
    %207 = vector.broadcast %cst_69 : f32 to vector<8x128xf32>
    %208 = arith.addf %207, %206 : vector<8x128xf32>
    %209 = arith.divf %207, %208 : vector<8x128xf32>
    %210 = vector.extract_strided_slice %203 {offsets = [0, 128], sizes = [8, 128], strides = [1, 1]} : vector<8x512xf32> to vector<8x128xf32>
    %211 = arith.negf %210 : vector<8x128xf32>
    %212 = math.exp %211 : vector<8x128xf32>
    %cst_70 = arith.constant 1.000000e+00 : f32
    %213 = vector.broadcast %cst_70 : f32 to vector<8x128xf32>
    %214 = arith.addf %213, %212 : vector<8x128xf32>
    %215 = arith.divf %213, %214 : vector<8x128xf32>
    %216 = vector.extract_strided_slice %203 {offsets = [0, 256], sizes = [8, 128], strides = [1, 1]} : vector<8x512xf32> to vector<8x128xf32>
    %217 = math.tanh %216 : vector<8x128xf32>
    %218 = vector.extract_strided_slice %203 {offsets = [0, 384], sizes = [8, 128], strides = [1, 1]} : vector<8x512xf32> to vector<8x128xf32>
    %219 = arith.negf %218 : vector<8x128xf32>
    %220 = math.exp %219 : vector<8x128xf32>
    %cst_71 = arith.constant 1.000000e+00 : f32
    %221 = vector.broadcast %cst_71 : f32 to vector<8x128xf32>
    %222 = arith.addf %221, %220 : vector<8x128xf32>
    %223 = arith.divf %221, %222 : vector<8x128xf32>
    %224 = arith.mulf %215, %149 : vector<8x128xf32>
    %225 = arith.mulf %209, %217 : vector<8x128xf32>
    %226 = arith.addf %224, %225 : vector<8x128xf32>
    %227 = math.tanh %226 : vector<8x128xf32>
    %228 = arith.mulf %223, %227 : vector<8x128xf32>
    %229 = arith.addi %3, %c2_i32 : i32
    %c8_i32_72 = arith.constant 8 : i32
    %230 = arith.muli %229, %c8_i32_72 : i32
    %231 = tpu.assume_multiple %230, 8 : i32
    %c8_i32_73 = arith.constant 8 : i32
    %232 = arith.addi %5, %c8_i32_73 : i32
    %c1_i32_74 = arith.constant 1 : i32
    %233 = arith.subi %232, %c1_i32_74 : i32
    %234 = arith.subi %233, %c2_i32 : i32
    %c8_i32_75 = arith.constant 8 : i32
    %235 = arith.muli %234, %c8_i32_75 : i32
    %236 = tpu.assume_multiple %235, 8 : i32
    %237 = arith.index_cast %231 : i32 to index
    %c0_76 = arith.constant 0 : index
    %238 = vector.load %arg9[%237, %c0_76] : memref<64x128xf32, #tpu.memory_space<vmem>>, vector<8x128xf32>
    tpu.vector_store %arg9[%237, %c0_76], %195 {strides = array<i32>} : memref<64x128xf32, #tpu.memory_space<vmem>>, vector<8x128xf32>,
    %239 = arith.index_cast %236 : i32 to index
    %c0_77 = arith.constant 0 : index
    %240 = vector.load %arg10[%239, %c0_77] : memref<64x128xf32, #tpu.memory_space<vmem>>, vector<8x128xf32>
    tpu.vector_store %arg10[%239, %c0_77], %228 {strides = array<i32>} : memref<64x128xf32, #tpu.memory_space<vmem>>, vector<8x128xf32>,
    %c3_i32 = arith.constant 3 : i32
    %241 = arith.index_cast %c3_i32 : i32 to index
    %c0_78 = arith.constant 0 : index
    %c0_79 = arith.constant 0 : index
    %242 = vector.load %arg2[%241, %c0_78, %c0_79] : memref<8x8x512xf32, #tpu.memory_space<vmem>>, vector<1x8x512xf32>
    %243 = vector.shape_cast %242 : vector<1x8x512xf32> to vector<8x512xf32>
    %244 = arith.truncf %195 : vector<8x128xf32> to vector<8x128xbf16>
    %c0_80 = arith.constant 0 : index
    %c0_81 = arith.constant 0 : index
    %245 = vector.load %arg4[%c0_80, %c0_81] : memref<128x512xbf16, #tpu.memory_space<vmem>>, vector<128x512xbf16>
    %cst_82 = arith.constant dense<0.000000e+00> : vector<8x512xf32>
    %246 = tpu.matmul %244, %245, %cst_82 {dimension_numbers = #tpu.dot_dimension_numbers<[1], [0], [0], [1], [0, 0, 1, 1], [], []>} : vector<8x128xbf16>, vector<128x512xbf16>, vector<8x512xf32> -> vector<8x512xf32>
    %247 = arith.addf %243, %246 : vector<8x512xf32>
    %248 = vector.extract_strided_slice %247 {offsets = [0, 0], sizes = [8, 128], strides = [1, 1]} : vector<8x512xf32> to vector<8x128xf32>
    %249 = arith.negf %248 : vector<8x128xf32>
    %250 = math.exp %249 : vector<8x128xf32>
    %cst_83 = arith.constant 1.000000e+00 : f32
    %251 = vector.broadcast %cst_83 : f32 to vector<8x128xf32>
    %252 = arith.addf %251, %250 : vector<8x128xf32>
    %253 = arith.divf %251, %252 : vector<8x128xf32>
    %254 = vector.extract_strided_slice %247 {offsets = [0, 128], sizes = [8, 128], strides = [1, 1]} : vector<8x512xf32> to vector<8x128xf32>
    %255 = arith.negf %254 : vector<8x128xf32>
    %256 = math.exp %255 : vector<8x128xf32>
    %cst_84 = arith.constant 1.000000e+00 : f32
    %257 = vector.broadcast %cst_84 : f32 to vector<8x128xf32>
    %258 = arith.addf %257, %256 : vector<8x128xf32>
    %259 = arith.divf %257, %258 : vector<8x128xf32>
    %260 = vector.extract_strided_slice %247 {offsets = [0, 256], sizes = [8, 128], strides = [1, 1]} : vector<8x512xf32> to vector<8x128xf32>
    %261 = math.tanh %260 : vector<8x128xf32>
    %262 = vector.extract_strided_slice %247 {offsets = [0, 384], sizes = [8, 128], strides = [1, 1]} : vector<8x512xf32> to vector<8x128xf32>
    %263 = arith.negf %262 : vector<8x128xf32>
    %264 = math.exp %263 : vector<8x128xf32>
    %cst_85 = arith.constant 1.000000e+00 : f32
    %265 = vector.broadcast %cst_85 : f32 to vector<8x128xf32>
    %266 = arith.addf %265, %264 : vector<8x128xf32>
    %267 = arith.divf %265, %266 : vector<8x128xf32>
    %268 = arith.mulf %259, %193 : vector<8x128xf32>
    %269 = arith.mulf %253, %261 : vector<8x128xf32>
    %270 = arith.addf %268, %269 : vector<8x128xf32>
    %271 = math.tanh %270 : vector<8x128xf32>
    %272 = arith.mulf %267, %271 : vector<8x128xf32>
    %c7_i32_86 = arith.constant 7 : i32
    %273 = arith.subi %c7_i32_86, %c3_i32 : i32
    %274 = arith.index_cast %273 : i32 to index
    %c0_87 = arith.constant 0 : index
    %c0_88 = arith.constant 0 : index
    %275 = vector.load %arg3[%274, %c0_87, %c0_88] : memref<8x8x512xf32, #tpu.memory_space<vmem>>, vector<1x8x512xf32>
    %276 = vector.shape_cast %275 : vector<1x8x512xf32> to vector<8x512xf32>
    %277 = arith.truncf %228 : vector<8x128xf32> to vector<8x128xbf16>
    %c0_89 = arith.constant 0 : index
    %c0_90 = arith.constant 0 : index
    %278 = vector.load %arg5[%c0_89, %c0_90] : memref<128x512xbf16, #tpu.memory_space<vmem>>, vector<128x512xbf16>
    %cst_91 = arith.constant dense<0.000000e+00> : vector<8x512xf32>
    %279 = tpu.matmul %277, %278, %cst_91 {dimension_numbers = #tpu.dot_dimension_numbers<[1], [0], [0], [1], [0, 0, 1, 1], [], []>} : vector<8x128xbf16>, vector<128x512xbf16>, vector<8x512xf32> -> vector<8x512xf32>
    %280 = arith.addf %276, %279 : vector<8x512xf32>
    %281 = vector.extract_strided_slice %280 {offsets = [0, 0], sizes = [8, 128], strides = [1, 1]} : vector<8x512xf32> to vector<8x128xf32>
    %282 = arith.negf %281 : vector<8x128xf32>
    %283 = math.exp %282 : vector<8x128xf32>
    %cst_92 = arith.constant 1.000000e+00 : f32
    %284 = vector.broadcast %cst_92 : f32 to vector<8x128xf32>
    %285 = arith.addf %284, %283 : vector<8x128xf32>
    %286 = arith.divf %284, %285 : vector<8x128xf32>
    %287 = vector.extract_strided_slice %280 {offsets = [0, 128], sizes = [8, 128], strides = [1, 1]} : vector<8x512xf32> to vector<8x128xf32>
    %288 = arith.negf %287 : vector<8x128xf32>
    %289 = math.exp %288 : vector<8x128xf32>
    %cst_93 = arith.constant 1.000000e+00 : f32
    %290 = vector.broadcast %cst_93 : f32 to vector<8x128xf32>
    %291 = arith.addf %290, %289 : vector<8x128xf32>
    %292 = arith.divf %290, %291 : vector<8x128xf32>
    %293 = vector.extract_strided_slice %280 {offsets = [0, 256], sizes = [8, 128], strides = [1, 1]} : vector<8x512xf32> to vector<8x128xf32>
    %294 = math.tanh %293 : vector<8x128xf32>
    %295 = vector.extract_strided_slice %280 {offsets = [0, 384], sizes = [8, 128], strides = [1, 1]} : vector<8x512xf32> to vector<8x128xf32>
    %296 = arith.negf %295 : vector<8x128xf32>
    %297 = math.exp %296 : vector<8x128xf32>
    %cst_94 = arith.constant 1.000000e+00 : f32
    %298 = vector.broadcast %cst_94 : f32 to vector<8x128xf32>
    %299 = arith.addf %298, %297 : vector<8x128xf32>
    %300 = arith.divf %298, %299 : vector<8x128xf32>
    %301 = arith.mulf %292, %226 : vector<8x128xf32>
    %302 = arith.mulf %286, %294 : vector<8x128xf32>
    %303 = arith.addf %301, %302 : vector<8x128xf32>
    %304 = math.tanh %303 : vector<8x128xf32>
    %305 = arith.mulf %300, %304 : vector<8x128xf32>
    %306 = arith.addi %3, %c3_i32 : i32
    %c8_i32_95 = arith.constant 8 : i32
    %307 = arith.muli %306, %c8_i32_95 : i32
    %308 = tpu.assume_multiple %307, 8 : i32
    %c8_i32_96 = arith.constant 8 : i32
    %309 = arith.addi %5, %c8_i32_96 : i32
    %c1_i32_97 = arith.constant 1 : i32
    %310 = arith.subi %309, %c1_i32_97 : i32
    %311 = arith.subi %310, %c3_i32 : i32
    %c8_i32_98 = arith.constant 8 : i32
    %312 = arith.muli %311, %c8_i32_98 : i32
    %313 = tpu.assume_multiple %312, 8 : i32
    %314 = arith.index_cast %308 : i32 to index
    %c0_99 = arith.constant 0 : index
    %315 = vector.load %arg9[%314, %c0_99] : memref<64x128xf32, #tpu.memory_space<vmem>>, vector<8x128xf32>
    tpu.vector_store %arg9[%314, %c0_99], %272 {strides = array<i32>} : memref<64x128xf32, #tpu.memory_space<vmem>>, vector<8x128xf32>,
    %316 = arith.index_cast %313 : i32 to index
    %c0_100 = arith.constant 0 : index
    %317 = vector.load %arg10[%316, %c0_100] : memref<64x128xf32, #tpu.memory_space<vmem>>, vector<8x128xf32>
    tpu.vector_store %arg10[%316, %c0_100], %305 {strides = array<i32>} : memref<64x128xf32, #tpu.memory_space<vmem>>, vector<8x128xf32>,
    %c4_i32 = arith.constant 4 : i32
    %318 = arith.index_cast %c4_i32 : i32 to index
    %c0_101 = arith.constant 0 : index
    %c0_102 = arith.constant 0 : index
    %319 = vector.load %arg2[%318, %c0_101, %c0_102] : memref<8x8x512xf32, #tpu.memory_space<vmem>>, vector<1x8x512xf32>
    %320 = vector.shape_cast %319 : vector<1x8x512xf32> to vector<8x512xf32>
    %321 = arith.truncf %272 : vector<8x128xf32> to vector<8x128xbf16>
    %c0_103 = arith.constant 0 : index
    %c0_104 = arith.constant 0 : index
    %322 = vector.load %arg4[%c0_103, %c0_104] : memref<128x512xbf16, #tpu.memory_space<vmem>>, vector<128x512xbf16>
    %cst_105 = arith.constant dense<0.000000e+00> : vector<8x512xf32>
    %323 = tpu.matmul %321, %322, %cst_105 {dimension_numbers = #tpu.dot_dimension_numbers<[1], [0], [0], [1], [0, 0, 1, 1], [], []>} : vector<8x128xbf16>, vector<128x512xbf16>, vector<8x512xf32> -> vector<8x512xf32>
    %324 = arith.addf %320, %323 : vector<8x512xf32>
    %325 = vector.extract_strided_slice %324 {offsets = [0, 0], sizes = [8, 128], strides = [1, 1]} : vector<8x512xf32> to vector<8x128xf32>
    %326 = arith.negf %325 : vector<8x128xf32>
    %327 = math.exp %326 : vector<8x128xf32>
    %cst_106 = arith.constant 1.000000e+00 : f32
    %328 = vector.broadcast %cst_106 : f32 to vector<8x128xf32>
    %329 = arith.addf %328, %327 : vector<8x128xf32>
    %330 = arith.divf %328, %329 : vector<8x128xf32>
    %331 = vector.extract_strided_slice %324 {offsets = [0, 128], sizes = [8, 128], strides = [1, 1]} : vector<8x512xf32> to vector<8x128xf32>
    %332 = arith.negf %331 : vector<8x128xf32>
    %333 = math.exp %332 : vector<8x128xf32>
    %cst_107 = arith.constant 1.000000e+00 : f32
    %334 = vector.broadcast %cst_107 : f32 to vector<8x128xf32>
    %335 = arith.addf %334, %333 : vector<8x128xf32>
    %336 = arith.divf %334, %335 : vector<8x128xf32>
    %337 = vector.extract_strided_slice %324 {offsets = [0, 256], sizes = [8, 128], strides = [1, 1]} : vector<8x512xf32> to vector<8x128xf32>
    %338 = math.tanh %337 : vector<8x128xf32>
    %339 = vector.extract_strided_slice %324 {offsets = [0, 384], sizes = [8, 128], strides = [1, 1]} : vector<8x512xf32> to vector<8x128xf32>
    %340 = arith.negf %339 : vector<8x128xf32>
    %341 = math.exp %340 : vector<8x128xf32>
    %cst_108 = arith.constant 1.000000e+00 : f32
    %342 = vector.broadcast %cst_108 : f32 to vector<8x128xf32>
    %343 = arith.addf %342, %341 : vector<8x128xf32>
    %344 = arith.divf %342, %343 : vector<8x128xf32>
    %345 = arith.mulf %336, %270 : vector<8x128xf32>
    %346 = arith.mulf %330, %338 : vector<8x128xf32>
    %347 = arith.addf %345, %346 : vector<8x128xf32>
    %348 = math.tanh %347 : vector<8x128xf32>
    %349 = arith.mulf %344, %348 : vector<8x128xf32>
    %c7_i32_109 = arith.constant 7 : i32
    %350 = arith.subi %c7_i32_109, %c4_i32 : i32
    %351 = arith.index_cast %350 : i32 to index
    %c0_110 = arith.constant 0 : index
    %c0_111 = arith.constant 0 : index
    %352 = vector.load %arg3[%351, %c0_110, %c0_111] : memref<8x8x512xf32, #tpu.memory_space<vmem>>, vector<1x8x512xf32>
    %353 = vector.shape_cast %352 : vector<1x8x512xf32> to vector<8x512xf32>
    %354 = arith.truncf %305 : vector<8x128xf32> to vector<8x128xbf16>
    %c0_112 = arith.constant 0 : index
    %c0_113 = arith.constant 0 : index
    %355 = vector.load %arg5[%c0_112, %c0_113] : memref<128x512xbf16, #tpu.memory_space<vmem>>, vector<128x512xbf16>
    %cst_114 = arith.constant dense<0.000000e+00> : vector<8x512xf32>
    %356 = tpu.matmul %354, %355, %cst_114 {dimension_numbers = #tpu.dot_dimension_numbers<[1], [0], [0], [1], [0, 0, 1, 1], [], []>} : vector<8x128xbf16>, vector<128x512xbf16>, vector<8x512xf32> -> vector<8x512xf32>
    %357 = arith.addf %353, %356 : vector<8x512xf32>
    %358 = vector.extract_strided_slice %357 {offsets = [0, 0], sizes = [8, 128], strides = [1, 1]} : vector<8x512xf32> to vector<8x128xf32>
    %359 = arith.negf %358 : vector<8x128xf32>
    %360 = math.exp %359 : vector<8x128xf32>
    %cst_115 = arith.constant 1.000000e+00 : f32
    %361 = vector.broadcast %cst_115 : f32 to vector<8x128xf32>
    %362 = arith.addf %361, %360 : vector<8x128xf32>
    %363 = arith.divf %361, %362 : vector<8x128xf32>
    %364 = vector.extract_strided_slice %357 {offsets = [0, 128], sizes = [8, 128], strides = [1, 1]} : vector<8x512xf32> to vector<8x128xf32>
    %365 = arith.negf %364 : vector<8x128xf32>
    %366 = math.exp %365 : vector<8x128xf32>
    %cst_116 = arith.constant 1.000000e+00 : f32
    %367 = vector.broadcast %cst_116 : f32 to vector<8x128xf32>
    %368 = arith.addf %367, %366 : vector<8x128xf32>
    %369 = arith.divf %367, %368 : vector<8x128xf32>
    %370 = vector.extract_strided_slice %357 {offsets = [0, 256], sizes = [8, 128], strides = [1, 1]} : vector<8x512xf32> to vector<8x128xf32>
    %371 = math.tanh %370 : vector<8x128xf32>
    %372 = vector.extract_strided_slice %357 {offsets = [0, 384], sizes = [8, 128], strides = [1, 1]} : vector<8x512xf32> to vector<8x128xf32>
    %373 = arith.negf %372 : vector<8x128xf32>
    %374 = math.exp %373 : vector<8x128xf32>
    %cst_117 = arith.constant 1.000000e+00 : f32
    %375 = vector.broadcast %cst_117 : f32 to vector<8x128xf32>
    %376 = arith.addf %375, %374 : vector<8x128xf32>
    %377 = arith.divf %375, %376 : vector<8x128xf32>
    %378 = arith.mulf %369, %303 : vector<8x128xf32>
    %379 = arith.mulf %363, %371 : vector<8x128xf32>
    %380 = arith.addf %378, %379 : vector<8x128xf32>
    %381 = math.tanh %380 : vector<8x128xf32>
    %382 = arith.mulf %377, %381 : vector<8x128xf32>
    %383 = arith.addi %3, %c4_i32 : i32
    %c8_i32_118 = arith.constant 8 : i32
    %384 = arith.muli %383, %c8_i32_118 : i32
    %385 = tpu.assume_multiple %384, 8 : i32
    %c8_i32_119 = arith.constant 8 : i32
    %386 = arith.addi %5, %c8_i32_119 : i32
    %c1_i32_120 = arith.constant 1 : i32
    %387 = arith.subi %386, %c1_i32_120 : i32
    %388 = arith.subi %387, %c4_i32 : i32
    %c8_i32_121 = arith.constant 8 : i32
    %389 = arith.muli %388, %c8_i32_121 : i32
    %390 = tpu.assume_multiple %389, 8 : i32
    %391 = arith.index_cast %385 : i32 to index
    %c0_122 = arith.constant 0 : index
    %392 = vector.load %arg9[%391, %c0_122] : memref<64x128xf32, #tpu.memory_space<vmem>>, vector<8x128xf32>
    tpu.vector_store %arg9[%391, %c0_122], %349 {strides = array<i32>} : memref<64x128xf32, #tpu.memory_space<vmem>>, vector<8x128xf32>,
    %393 = arith.index_cast %390 : i32 to index
    %c0_123 = arith.constant 0 : index
    %394 = vector.load %arg10[%393, %c0_123] : memref<64x128xf32, #tpu.memory_space<vmem>>, vector<8x128xf32>
    tpu.vector_store %arg10[%393, %c0_123], %382 {strides = array<i32>} : memref<64x128xf32, #tpu.memory_space<vmem>>, vector<8x128xf32>,
    %c5_i32 = arith.constant 5 : i32
    %395 = arith.index_cast %c5_i32 : i32 to index
    %c0_124 = arith.constant 0 : index
    %c0_125 = arith.constant 0 : index
    %396 = vector.load %arg2[%395, %c0_124, %c0_125] : memref<8x8x512xf32, #tpu.memory_space<vmem>>, vector<1x8x512xf32>
    %397 = vector.shape_cast %396 : vector<1x8x512xf32> to vector<8x512xf32>
    %398 = arith.truncf %349 : vector<8x128xf32> to vector<8x128xbf16>
    %c0_126 = arith.constant 0 : index
    %c0_127 = arith.constant 0 : index
    %399 = vector.load %arg4[%c0_126, %c0_127] : memref<128x512xbf16, #tpu.memory_space<vmem>>, vector<128x512xbf16>
    %cst_128 = arith.constant dense<0.000000e+00> : vector<8x512xf32>
    %400 = tpu.matmul %398, %399, %cst_128 {dimension_numbers = #tpu.dot_dimension_numbers<[1], [0], [0], [1], [0, 0, 1, 1], [], []>} : vector<8x128xbf16>, vector<128x512xbf16>, vector<8x512xf32> -> vector<8x512xf32>
    %401 = arith.addf %397, %400 : vector<8x512xf32>
    %402 = vector.extract_strided_slice %401 {offsets = [0, 0], sizes = [8, 128], strides = [1, 1]} : vector<8x512xf32> to vector<8x128xf32>
    %403 = arith.negf %402 : vector<8x128xf32>
    %404 = math.exp %403 : vector<8x128xf32>
    %cst_129 = arith.constant 1.000000e+00 : f32
    %405 = vector.broadcast %cst_129 : f32 to vector<8x128xf32>
    %406 = arith.addf %405, %404 : vector<8x128xf32>
    %407 = arith.divf %405, %406 : vector<8x128xf32>
    %408 = vector.extract_strided_slice %401 {offsets = [0, 128], sizes = [8, 128], strides = [1, 1]} : vector<8x512xf32> to vector<8x128xf32>
    %409 = arith.negf %408 : vector<8x128xf32>
    %410 = math.exp %409 : vector<8x128xf32>
    %cst_130 = arith.constant 1.000000e+00 : f32
    %411 = vector.broadcast %cst_130 : f32 to vector<8x128xf32>
    %412 = arith.addf %411, %410 : vector<8x128xf32>
    %413 = arith.divf %411, %412 : vector<8x128xf32>
    %414 = vector.extract_strided_slice %401 {offsets = [0, 256], sizes = [8, 128], strides = [1, 1]} : vector<8x512xf32> to vector<8x128xf32>
    %415 = math.tanh %414 : vector<8x128xf32>
    %416 = vector.extract_strided_slice %401 {offsets = [0, 384], sizes = [8, 128], strides = [1, 1]} : vector<8x512xf32> to vector<8x128xf32>
    %417 = arith.negf %416 : vector<8x128xf32>
    %418 = math.exp %417 : vector<8x128xf32>
    %cst_131 = arith.constant 1.000000e+00 : f32
    %419 = vector.broadcast %cst_131 : f32 to vector<8x128xf32>
    %420 = arith.addf %419, %418 : vector<8x128xf32>
    %421 = arith.divf %419, %420 : vector<8x128xf32>
    %422 = arith.mulf %413, %347 : vector<8x128xf32>
    %423 = arith.mulf %407, %415 : vector<8x128xf32>
    %424 = arith.addf %422, %423 : vector<8x128xf32>
    %425 = math.tanh %424 : vector<8x128xf32>
    %426 = arith.mulf %421, %425 : vector<8x128xf32>
    %c7_i32_132 = arith.constant 7 : i32
    %427 = arith.subi %c7_i32_132, %c5_i32 : i32
    %428 = arith.index_cast %427 : i32 to index
    %c0_133 = arith.constant 0 : index
    %c0_134 = arith.constant 0 : index
    %429 = vector.load %arg3[%428, %c0_133, %c0_134] : memref<8x8x512xf32, #tpu.memory_space<vmem>>, vector<1x8x512xf32>
    %430 = vector.shape_cast %429 : vector<1x8x512xf32> to vector<8x512xf32>
    %431 = arith.truncf %382 : vector<8x128xf32> to vector<8x128xbf16>
    %c0_135 = arith.constant 0 : index
    %c0_136 = arith.constant 0 : index
    %432 = vector.load %arg5[%c0_135, %c0_136] : memref<128x512xbf16, #tpu.memory_space<vmem>>, vector<128x512xbf16>
    %cst_137 = arith.constant dense<0.000000e+00> : vector<8x512xf32>
    %433 = tpu.matmul %431, %432, %cst_137 {dimension_numbers = #tpu.dot_dimension_numbers<[1], [0], [0], [1], [0, 0, 1, 1], [], []>} : vector<8x128xbf16>, vector<128x512xbf16>, vector<8x512xf32> -> vector<8x512xf32>
    %434 = arith.addf %430, %433 : vector<8x512xf32>
    %435 = vector.extract_strided_slice %434 {offsets = [0, 0], sizes = [8, 128], strides = [1, 1]} : vector<8x512xf32> to vector<8x128xf32>
    %436 = arith.negf %435 : vector<8x128xf32>
    %437 = math.exp %436 : vector<8x128xf32>
    %cst_138 = arith.constant 1.000000e+00 : f32
    %438 = vector.broadcast %cst_138 : f32 to vector<8x128xf32>
    %439 = arith.addf %438, %437 : vector<8x128xf32>
    %440 = arith.divf %438, %439 : vector<8x128xf32>
    %441 = vector.extract_strided_slice %434 {offsets = [0, 128], sizes = [8, 128], strides = [1, 1]} : vector<8x512xf32> to vector<8x128xf32>
    %442 = arith.negf %441 : vector<8x128xf32>
    %443 = math.exp %442 : vector<8x128xf32>
    %cst_139 = arith.constant 1.000000e+00 : f32
    %444 = vector.broadcast %cst_139 : f32 to vector<8x128xf32>
    %445 = arith.addf %444, %443 : vector<8x128xf32>
    %446 = arith.divf %444, %445 : vector<8x128xf32>
    %447 = vector.extract_strided_slice %434 {offsets = [0, 256], sizes = [8, 128], strides = [1, 1]} : vector<8x512xf32> to vector<8x128xf32>
    %448 = math.tanh %447 : vector<8x128xf32>
    %449 = vector.extract_strided_slice %434 {offsets = [0, 384], sizes = [8, 128], strides = [1, 1]} : vector<8x512xf32> to vector<8x128xf32>
    %450 = arith.negf %449 : vector<8x128xf32>
    %451 = math.exp %450 : vector<8x128xf32>
    %cst_140 = arith.constant 1.000000e+00 : f32
    %452 = vector.broadcast %cst_140 : f32 to vector<8x128xf32>
    %453 = arith.addf %452, %451 : vector<8x128xf32>
    %454 = arith.divf %452, %453 : vector<8x128xf32>
    %455 = arith.mulf %446, %380 : vector<8x128xf32>
    %456 = arith.mulf %440, %448 : vector<8x128xf32>
    %457 = arith.addf %455, %456 : vector<8x128xf32>
    %458 = math.tanh %457 : vector<8x128xf32>
    %459 = arith.mulf %454, %458 : vector<8x128xf32>
    %460 = arith.addi %3, %c5_i32 : i32
    %c8_i32_141 = arith.constant 8 : i32
    %461 = arith.muli %460, %c8_i32_141 : i32
    %462 = tpu.assume_multiple %461, 8 : i32
    %c8_i32_142 = arith.constant 8 : i32
    %463 = arith.addi %5, %c8_i32_142 : i32
    %c1_i32_143 = arith.constant 1 : i32
    %464 = arith.subi %463, %c1_i32_143 : i32
    %465 = arith.subi %464, %c5_i32 : i32
    %c8_i32_144 = arith.constant 8 : i32
    %466 = arith.muli %465, %c8_i32_144 : i32
    %467 = tpu.assume_multiple %466, 8 : i32
    %468 = arith.index_cast %462 : i32 to index
    %c0_145 = arith.constant 0 : index
    %469 = vector.load %arg9[%468, %c0_145] : memref<64x128xf32, #tpu.memory_space<vmem>>, vector<8x128xf32>
    tpu.vector_store %arg9[%468, %c0_145], %426 {strides = array<i32>} : memref<64x128xf32, #tpu.memory_space<vmem>>, vector<8x128xf32>,
    %470 = arith.index_cast %467 : i32 to index
    %c0_146 = arith.constant 0 : index
    %471 = vector.load %arg10[%470, %c0_146] : memref<64x128xf32, #tpu.memory_space<vmem>>, vector<8x128xf32>
    tpu.vector_store %arg10[%470, %c0_146], %459 {strides = array<i32>} : memref<64x128xf32, #tpu.memory_space<vmem>>, vector<8x128xf32>,
    %c6_i32 = arith.constant 6 : i32
    %472 = arith.index_cast %c6_i32 : i32 to index
    %c0_147 = arith.constant 0 : index
    %c0_148 = arith.constant 0 : index
    %473 = vector.load %arg2[%472, %c0_147, %c0_148] : memref<8x8x512xf32, #tpu.memory_space<vmem>>, vector<1x8x512xf32>
    %474 = vector.shape_cast %473 : vector<1x8x512xf32> to vector<8x512xf32>
    %475 = arith.truncf %426 : vector<8x128xf32> to vector<8x128xbf16>
    %c0_149 = arith.constant 0 : index
    %c0_150 = arith.constant 0 : index
    %476 = vector.load %arg4[%c0_149, %c0_150] : memref<128x512xbf16, #tpu.memory_space<vmem>>, vector<128x512xbf16>
    %cst_151 = arith.constant dense<0.000000e+00> : vector<8x512xf32>
    %477 = tpu.matmul %475, %476, %cst_151 {dimension_numbers = #tpu.dot_dimension_numbers<[1], [0], [0], [1], [0, 0, 1, 1], [], []>} : vector<8x128xbf16>, vector<128x512xbf16>, vector<8x512xf32> -> vector<8x512xf32>
    %478 = arith.addf %474, %477 : vector<8x512xf32>
    %479 = vector.extract_strided_slice %478 {offsets = [0, 0], sizes = [8, 128], strides = [1, 1]} : vector<8x512xf32> to vector<8x128xf32>
    %480 = arith.negf %479 : vector<8x128xf32>
    %481 = math.exp %480 : vector<8x128xf32>
    %cst_152 = arith.constant 1.000000e+00 : f32
    %482 = vector.broadcast %cst_152 : f32 to vector<8x128xf32>
    %483 = arith.addf %482, %481 : vector<8x128xf32>
    %484 = arith.divf %482, %483 : vector<8x128xf32>
    %485 = vector.extract_strided_slice %478 {offsets = [0, 128], sizes = [8, 128], strides = [1, 1]} : vector<8x512xf32> to vector<8x128xf32>
    %486 = arith.negf %485 : vector<8x128xf32>
    %487 = math.exp %486 : vector<8x128xf32>
    %cst_153 = arith.constant 1.000000e+00 : f32
    %488 = vector.broadcast %cst_153 : f32 to vector<8x128xf32>
    %489 = arith.addf %488, %487 : vector<8x128xf32>
    %490 = arith.divf %488, %489 : vector<8x128xf32>
    %491 = vector.extract_strided_slice %478 {offsets = [0, 256], sizes = [8, 128], strides = [1, 1]} : vector<8x512xf32> to vector<8x128xf32>
    %492 = math.tanh %491 : vector<8x128xf32>
    %493 = vector.extract_strided_slice %478 {offsets = [0, 384], sizes = [8, 128], strides = [1, 1]} : vector<8x512xf32> to vector<8x128xf32>
    %494 = arith.negf %493 : vector<8x128xf32>
    %495 = math.exp %494 : vector<8x128xf32>
    %cst_154 = arith.constant 1.000000e+00 : f32
    %496 = vector.broadcast %cst_154 : f32 to vector<8x128xf32>
    %497 = arith.addf %496, %495 : vector<8x128xf32>
    %498 = arith.divf %496, %497 : vector<8x128xf32>
    %499 = arith.mulf %490, %424 : vector<8x128xf32>
    %500 = arith.mulf %484, %492 : vector<8x128xf32>
    %501 = arith.addf %499, %500 : vector<8x128xf32>
    %502 = math.tanh %501 : vector<8x128xf32>
    %503 = arith.mulf %498, %502 : vector<8x128xf32>
    %c7_i32_155 = arith.constant 7 : i32
    %504 = arith.subi %c7_i32_155, %c6_i32 : i32
    %505 = arith.index_cast %504 : i32 to index
    %c0_156 = arith.constant 0 : index
    %c0_157 = arith.constant 0 : index
    %506 = vector.load %arg3[%505, %c0_156, %c0_157] : memref<8x8x512xf32, #tpu.memory_space<vmem>>, vector<1x8x512xf32>
    %507 = vector.shape_cast %506 : vector<1x8x512xf32> to vector<8x512xf32>
    %508 = arith.truncf %459 : vector<8x128xf32> to vector<8x128xbf16>
    %c0_158 = arith.constant 0 : index
    %c0_159 = arith.constant 0 : index
    %509 = vector.load %arg5[%c0_158, %c0_159] : memref<128x512xbf16, #tpu.memory_space<vmem>>, vector<128x512xbf16>
    %cst_160 = arith.constant dense<0.000000e+00> : vector<8x512xf32>
    %510 = tpu.matmul %508, %509, %cst_160 {dimension_numbers = #tpu.dot_dimension_numbers<[1], [0], [0], [1], [0, 0, 1, 1], [], []>} : vector<8x128xbf16>, vector<128x512xbf16>, vector<8x512xf32> -> vector<8x512xf32>
    %511 = arith.addf %507, %510 : vector<8x512xf32>
    %512 = vector.extract_strided_slice %511 {offsets = [0, 0], sizes = [8, 128], strides = [1, 1]} : vector<8x512xf32> to vector<8x128xf32>
    %513 = arith.negf %512 : vector<8x128xf32>
    %514 = math.exp %513 : vector<8x128xf32>
    %cst_161 = arith.constant 1.000000e+00 : f32
    %515 = vector.broadcast %cst_161 : f32 to vector<8x128xf32>
    %516 = arith.addf %515, %514 : vector<8x128xf32>
    %517 = arith.divf %515, %516 : vector<8x128xf32>
    %518 = vector.extract_strided_slice %511 {offsets = [0, 128], sizes = [8, 128], strides = [1, 1]} : vector<8x512xf32> to vector<8x128xf32>
    %519 = arith.negf %518 : vector<8x128xf32>
    %520 = math.exp %519 : vector<8x128xf32>
    %cst_162 = arith.constant 1.000000e+00 : f32
    %521 = vector.broadcast %cst_162 : f32 to vector<8x128xf32>
    %522 = arith.addf %521, %520 : vector<8x128xf32>
    %523 = arith.divf %521, %522 : vector<8x128xf32>
    %524 = vector.extract_strided_slice %511 {offsets = [0, 256], sizes = [8, 128], strides = [1, 1]} : vector<8x512xf32> to vector<8x128xf32>
    %525 = math.tanh %524 : vector<8x128xf32>
    %526 = vector.extract_strided_slice %511 {offsets = [0, 384], sizes = [8, 128], strides = [1, 1]} : vector<8x512xf32> to vector<8x128xf32>
    %527 = arith.negf %526 : vector<8x128xf32>
    %528 = math.exp %527 : vector<8x128xf32>
    %cst_163 = arith.constant 1.000000e+00 : f32
    %529 = vector.broadcast %cst_163 : f32 to vector<8x128xf32>
    %530 = arith.addf %529, %528 : vector<8x128xf32>
    %531 = arith.divf %529, %530 : vector<8x128xf32>
    %532 = arith.mulf %523, %457 : vector<8x128xf32>
    %533 = arith.mulf %517, %525 : vector<8x128xf32>
    %534 = arith.addf %532, %533 : vector<8x128xf32>
    %535 = math.tanh %534 : vector<8x128xf32>
    %536 = arith.mulf %531, %535 : vector<8x128xf32>
    %537 = arith.addi %3, %c6_i32 : i32
    %c8_i32_164 = arith.constant 8 : i32
    %538 = arith.muli %537, %c8_i32_164 : i32
    %539 = tpu.assume_multiple %538, 8 : i32
    %c8_i32_165 = arith.constant 8 : i32
    %540 = arith.addi %5, %c8_i32_165 : i32
    %c1_i32_166 = arith.constant 1 : i32
    %541 = arith.subi %540, %c1_i32_166 : i32
    %542 = arith.subi %541, %c6_i32 : i32
    %c8_i32_167 = arith.constant 8 : i32
    %543 = arith.muli %542, %c8_i32_167 : i32
    %544 = tpu.assume_multiple %543, 8 : i32
    %545 = arith.index_cast %539 : i32 to index
    %c0_168 = arith.constant 0 : index
    %546 = vector.load %arg9[%545, %c0_168] : memref<64x128xf32, #tpu.memory_space<vmem>>, vector<8x128xf32>
    tpu.vector_store %arg9[%545, %c0_168], %503 {strides = array<i32>} : memref<64x128xf32, #tpu.memory_space<vmem>>, vector<8x128xf32>,
    %547 = arith.index_cast %544 : i32 to index
    %c0_169 = arith.constant 0 : index
    %548 = vector.load %arg10[%547, %c0_169] : memref<64x128xf32, #tpu.memory_space<vmem>>, vector<8x128xf32>
    tpu.vector_store %arg10[%547, %c0_169], %536 {strides = array<i32>} : memref<64x128xf32, #tpu.memory_space<vmem>>, vector<8x128xf32>,
    %c7_i32_170 = arith.constant 7 : i32
    %549 = arith.index_cast %c7_i32_170 : i32 to index
    %c0_171 = arith.constant 0 : index
    %c0_172 = arith.constant 0 : index
    %550 = vector.load %arg2[%549, %c0_171, %c0_172] : memref<8x8x512xf32, #tpu.memory_space<vmem>>, vector<1x8x512xf32>
    %551 = vector.shape_cast %550 : vector<1x8x512xf32> to vector<8x512xf32>
    %552 = arith.truncf %503 : vector<8x128xf32> to vector<8x128xbf16>
    %c0_173 = arith.constant 0 : index
    %c0_174 = arith.constant 0 : index
    %553 = vector.load %arg4[%c0_173, %c0_174] : memref<128x512xbf16, #tpu.memory_space<vmem>>, vector<128x512xbf16>
    %cst_175 = arith.constant dense<0.000000e+00> : vector<8x512xf32>
    %554 = tpu.matmul %552, %553, %cst_175 {dimension_numbers = #tpu.dot_dimension_numbers<[1], [0], [0], [1], [0, 0, 1, 1], [], []>} : vector<8x128xbf16>, vector<128x512xbf16>, vector<8x512xf32> -> vector<8x512xf32>
    %555 = arith.addf %551, %554 : vector<8x512xf32>
    %556 = vector.extract_strided_slice %555 {offsets = [0, 0], sizes = [8, 128], strides = [1, 1]} : vector<8x512xf32> to vector<8x128xf32>
    %557 = arith.negf %556 : vector<8x128xf32>
    %558 = math.exp %557 : vector<8x128xf32>
    %cst_176 = arith.constant 1.000000e+00 : f32
    %559 = vector.broadcast %cst_176 : f32 to vector<8x128xf32>
    %560 = arith.addf %559, %558 : vector<8x128xf32>
    %561 = arith.divf %559, %560 : vector<8x128xf32>
    %562 = vector.extract_strided_slice %555 {offsets = [0, 128], sizes = [8, 128], strides = [1, 1]} : vector<8x512xf32> to vector<8x128xf32>
    %563 = arith.negf %562 : vector<8x128xf32>
    %564 = math.exp %563 : vector<8x128xf32>
    %cst_177 = arith.constant 1.000000e+00 : f32
    %565 = vector.broadcast %cst_177 : f32 to vector<8x128xf32>
    %566 = arith.addf %565, %564 : vector<8x128xf32>
    %567 = arith.divf %565, %566 : vector<8x128xf32>
    %568 = vector.extract_strided_slice %555 {offsets = [0, 256], sizes = [8, 128], strides = [1, 1]} : vector<8x512xf32> to vector<8x128xf32>
    %569 = math.tanh %568 : vector<8x128xf32>
    %570 = vector.extract_strided_slice %555 {offsets = [0, 384], sizes = [8, 128], strides = [1, 1]} : vector<8x512xf32> to vector<8x128xf32>
    %571 = arith.negf %570 : vector<8x128xf32>
    %572 = math.exp %571 : vector<8x128xf32>
    %cst_178 = arith.constant 1.000000e+00 : f32
    %573 = vector.broadcast %cst_178 : f32 to vector<8x128xf32>
    %574 = arith.addf %573, %572 : vector<8x128xf32>
    %575 = arith.divf %573, %574 : vector<8x128xf32>
    %576 = arith.mulf %567, %501 : vector<8x128xf32>
    %577 = arith.mulf %561, %569 : vector<8x128xf32>
    %578 = arith.addf %576, %577 : vector<8x128xf32>
    %579 = math.tanh %578 : vector<8x128xf32>
    %580 = arith.mulf %575, %579 : vector<8x128xf32>
    %c7_i32_179 = arith.constant 7 : i32
    %581 = arith.subi %c7_i32_179, %c7_i32_170 : i32
    %582 = arith.index_cast %581 : i32 to index
    %c0_180 = arith.constant 0 : index
    %c0_181 = arith.constant 0 : index
    %583 = vector.load %arg3[%582, %c0_180, %c0_181] : memref<8x8x512xf32, #tpu.memory_space<vmem>>, vector<1x8x512xf32>
    %584 = vector.shape_cast %583 : vector<1x8x512xf32> to vector<8x512xf32>
    %585 = arith.truncf %536 : vector<8x128xf32> to vector<8x128xbf16>
    %c0_182 = arith.constant 0 : index
    %c0_183 = arith.constant 0 : index
    %586 = vector.load %arg5[%c0_182, %c0_183] : memref<128x512xbf16, #tpu.memory_space<vmem>>, vector<128x512xbf16>
    %cst_184 = arith.constant dense<0.000000e+00> : vector<8x512xf32>
    %587 = tpu.matmul %585, %586, %cst_184 {dimension_numbers = #tpu.dot_dimension_numbers<[1], [0], [0], [1], [0, 0, 1, 1], [], []>} : vector<8x128xbf16>, vector<128x512xbf16>, vector<8x512xf32> -> vector<8x512xf32>
    %588 = arith.addf %584, %587 : vector<8x512xf32>
    %589 = vector.extract_strided_slice %588 {offsets = [0, 0], sizes = [8, 128], strides = [1, 1]} : vector<8x512xf32> to vector<8x128xf32>
    %590 = arith.negf %589 : vector<8x128xf32>
    %591 = math.exp %590 : vector<8x128xf32>
    %cst_185 = arith.constant 1.000000e+00 : f32
    %592 = vector.broadcast %cst_185 : f32 to vector<8x128xf32>
    %593 = arith.addf %592, %591 : vector<8x128xf32>
    %594 = arith.divf %592, %593 : vector<8x128xf32>
    %595 = vector.extract_strided_slice %588 {offsets = [0, 128], sizes = [8, 128], strides = [1, 1]} : vector<8x512xf32> to vector<8x128xf32>
    %596 = arith.negf %595 : vector<8x128xf32>
    %597 = math.exp %596 : vector<8x128xf32>
    %cst_186 = arith.constant 1.000000e+00 : f32
    %598 = vector.broadcast %cst_186 : f32 to vector<8x128xf32>
    %599 = arith.addf %598, %597 : vector<8x128xf32>
    %600 = arith.divf %598, %599 : vector<8x128xf32>
    %601 = vector.extract_strided_slice %588 {offsets = [0, 256], sizes = [8, 128], strides = [1, 1]} : vector<8x512xf32> to vector<8x128xf32>
    %602 = math.tanh %601 : vector<8x128xf32>
    %603 = vector.extract_strided_slice %588 {offsets = [0, 384], sizes = [8, 128], strides = [1, 1]} : vector<8x512xf32> to vector<8x128xf32>
    %604 = arith.negf %603 : vector<8x128xf32>
    %605 = math.exp %604 : vector<8x128xf32>
    %cst_187 = arith.constant 1.000000e+00 : f32
    %606 = vector.broadcast %cst_187 : f32 to vector<8x128xf32>
    %607 = arith.addf %606, %605 : vector<8x128xf32>
    %608 = arith.divf %606, %607 : vector<8x128xf32>
    %609 = arith.mulf %600, %534 : vector<8x128xf32>
    %610 = arith.mulf %594, %602 : vector<8x128xf32>
    %611 = arith.addf %609, %610 : vector<8x128xf32>
    %612 = math.tanh %611 : vector<8x128xf32>
    %613 = arith.mulf %608, %612 : vector<8x128xf32>
    %614 = arith.addi %3, %c7_i32_170 : i32
    %c8_i32_188 = arith.constant 8 : i32
    %615 = arith.muli %614, %c8_i32_188 : i32
    %616 = tpu.assume_multiple %615, 8 : i32
    %c8_i32_189 = arith.constant 8 : i32
    %617 = arith.addi %5, %c8_i32_189 : i32
    %c1_i32_190 = arith.constant 1 : i32
    %618 = arith.subi %617, %c1_i32_190 : i32
    %619 = arith.subi %618, %c7_i32_170 : i32
    %c8_i32_191 = arith.constant 8 : i32
    %620 = arith.muli %619, %c8_i32_191 : i32
    %621 = tpu.assume_multiple %620, 8 : i32
    %622 = arith.index_cast %616 : i32 to index
    %c0_192 = arith.constant 0 : index
    %623 = vector.load %arg9[%622, %c0_192] : memref<64x128xf32, #tpu.memory_space<vmem>>, vector<8x128xf32>
    tpu.vector_store %arg9[%622, %c0_192], %580 {strides = array<i32>} : memref<64x128xf32, #tpu.memory_space<vmem>>, vector<8x128xf32>,
    %624 = arith.index_cast %621 : i32 to index
    %c0_193 = arith.constant 0 : index
    %625 = vector.load %arg10[%624, %c0_193] : memref<64x128xf32, #tpu.memory_space<vmem>>, vector<8x128xf32>
    tpu.vector_store %arg10[%624, %c0_193], %613 {strides = array<i32>} : memref<64x128xf32, #tpu.memory_space<vmem>>, vector<8x128xf32>,
    %c8_i32_194 = arith.constant 8 : i32
    %c0_195 = arith.constant 0 : index
    %c0_196 = arith.constant 0 : index
    %626 = vector.load %arg11[%c0_195, %c0_196] : memref<8x128xf32, #tpu.memory_space<vmem>>, vector<8x128xf32>
    tpu.vector_store %arg11[%c0_195, %c0_196], %580 {strides = array<i32>} : memref<8x128xf32, #tpu.memory_space<vmem>>, vector<8x128xf32>,
    %c0_197 = arith.constant 0 : index
    %c0_198 = arith.constant 0 : index
    %627 = vector.load %arg12[%c0_197, %c0_198] : memref<8x128xf32, #tpu.memory_space<vmem>>, vector<8x128xf32>
    tpu.vector_store %arg12[%c0_197, %c0_198], %578 {strides = array<i32>} : memref<8x128xf32, #tpu.memory_space<vmem>>, vector<8x128xf32>,
    %c0_199 = arith.constant 0 : index
    %c0_200 = arith.constant 0 : index
    %628 = vector.load %arg13[%c0_199, %c0_200] : memref<8x128xf32, #tpu.memory_space<vmem>>, vector<8x128xf32>
    tpu.vector_store %arg13[%c0_199, %c0_200], %613 {strides = array<i32>} : memref<8x128xf32, #tpu.memory_space<vmem>>, vector<8x128xf32>,
    %c0_201 = arith.constant 0 : index
    %c0_202 = arith.constant 0 : index
    %629 = vector.load %arg14[%c0_201, %c0_202] : memref<8x128xf32, #tpu.memory_space<vmem>>, vector<8x128xf32>
    tpu.vector_store %arg14[%c0_201, %c0_202], %611 {strides = array<i32>} : memref<8x128xf32, #tpu.memory_space<vmem>>, vector<8x128xf32>,
    %c0_i32_203 = arith.constant 0 : i32
    %630 = arith.cmpi eq, %arg1, %c0_i32_203 : i32
    %631 = arith.extui %630 : i1 to i32
    %c0_i32_204 = arith.constant 0 : i32
    %632 = arith.cmpi ne, %631, %c0_i32_204 : i32
    scf.if %632 {
      %c0_205 = arith.constant 0 : index
      %c0_206 = arith.constant 0 : index
      %633 = vector.load %arg9[%c0_205, %c0_206] : memref<64x128xf32, #tpu.memory_space<vmem>>, vector<64x128xf32>
      %c0_207 = arith.constant 0 : index
      %c0_208 = arith.constant 0 : index
      %634 = vector.load %arg6[%c0_207, %c0_208] : memref<256x2xf32, #tpu.memory_space<vmem>>, vector<128x2xf32>
      %cst_209 = arith.constant dense<0.000000e+00> : vector<64x2xf32>
      %635 = tpu.matmul %633, %634, %cst_209 {dimension_numbers = #tpu.dot_dimension_numbers<[1], [0], [0], [1], [0, 0, 1, 1], [], []>} : vector<64x128xf32>, vector<128x2xf32>, vector<64x2xf32> -> vector<64x2xf32>
      %c0_210 = arith.constant 0 : index
      %c0_211 = arith.constant 0 : index
      %636 = vector.load %arg10[%c0_210, %c0_211] : memref<64x128xf32, #tpu.memory_space<vmem>>, vector<64x128xf32>
      %c128 = arith.constant 128 : index
      %c0_212 = arith.constant 0 : index
      %637 = vector.load %arg6[%c128, %c0_212] : memref<256x2xf32, #tpu.memory_space<vmem>>, vector<128x2xf32>
      %cst_213 = arith.constant dense<0.000000e+00> : vector<64x2xf32>
      %638 = tpu.matmul %636, %637, %cst_213 {dimension_numbers = #tpu.dot_dimension_numbers<[1], [0], [0], [1], [0, 0, 1, 1], [], []>} : vector<64x128xf32>, vector<128x2xf32>, vector<64x2xf32> -> vector<64x2xf32>
      %639 = arith.addf %635, %638 : vector<64x2xf32>
      %c0_214 = arith.constant 0 : index
      %c0_215 = arith.constant 0 : index
      %640 = vector.load %arg7[%c0_214, %c0_215] : memref<1x2xf32, #tpu.memory_space<vmem>>, vector<1x2xf32>
      %641 = vector.broadcast %640 : vector<1x2xf32> to vector<64x2xf32>
      %642 = arith.addf %639, %641 : vector<64x2xf32>
      %643 = vector.shape_cast %642 : vector<64x2xf32> to vector<8x8x2xf32>
      %c0_216 = arith.constant 0 : index
      %c0_217 = arith.constant 0 : index
      %c0_218 = arith.constant 0 : index
      %644 = vector.load %arg8[%c0_216, %c0_217, %c0_218] : memref<8x8x2xf32, #tpu.memory_space<vmem>>, vector<8x8x2xf32>
      tpu.vector_store %arg8[%c0_216, %c0_217, %c0_218], %643 {strides = array<i32>} : memref<8x8x2xf32, #tpu.memory_space<vmem>>, vector<8x8x2xf32>,
    } else {
    }
    return
  }
  func.func @transform_0(%arg0: i32, %arg1: i32) -> (i32, i32, i32) {
    %c0_i32 = arith.constant 0 : i32
    %c0_i32_0 = arith.constant 0 : i32
    return %arg1, %arg0, %c0_i32 : i32, i32, i32
  }
  func.func @transform_1(%arg0: i32, %arg1: i32) -> (i32, i32, i32) {
    %c0_i32 = arith.constant 0 : i32
    %0 = arith.subi %c0_i32, %arg1 : i32
    %c0_i32_0 = arith.constant 0 : i32
    %c0_i32_1 = arith.constant 0 : i32
    return %0, %arg0, %c0_i32_0 : i32, i32, i32
  }
  func.func @transform_2(%arg0: i32, %arg1: i32) -> (i32, i32) {
    %c0_i32 = arith.constant 0 : i32
    %c0_i32_0 = arith.constant 0 : i32
    %c0_i32_1 = arith.constant 0 : i32
    return %c0_i32, %c0_i32_0 : i32, i32
  }
  func.func @transform_3(%arg0: i32, %arg1: i32) -> (i32, i32) {
    %c0_i32 = arith.constant 0 : i32
    %c0_i32_0 = arith.constant 0 : i32
    %c0_i32_1 = arith.constant 0 : i32
    return %c0_i32, %c0_i32_0 : i32, i32
  }
  func.func @transform_4(%arg0: i32, %arg1: i32) -> (i32, i32) {
    %c0_i32 = arith.constant 0 : i32
    %c0_i32_0 = arith.constant 0 : i32
    %c0_i32_1 = arith.constant 0 : i32
    return %c0_i32, %c0_i32_0 : i32, i32
  }
  func.func @transform_5(%arg0: i32, %arg1: i32) -> (i32, i32) {
    %c0_i32 = arith.constant 0 : i32
    %c0_i32_0 = arith.constant 0 : i32
    %c0_i32_1 = arith.constant 0 : i32
    return %c0_i32, %c0_i32_0 : i32, i32
  }
  func.func @transform_6(%arg0: i32, %arg1: i32) -> (i32, i32, i32) {
    %c0_i32 = arith.constant 0 : i32
    %c0_i32_0 = arith.constant 0 : i32
    %c0_i32_1 = arith.constant 0 : i32
    return %c0_i32, %arg0, %c0_i32_0 : i32, i32, i32
  }
}

</mosaic_0001>

<llo_original>
// kernel: tpu_custom_call.1
$region0: #{tpu_custom_call.1}
  #allocation0 [shape = 'u32[]', space=smem, size = 0x4, offset = 0x4, fixed_abs, tag = 'smem constant byte address 0x4 - core index']
  #allocation1 [shape = 'u32[72,128]{1,0:T(1,128)}', space=vmem, size = 0x9000, scoped, tag = 'internal scratch']
  #allocation2 [shape = 'f32[64,128]{1,0:T(8,128)}', space=vmem, size = 0x8000, scoped, tag = 'scratch operand']
  #allocation3 [shape = 'f32[64,128]{1,0:T(8,128)}', space=vmem, size = 0x8000, scoped, tag = 'scratch operand']
  #allocation4 [shape = 'f32[8,128]{1,0:T(8,128)}', space=vmem, size = 0x1000, scoped, tag = 'scratch operand']
  #allocation5 [shape = 'f32[8,128]{1,0:T(8,128)}', space=vmem, size = 0x1000, scoped, tag = 'scratch operand']
  #allocation6 [shape = 'f32[8,128]{1,0:T(8,128)}', space=vmem, size = 0x1000, scoped, tag = 'scratch operand']
  #allocation7 [shape = 'f32[8,128]{1,0:T(8,128)}', space=vmem, size = 0x1000, scoped, tag = 'scratch operand']
  %s0 = inlined_call_operand.vmem [shape: f32[8,8,512], index: 0, kind: input, shape index: {}]
  %s1 = inlined_call_operand.hbm [shape: f32[8,8,512], index: 1, kind: input, shape index: {}]
  %s2 = inlined_call_operand.hbm [shape: bf16[128,512], index: 2, kind: input, shape index: {}]
  %s3 = inlined_call_operand.hbm [shape: bf16[128,512], index: 3, kind: input, shape index: {}]
  %s4 = inlined_call_operand.vmem [shape: f32[256,2], index: 4, kind: input, shape index: {}]
  %s5 = inlined_call_operand.vmem [shape: f32[1,2], index: 5, kind: input, shape index: {}]
  %s6 = inlined_call_operand.vmem [shape: f32[8,8,2], index: 6, kind: output, shape index: {}]
  %s7 = sld [smem:[#allocation0]]
  $region54: #{tpu_custom_call.1} parent=0
    _
  %s9 = ssub.s32 1, %s7
  %s10 = scalar_select 0, %s9, %s7
  $region1: #{tpu_custom_call.1} parent=0
    #allocation8 [shape = 'u8[131072]{0}', space=vmem, size = 0x20000, scoped, tag = 'input window, operand 1, single buffered']
    #allocation9 [shape = 's32[1]{0}', space=sflag, size = 0x4, scoped, tag = 'scoped memory for tpu_custom_call.1']
    #allocation10 [shape = 'u8[131072]{0}', space=vmem, size = 0x20000, scoped, tag = 'input window, operand 2, single buffered']
    #allocation11 [shape = 's32[1]{0}', space=sflag, size = 0x4, scoped, tag = 'scoped memory for tpu_custom_call.1']
    #allocation12 [shape = 'u8[131072]{0}', space=vmem, size = 0x20000, scoped, tag = 'input window, operand 3, single buffered']
    %11 = vsyncpa [#allocation9], 0
    %12 = vsyncpa [#allocation11], 0
    // Predicated region
    $region2: #{tpu_custom_call.1} parent=1 // pred_check
      _
    $region3: #{tpu_custom_call.1} parent=1 // pred_check_branch
      %14 = sbr.rel (0) target = $region5
    $region4: #{tpu_custom_call.1} parent=1 // pred_region
      _
    $region5: #{tpu_custom_call.1} parent=1 // pred_fallthru
      _
    // Predicated region
    $region6: #{tpu_custom_call.1} parent=1 // pred_check
      _
    $region7: #{tpu_custom_call.1} parent=1 // pred_check_branch
      %16 = sbr.rel (0) target = $region9
    $region8: #{tpu_custom_call.1} parent=1 // pred_region
      %s17 = ssub.s32 0, 0
      %s18 = smul.u32 8, %s17
      %20 = vsyncadd [#allocation9], 0
      %s21 = smul.addr %s18, 4
      %s22 = smul.addr %s21, 8
      %s23 = scalar_lea.hbm %s1, %s22
      %s24 = sshll.u32 %s23, 4
      %s25 = int_to_ptr.hbm [resolvable:$true] %s24
      %s26 = sshll.u32 [#allocation8], 4
      %s27 = int_to_ptr.vmem [resolvable:$true] %s26
      %32 = dma.hbm_to_vmem [thread:$0]  %s25, 4096, %s27, [#allocation9], 512, 512, 32
    $region9: #{tpu_custom_call.1} parent=1 // pred_fallthru
      _
    // Predicated region
    $region10: #{tpu_custom_call.1} parent=1 // pred_check
      _
    $region11: #{tpu_custom_call.1} parent=1 // pred_check_branch
      %34 = sbr.rel (0) target = $region13
    $region12: #{tpu_custom_call.1} parent=1 // pred_region
      %36 = vsyncadd [#allocation11], 0
      %s37 = sshll.u32 %s2, 4
      %s38 = int_to_ptr.hbm [resolvable:$true] %s37
      %s39 = sshll.u32 [#allocation10], 4
      %s40 = int_to_ptr.vmem [resolvable:$true] %s39
      %45 = dma.hbm_to_vmem [thread:$0]  %s38, 4096, %s40, [#allocation11], 256, 256, 16
    $region13: #{tpu_custom_call.1} parent=1 // pred_fallthru
      _
    // Predicated region
    $region14: #{tpu_custom_call.1} parent=1 // pred_check
      _
    $region15: #{tpu_custom_call.1} parent=1 // pred_check_branch
      %47 = sbr.rel (0) target = $region17
    $region16: #{tpu_custom_call.1} parent=1 // pred_region
      %49 = vsyncadd [#allocation11], 0
      %s50 = sshll.u32 %s3, 4
      %s51 = int_to_ptr.hbm [resolvable:$true] %s50
      %s52 = sshll.u32 [#allocation12], 4
      %s53 = int_to_ptr.vmem [resolvable:$true] %s52
      %58 = dma.hbm_to_vmem [thread:$0]  %s51, 4096, %s53, [#allocation11], 256, 256, 16
    $region17: #{tpu_custom_call.1} parent=1 // pred_fallthru
      _
    // Predicated region
    $region18: #{tpu_custom_call.1} parent=1 // pred_check
      _
    $region19: #{tpu_custom_call.1} parent=1 // pred_check_branch
      %60 = sbr.rel (0) target = $region21
    $region20: #{tpu_custom_call.1} parent=1 // pred_region
      _
    $region21: #{tpu_custom_call.1} parent=1 // pred_fallthru
      _
    // Predicated region
    $region22: #{tpu_custom_call.1} parent=1 // pred_check
      _
    $region23: #{tpu_custom_call.1} parent=1 // pred_check_branch
      %62 = sbr.rel (0) target = $region25
    $region24: #{tpu_custom_call.1} parent=1 // pred_region
      _
    $region25: #{tpu_custom_call.1} parent=1 // pred_fallthru
      _
    // Predicated region
    $region26: #{tpu_custom_call.1} parent=1 // pred_check
      _
    $region27: #{tpu_custom_call.1} parent=1 // pred_check_branch
      %64 = sbr.rel (0) target = $region29
    $region28: #{tpu_custom_call.1} parent=1 // pred_region
      %66 = dma.done [#allocation9], 4096
    $region29: #{tpu_custom_call.1} parent=1 // pred_fallthru
      _
    // Predicated region
    $region30: #{tpu_custom_call.1} parent=1 // pred_check
      _
    $region31: #{tpu_custom_call.1} parent=1 // pred_check_branch
      %68 = sbr.rel (0) target = $region33
    $region32: #{tpu_custom_call.1} parent=1 // pred_region
      %70 = dma.done [#allocation11], 4096
    $region33: #{tpu_custom_call.1} parent=1 // pred_fallthru
      _
    // Predicated region
    $region34: #{tpu_custom_call.1} parent=1 // pred_check
      _
    $region35: #{tpu_custom_call.1} parent=1 // pred_check_branch
      %72 = sbr.rel (0) target = $region37
    $region36: #{tpu_custom_call.1} parent=1 // pred_region
      %74 = dma.done [#allocation11], 4096
    $region37: #{tpu_custom_call.1} parent=1 // pred_fallthru
      _
    %s75 = ssub.s32 0, 0
    %s76 = smul.u32 8, %s75
    %p77 = scmp.eq.s32.totalorder 0, 0
    // Predicated region
    $region38: #{tpu_custom_call.1} parent=1 // pred_check
      %p78 = pneg %p77
    $region39: #{tpu_custom_call.1} parent=1 // pred_check_branch
      %80 = sbr.rel (%p78) target = $region41
    $region40: #{tpu_custom_call.1} parent=1 // pred_region
      %81 = vst [vmem:[#allocation4] sm:$0xff] 0.0
      %82 = vst [vmem:[#allocation5] sm:$0xff] 0.0
      %83 = vst [vmem:[#allocation6] sm:$0xff] 0.0
      %84 = vst [vmem:[#allocation7] sm:$0xff] 0.0
    $region41: #{tpu_custom_call.1} parent=1 // pred_fallthru
      _
    %s85 = smul.u32 0, 8
    %s86 = ssub.s32 0, 0
    %s87 = smul.u32 %s86, 8
    %v88 = vld [vmem:[#allocation4] sm:$0xff]
    %v89 = vld [vmem:[#allocation5] sm:$0xff]
    %v90 = vld [vmem:[#allocation6] sm:$0xff]
    %v91 = vld [vmem:[#allocation7] sm:$0xff]
    %v92 = vld [vmem:[%s0] sm:$0xff]
    %v93 = vld [vmem:[%s0 + $0x8] sm:$0xff]
    %v94 = vld [vmem:[%s0 + $0x10] sm:$0xff]
    %v95 = vld [vmem:[%s0 + $0x18] sm:$0xff]
    %v96 = vpack.c.bf16 %v88, %v88
    %v97 = vld [vmem:[#allocation10] sm:$0xff]
    %v98 = vld [vmem:[#allocation10 + $0x8] sm:$0xff]
    %v99 = vld [vmem:[#allocation10 + $0x10] sm:$0xff]
    %v100 = vld [vmem:[#allocation10 + $0x18] sm:$0xff]
    %v101 = vld [vmem:[#allocation10 + $0x20] sm:$0xff]
    %v102 = vld [vmem:[#allocation10 + $0x28] sm:$0xff]
    %v103 = vld [vmem:[#allocation10 + $0x30] sm:$0xff]
    %v104 = vld [vmem:[#allocation10 + $0x38] sm:$0xff]
    %v105 = vld [vmem:[#allocation10 + $0x40] sm:$0xff]
    %v106 = vld [vmem:[#allocation10 + $0x48] sm:$0xff]
    %v107 = vld [vmem:[#allocation10 + $0x50] sm:$0xff]
    %v108 = vld [vmem:[#allocation10 + $0x58] sm:$0xff]
    %v109 = vld [vmem:[#allocation10 + $0x60] sm:$0xff]
    %v110 = vld [vmem:[#allocation10 + $0x68] sm:$0xff]
    %v111 = vld [vmem:[#allocation10 + $0x70] sm:$0xff]
    %v112 = vld [vmem:[#allocation10 + $0x78] sm:$0xff]
    %v113 = vld [vmem:[#allocation10 + $0x80] sm:$0xff]
    %v114 = vld [vmem:[#allocation10 + $0x88] sm:$0xff]
    %v115 = vld [vmem:[#allocation10 + $0x90] sm:$0xff]
    %v116 = vld [vmem:[#allocation10 + $0x98] sm:$0xff]
    %v117 = vld [vmem:[#allocation10 + $0xa0] sm:$0xff]
    %v118 = vld [vmem:[#allocation10 + $0xa8] sm:$0xff]
    %v119 = vld [vmem:[#allocation10 + $0xb0] sm:$0xff]
    %v120 = vld [vmem:[#allocation10 + $0xb8] sm:$0xff]
    %v121 = vld [vmem:[#allocation10 + $0xc0] sm:$0xff]
    %v122 = vld [vmem:[#allocation10 + $0xc8] sm:$0xff]
    %v123 = vld [vmem:[#allocation10 + $0xd0] sm:$0xff]
    %v124 = vld [vmem:[#allocation10 + $0xd8] sm:$0xff]
    %v125 = vld [vmem:[#allocation10 + $0xe0] sm:$0xff]
    %v126 = vld [vmem:[#allocation10 + $0xe8] sm:$0xff]
    %v127 = vld [vmem:[#allocation10 + $0xf0] sm:$0xff]
    %v128 = vld [vmem:[#allocation10 + $0xf8] sm:$0xff]
    %v161 = vunpack.c.l.b16 %v97
    %v162 = vunpack.c.h.b16 %v97
    %v163 = vunpack.c.l.b16 %v98
    %v164 = vunpack.c.h.b16 %v98
    %v165 = vunpack.c.l.b16 %v99
    %v166 = vunpack.c.h.b16 %v99
    %v167 = vunpack.c.l.b16 %v100
    %v168 = vunpack.c.h.b16 %v100
    %v169 = vunpack.c.l.b16 %v101
    %v170 = vunpack.c.h.b16 %v101
    %v171 = vunpack.c.l.b16 %v102
    %v172 = vunpack.c.h.b16 %v102
    %v173 = vunpack.c.l.b16 %v103
    %v174 = vunpack.c.h.b16 %v103
    %v175 = vunpack.c.l.b16 %v104
    %v176 = vunpack.c.h.b16 %v104
    %v177 = vunpack.c.l.b16 %v105
    %v178 = vunpack.c.h.b16 %v105
    %v179 = vunpack.c.l.b16 %v106
    %v180 = vunpack.c.h.b16 %v106
    %v181 = vunpack.c.l.b16 %v107
    %v182 = vunpack.c.h.b16 %v107
    %v183 = vunpack.c.l.b16 %v108
    %v184 = vunpack.c.h.b16 %v108
    %v185 = vunpack.c.l.b16 %v109
    %v186 = vunpack.c.h.b16 %v109
    %v187 = vunpack.c.l.b16 %v110
    %v188 = vunpack.c.h.b16 %v110
    %v189 = vunpack.c.l.b16 %v111
    %v190 = vunpack.c.h.b16 %v111
    %v191 = vunpack.c.l.b16 %v112
    %v192 = vunpack.c.h.b16 %v112
    %v193 = vunpack.c.l.b16 %v113
    %v194 = vunpack.c.h.b16 %v113
    %v195 = vunpack.c.l.b16 %v114
    %v196 = vunpack.c.h.b16 %v114
    %v197 = vunpack.c.l.b16 %v115
    %v198 = vunpack.c.h.b16 %v115
    %v199 = vunpack.c.l.b16 %v116
    %v200 = vunpack.c.h.b16 %v116
    %v201 = vunpack.c.l.b16 %v117
    %v202 = vunpack.c.h.b16 %v117
    %v203 = vunpack.c.l.b16 %v118
    %v204 = vunpack.c.h.b16 %v118
    %v205 = vunpack.c.l.b16 %v119
    %v206 = vunpack.c.h.b16 %v119
    %v207 = vunpack.c.l.b16 %v120
    %v208 = vunpack.c.h.b16 %v120
    %v209 = vunpack.c.l.b16 %v121
    %v210 = vunpack.c.h.b16 %v121
    %v211 = vunpack.c.l.b16 %v122
    %v212 = vunpack.c.h.b16 %v122
    %v213 = vunpack.c.l.b16 %v123
    %v214 = vunpack.c.h.b16 %v123
    %v215 = vunpack.c.l.b16 %v124
    %v216 = vunpack.c.h.b16 %v124
    %v217 = vunpack.c.l.b16 %v125
    %v218 = vunpack.c.h.b16 %v125
    %v219 = vunpack.c.l.b16 %v126
    %v220 = vunpack.c.h.b16 %v126
    %v221 = vunpack.c.l.b16 %v127
    %v222 = vunpack.c.h.b16 %v127
    %v223 = vunpack.c.l.b16 %v128
    %v224 = vunpack.c.h.b16 %v128
    %v225 = vpack.c.b16 %v165, %v161
    %v226 = vpack.c.b16 %v166, %v162
    %v227 = vpack.c.b16 %v167, %v163
    %v228 = vpack.c.b16 %v168, %v164
    %v229 = vpack.c.b16 %v173, %v169
    %v230 = vpack.c.b16 %v174, %v170
    %v231 = vpack.c.b16 %v175, %v171
    %v232 = vpack.c.b16 %v176, %v172
    %v233 = vpack.c.b16 %v181, %v177
    %v234 = vpack.c.b16 %v182, %v178
    %v235 = vpack.c.b16 %v183, %v179
    %v236 = vpack.c.b16 %v184, %v180
    %v237 = vpack.c.b16 %v189, %v185
    %v238 = vpack.c.b16 %v190, %v186
    %v239 = vpack.c.b16 %v191, %v187
    %v240 = vpack.c.b16 %v192, %v188
    %v241 = vpack.c.b16 %v197, %v193
    %v242 = vpack.c.b16 %v198, %v194
    %v243 = vpack.c.b16 %v199, %v195
    %v244 = vpack.c.b16 %v200, %v196
    %v245 = vpack.c.b16 %v205, %v201
    %v246 = vpack.c.b16 %v206, %v202
    %v247 = vpack.c.b16 %v207, %v203
    %v248 = vpack.c.b16 %v208, %v204
    %v249 = vpack.c.b16 %v213, %v209
    %v250 = vpack.c.b16 %v214, %v210
    %v251 = vpack.c.b16 %v215, %v211
    %v252 = vpack.c.b16 %v216, %v212
    %v253 = vpack.c.b16 %v221, %v217
    %v254 = vpack.c.b16 %v222, %v218
    %v255 = vpack.c.b16 %v223, %v219
    %v256 = vpack.c.b16 %v224, %v220
    %289 = vmatpush.bf16.msra.mxu0 %v253
    %290 = vmatpush.bf16.msra.mxu0 %v249
    %291 = vmatpush.bf16.msra.mxu0 %v245
    %292 = vmatpush.bf16.msra.mxu0 %v241
    %293 = vmatpush.bf16.msra.mxu0 %v237
    %294 = vmatpush.bf16.msra.mxu0 %v233
    %295 = vmatpush.bf16.msra.mxu0 %v229
    %296 = vmatpush.bf16.msra.mxu0 %v225
    %297 = vmatmul.bf16.gmra.mxu0 %v96
    %v298 = vpop.f32.mrf.mxu0
    %v299 = vadd.f32 0.0, %v298
    %v300 = vpop.f32.mrf.mxu0
    %301 = vdwg.mxu0
    %302 = vmatpush.bf16.msra.mxu0 %v254
    %303 = vmatpush.bf16.msra.mxu0 %v250
    %304 = vmatpush.bf16.msra.mxu0 %v246
    %305 = vmatpush.bf16.msra.mxu0 %v242
    %306 = vmatpush.bf16.msra.mxu0 %v238
    %307 = vmatpush.bf16.msra.mxu0 %v234
    %308 = vmatpush.bf16.msra.mxu0 %v230
    %309 = vmatpush.bf16.msra.mxu0 %v226
    %310 = vmatmul.bf16.gmra.mxu0 %v96
    %v311 = vpop.f32.mrf.mxu0
    %v312 = vadd.f32 0.0, %v311
    %v313 = vpop.f32.mrf.mxu0
    %314 = vdwg.mxu0
    %315 = vmatpush.bf16.msra.mxu0 %v255
    %316 = vmatpush.bf16.msra.mxu0 %v251
    %317 = vmatpush.bf16.msra.mxu0 %v247
    %318 = vmatpush.bf16.msra.mxu0 %v243
    %319 = vmatpush.bf16.msra.mxu0 %v239
    %320 = vmatpush.bf16.msra.mxu0 %v235
    %321 = vmatpush.bf16.msra.mxu0 %v231
    %322 = vmatpush.bf16.msra.mxu0 %v227
    %323 = vmatmul.bf16.gmra.mxu0 %v96
    %v324 = vpop.f32.mrf.mxu0
    %v325 = vadd.f32 0.0, %v324
    %v326 = vpop.f32.mrf.mxu0
    %327 = vdwg.mxu0
    %328 = vmatpush.bf16.msra.mxu0 %v256
    %329 = vmatpush.bf16.msra.mxu0 %v252
    %330 = vmatpush.bf16.msra.mxu0 %v248
    %331 = vmatpush.bf16.msra.mxu0 %v244
    %332 = vmatpush.bf16.msra.mxu0 %v240
    %333 = vmatpush.bf16.msra.mxu0 %v236
    %334 = vmatpush.bf16.msra.mxu0 %v232
    %335 = vmatpush.bf16.msra.mxu0 %v228
    %336 = vmatmul.bf16.gmra.mxu0 %v96
    %v337 = vpop.f32.mrf.mxu0
    %v338 = vadd.f32 0.0, %v337
    %v339 = vpop.f32.mrf.mxu0
    %340 = vdwg.mxu0
    %v341 = vadd.f32 %v92, %v299
    %v342 = vadd.f32 %v93, %v312
    %v343 = vadd.f32 %v94, %v325
    %v344 = vadd.f32 %v95, %v338
    %v345 = vxor.u32 %v341, 2147483648
    %v346 = vmul.f32 %v345, 1.442695
    %v347 = vpow.pop %v346
    %v348 = vadd.f32 %v347, 1.0
    %v349 = vrcp.pop %v348
    %v350 = vmul.f32 %v348, %v349
    %v351 = vsub.f32 1.0, %v350
    %v352 = vmul.f32 %v349, %v351
    %v353 = vadd.f32 %v349, %v352
    %vm354 = vweird.f32 %v348
    %vm355 = vweird.f32 %v349
    %vm356 = vmor %vm354, %vm355
    %v357 = vsel %vm356, %v349, %v353
    %v358 = vand.u32 2147483647, %v348
    %vm359 = vcmp.eq.f32.partialorder %v358, 8.507059e+37
    %v360 = vand.u32 %v348, 2147483648
    %v361 = vor.u32 1.1754944e-38, %v360
    %v362 = vsel %vm359, %v361, %v357
    %v363 = vmul.f32 1.0, %v362
    %v364 = vxor.u32 %v342, 2147483648
    %v365 = vmul.f32 %v364, 1.442695
    %v366 = vpow.pop %v365
    %v367 = vadd.f32 %v366, 1.0
    %v368 = vrcp.pop %v367
    %v369 = vmul.f32 %v367, %v368
    %v370 = vsub.f32 1.0, %v369
    %v371 = vmul.f32 %v368, %v370
    %v372 = vadd.f32 %v368, %v371
    %vm373 = vweird.f32 %v367
    %vm374 = vweird.f32 %v368
    %vm375 = vmor %vm373, %vm374
    %v376 = vsel %vm375, %v368, %v372
    %v377 = vand.u32 2147483647, %v367
    %vm378 = vcmp.eq.f32.partialorder %v377, 8.507059e+37
    %v379 = vand.u32 %v367, 2147483648
    %v380 = vor.u32 1.1754944e-38, %v379
    %v381 = vsel %vm378, %v380, %v376
    %v382 = vmul.f32 1.0, %v381
    %v383 = vtanh.pop %v343
    %v384 = vxor.u32 %v344, 2147483648
    %v385 = vmul.f32 %v384, 1.442695
    %v386 = vpow.pop %v385
    %v387 = vadd.f32 %v386, 1.0
    %v388 = vrcp.pop %v387
    %v389 = vmul.f32 %v387, %v388
    %v390 = vsub.f32 1.0, %v389
    %v391 = vmul.f32 %v388, %v390
    %v392 = vadd.f32 %v388, %v391
    %vm393 = vweird.f32 %v387
    %vm394 = vweird.f32 %v388
    %vm395 = vmor %vm393, %vm394
    %v396 = vsel %vm395, %v388, %v392
    %v397 = vand.u32 2147483647, %v387
    %vm398 = vcmp.eq.f32.partialorder %v397, 8.507059e+37
    %v399 = vand.u32 %v387, 2147483648
    %v400 = vor.u32 1.1754944e-38, %v399
    %v401 = vsel %vm398, %v400, %v396
    %v402 = vmul.f32 1.0, %v401
    %v403 = vmul.f32 %v382, %v89
    %v404 = vmul.f32 %v363, %v383
    %v405 = vadd.f32 %v403, %v404
    %v406 = vtanh.pop %v405
    %v407 = vmul.f32 %v402, %v406
    %s408 = scalar_lea.vmem [#allocation8], 224
    %v409 = vld [vmem:[%s408] sm:$0xff]
    %v410 = vld [vmem:[%s408 + $0x8] sm:$0xff]
    %v411 = vld [vmem:[%s408 + $0x10] sm:$0xff]
    %v412 = vld [vmem:[%s408 + $0x18] sm:$0xff]
    %v413 = vpack.c.bf16 %v90, %v90
    %v414 = vld [vmem:[#allocation12] sm:$0xff]
    %v415 = vld [vmem:[#allocation12 + $0x8] sm:$0xff]
    %v416 = vld [vmem:[#allocation12 + $0x10] sm:$0xff]
    %v417 = vld [vmem:[#allocation12 + $0x18] sm:$0xff]
    %v418 = vld [vmem:[#allocation12 + $0x20] sm:$0xff]
    %v419 = vld [vmem:[#allocation12 + $0x28] sm:$0xff]
    %v420 = vld [vmem:[#allocation12 + $0x30] sm:$0xff]
    %v421 = vld [vmem:[#allocation12 + $0x38] sm:$0xff]
    %v422 = vld [vmem:[#allocation12 + $0x40] sm:$0xff]
    %v423 = vld [vmem:[#allocation12 + $0x48] sm:$0xff]
    %v424 = vld [vmem:[#allocation12 + $0x50] sm:$0xff]
    %v425 = vld [vmem:[#allocation12 + $0x58] sm:$0xff]
    %v426 = vld [vmem:[#allocation12 + $0x60] sm:$0xff]
    %v427 = vld [vmem:[#allocation12 + $0x68] sm:$0xff]
    %v428 = vld [vmem:[#allocation12 + $0x70] sm:$0xff]
    %v429 = vld [vmem:[#allocation12 + $0x78] sm:$0xff]
    %v430 = vld [vmem:[#allocation12 + $0x80] sm:$0xff]
    %v431 = vld [vmem:[#allocation12 + $0x88] sm:$0xff]
    %v432 = vld [vmem:[#allocation12 + $0x90] sm:$0xff]
    %v433 = vld [vmem:[#allocation12 + $0x98] sm:$0xff]
    %v434 = vld [vmem:[#allocation12 + $0xa0] sm:$0xff]
    %v435 = vld [vmem:[#allocation12 + $0xa8] sm:$0xff]
    %v436 = vld [vmem:[#allocation12 + $0xb0] sm:$0xff]
    %v437 = vld [vmem:[#allocation12 + $0xb8] sm:$0xff]
    %v438 = vld [vmem:[#allocation12 + $0xc0] sm:$0xff]
    %v439 = vld [vmem:[#allocation12 + $0xc8] sm:$0xff]
    %v440 = vld [vmem:[#allocation12 + $0xd0] sm:$0xff]
    %v441 = vld [vmem:[#allocation12 + $0xd8] sm:$0xff]
    %v442 = vld [vmem:[#allocation12 + $0xe0] sm:$0xff]
    %v443 = vld [vmem:[#allocation12 + $0xe8] sm:$0xff]
    %v444 = vld [vmem:[#allocation12 + $0xf0] sm:$0xff]
    %v445 = vld [vmem:[#allocation12 + $0xf8] sm:$0xff]
    %v478 = vunpack.c.l.b16 %v414
    %v479 = vunpack.c.h.b16 %v414
    %v480 = vunpack.c.l.b16 %v415
    %v481 = vunpack.c.h.b16 %v415
    %v482 = vunpack.c.l.b16 %v416
    %v483 = vunpack.c.h.b16 %v416
    %v484 = vunpack.c.l.b16 %v417
    %v485 = vunpack.c.h.b16 %v417
    %v486 = vunpack.c.l.b16 %v418
    %v487 = vunpack.c.h.b16 %v418
    %v488 = vunpack.c.l.b16 %v419
    %v489 = vunpack.c.h.b16 %v419
    %v490 = vunpack.c.l.b16 %v420
    %v491 = vunpack.c.h.b16 %v420
    %v492 = vunpack.c.l.b16 %v421
    %v493 = vunpack.c.h.b16 %v421
    %v494 = vunpack.c.l.b16 %v422
    %v495 = vunpack.c.h.b16 %v422
    %v496 = vunpack.c.l.b16 %v423
    %v497 = vunpack.c.h.b16 %v423
    %v498 = vunpack.c.l.b16 %v424
    %v499 = vunpack.c.h.b16 %v424
    %v500 = vunpack.c.l.b16 %v425
    %v501 = vunpack.c.h.b16 %v425
    %v502 = vunpack.c.l.b16 %v426
    %v503 = vunpack.c.h.b16 %v426
    %v504 = vunpack.c.l.b16 %v427
    %v505 = vunpack.c.h.b16 %v427
    %v506 = vunpack.c.l.b16 %v428
    %v507 = vunpack.c.h.b16 %v428
    %v508 = vunpack.c.l.b16 %v429
    %v509 = vunpack.c.h.b16 %v429
    %v510 = vunpack.c.l.b16 %v430
    %v511 = vunpack.c.h.b16 %v430
    %v512 = vunpack.c.l.b16 %v431
    %v513 = vunpack.c.h.b16 %v431
    %v514 = vunpack.c.l.b16 %v432
    %v515 = vunpack.c.h.b16 %v432
    %v516 = vunpack.c.l.b16 %v433
    %v517 = vunpack.c.h.b16 %v433
    %v518 = vunpack.c.l.b16 %v434
    %v519 = vunpack.c.h.b16 %v434
    %v520 = vunpack.c.l.b16 %v435
    %v521 = vunpack.c.h.b16 %v435
    %v522 = vunpack.c.l.b16 %v436
    %v523 = vunpack.c.h.b16 %v436
    %v524 = vunpack.c.l.b16 %v437
    %v525 = vunpack.c.h.b16 %v437
    %v526 = vunpack.c.l.b16 %v438
    %v527 = vunpack.c.h.b16 %v438
    %v528 = vunpack.c.l.b16 %v439
    %v529 = vunpack.c.h.b16 %v439
    %v530 = vunpack.c.l.b16 %v440
    %v531 = vunpack.c.h.b16 %v440
    %v532 = vunpack.c.l.b16 %v441
    %v533 = vunpack.c.h.b16 %v441
    %v534 = vunpack.c.l.b16 %v442
    %v535 = vunpack.c.h.b16 %v442
    %v536 = vunpack.c.l.b16 %v443
    %v537 = vunpack.c.h.b16 %v443
    %v538 = vunpack.c.l.b16 %v444
    %v539 = vunpack.c.h.b16 %v444
    %v540 = vunpack.c.l.b16 %v445
    %v541 = vunpack.c.h.b16 %v445
    %v542 = vpack.c.b16 %v482, %v478
    %v543 = vpack.c.b16 %v483, %v479
    %v544 = vpack.c.b16 %v484, %v480
    %v545 = vpack.c.b16 %v485, %v481
    %v546 = vpack.c.b16 %v490, %v486
    %v547 = vpack.c.b16 %v491, %v487
    %v548 = vpack.c.b16 %v492, %v488
    %v549 = vpack.c.b16 %v493, %v489
    %v550 = vpack.c.b16 %v498, %v494
    %v551 = vpack.c.b16 %v499, %v495
    %v552 = vpack.c.b16 %v500, %v496
    %v553 = vpack.c.b16 %v501, %v497
    %v554 = vpack.c.b16 %v506, %v502
    %v555 = vpack.c.b16 %v507, %v503
    %v556 = vpack.c.b16 %v508, %v504
    %v557 = vpack.c.b16 %v509, %v505
    %v558 = vpack.c.b16 %v514, %v510
    %v559 = vpack.c.b16 %v515, %v511
    %v560 = vpack.c.b16 %v516, %v512
    %v561 = vpack.c.b16 %v517, %v513
    %v562 = vpack.c.b16 %v522, %v518
    %v563 = vpack.c.b16 %v523, %v519
    %v564 = vpack.c.b16 %v524, %v520
    %v565 = vpack.c.b16 %v525, %v521
    %v566 = vpack.c.b16 %v530, %v526
    %v567 = vpack.c.b16 %v531, %v527
    %v568 = vpack.c.b16 %v532, %v528
    %v569 = vpack.c.b16 %v533, %v529
    %v570 = vpack.c.b16 %v538, %v534
    %v571 = vpack.c.b16 %v539, %v535
    %v572 = vpack.c.b16 %v540, %v536
    %v573 = vpack.c.b16 %v541, %v537
    %606 = vmatpush.bf16.msra.mxu0 %v570
    %607 = vmatpush.bf16.msra.mxu0 %v566
    %608 = vmatpush.bf16.msra.mxu0 %v562
    %609 = vmatpush.bf16.msra.mxu0 %v558
    %610 = vmatpush.bf16.msra.mxu0 %v554
    %611 = vmatpush.bf16.msra.mxu0 %v550
    %612 = vmatpush.bf16.msra.mxu0 %v546
    %613 = vmatpush.bf16.msra.mxu0 %v542
    %614 = vmatmul.bf16.gmra.mxu0 %v413
    %v615 = vpop.f32.mrf.mxu0
    %v616 = vadd.f32 0.0, %v615
    %v617 = vpop.f32.mrf.mxu0
    %618 = vdwg.mxu0
    %619 = vmatpush.bf16.msra.mxu0 %v571
    %620 = vmatpush.bf16.msra.mxu0 %v567
    %621 = vmatpush.bf16.msra.mxu0 %v563
    %622 = vmatpush.bf16.msra.mxu0 %v559
    %623 = vmatpush.bf16.msra.mxu0 %v555
    %624 = vmatpush.bf16.msra.mxu0 %v551
    %625 = vmatpush.bf16.msra.mxu0 %v547
    %626 = vmatpush.bf16.msra.mxu0 %v543
    %627 = vmatmul.bf16.gmra.mxu0 %v413
    %v628 = vpop.f32.mrf.mxu0
    %v629 = vadd.f32 0.0, %v628
    %v630 = vpop.f32.mrf.mxu0
    %631 = vdwg.mxu0
    %632 = vmatpush.bf16.msra.mxu0 %v572
    %633 = vmatpush.bf16.msra.mxu0 %v568
    %634 = vmatpush.bf16.msra.mxu0 %v564
    %635 = vmatpush.bf16.msra.mxu0 %v560
    %636 = vmatpush.bf16.msra.mxu0 %v556
    %637 = vmatpush.bf16.msra.mxu0 %v552
    %638 = vmatpush.bf16.msra.mxu0 %v548
    %639 = vmatpush.bf16.msra.mxu0 %v544
    %640 = vmatmul.bf16.gmra.mxu0 %v413
    %v641 = vpop.f32.mrf.mxu0
    %v642 = vadd.f32 0.0, %v641
    %v643 = vpop.f32.mrf.mxu0
    %644 = vdwg.mxu0
    %645 = vmatpush.bf16.msra.mxu0 %v573
    %646 = vmatpush.bf16.msra.mxu0 %v569
    %647 = vmatpush.bf16.msra.mxu0 %v565
    %648 = vmatpush.bf16.msra.mxu0 %v561
    %649 = vmatpush.bf16.msra.mxu0 %v557
    %650 = vmatpush.bf16.msra.mxu0 %v553
    %651 = vmatpush.bf16.msra.mxu0 %v549
    %652 = vmatpush.bf16.msra.mxu0 %v545
    %653 = vmatmul.bf16.gmra.mxu0 %v413
    %v654 = vpop.f32.mrf.mxu0
    %v655 = vadd.f32 0.0, %v654
    %v656 = vpop.f32.mrf.mxu0
    %657 = vdwg.mxu0
    %v658 = vadd.f32 %v409, %v616
    %v659 = vadd.f32 %v410, %v629
    %v660 = vadd.f32 %v411, %v642
    %v661 = vadd.f32 %v412, %v655
    %v662 = vxor.u32 %v658, 2147483648
    %v663 = vmul.f32 %v662, 1.442695
    %v664 = vpow.pop %v663
    %v665 = vadd.f32 %v664, 1.0
    %v666 = vrcp.pop %v665
    %v667 = vmul.f32 %v665, %v666
    %v668 = vsub.f32 1.0, %v667
    %v669 = vmul.f32 %v666, %v668
    %v670 = vadd.f32 %v666, %v669
    %vm671 = vweird.f32 %v665
    %vm672 = vweird.f32 %v666
    %vm673 = vmor %vm671, %vm672
    %v674 = vsel %vm673, %v666, %v670
    %v675 = vand.u32 2147483647, %v665
    %vm676 = vcmp.eq.f32.partialorder %v675, 8.507059e+37
    %v677 = vand.u32 %v665, 2147483648
    %v678 = vor.u32 1.1754944e-38, %v677
    %v679 = vsel %vm676, %v678, %v674
    %v680 = vmul.f32 1.0, %v679
    %v681 = vxor.u32 %v659, 2147483648
    %v682 = vmul.f32 %v681, 1.442695
    %v683 = vpow.pop %v682
    %v684 = vadd.f32 %v683, 1.0
    %v685 = vrcp.pop %v684
    %v686 = vmul.f32 %v684, %v685
    %v687 = vsub.f32 1.0, %v686
    %v688 = vmul.f32 %v685, %v687
    %v689 = vadd.f32 %v685, %v688
    %vm690 = vweird.f32 %v684
    %vm691 = vweird.f32 %v685
    %vm692 = vmor %vm690, %vm691
    %v693 = vsel %vm692, %v685, %v689
    %v694 = vand.u32 2147483647, %v684
    %vm695 = vcmp.eq.f32.partialorder %v694, 8.507059e+37
    %v696 = vand.u32 %v684, 2147483648
    %v697 = vor.u32 1.1754944e-38, %v696
    %v698 = vsel %vm695, %v697, %v693
    %v699 = vmul.f32 1.0, %v698
    %v700 = vtanh.pop %v660
    %v701 = vxor.u32 %v661, 2147483648
    %v702 = vmul.f32 %v701, 1.442695
    %v703 = vpow.pop %v702
    %v704 = vadd.f32 %v703, 1.0
    %v705 = vrcp.pop %v704
    %v706 = vmul.f32 %v704, %v705
    %v707 = vsub.f32 1.0, %v706
    %v708 = vmul.f32 %v705, %v707
    %v709 = vadd.f32 %v705, %v708
    %vm710 = vweird.f32 %v704
    %vm711 = vweird.f32 %v705
    %vm712 = vmor %vm710, %vm711
    %v713 = vsel %vm712, %v705, %v709
    %v714 = vand.u32 2147483647, %v704
    %vm715 = vcmp.eq.f32.partialorder %v714, 8.507059e+37
    %v716 = vand.u32 %v704, 2147483648
    %v717 = vor.u32 1.1754944e-38, %v716
    %v718 = vsel %vm715, %v717, %v713
    %v719 = vmul.f32 1.0, %v718
    %v720 = vmul.f32 %v699, %v91
    %v721 = vmul.f32 %v680, %v700
    %v722 = vadd.f32 %v720, %v721
    %v723 = vtanh.pop %v722
    %v724 = vmul.f32 %v719, %v723
    %s725 = smul.u32 0, 64
    %s726 = sadd.s32 %s87, 7
    %s727 = smul.u32 %s726, 8
    %s728 = scalar_lea.vmem [#allocation2], %s725
    %729 = vst [vmem:[%s728] sm:$0xff] %v407
    %s730 = scalar_lea.vmem [#allocation3], %s727
    %731 = vst [vmem:[%s730] sm:$0xff] %v724
    %s732 = scalar_lea.vmem %s0, 32
    %v733 = vld [vmem:[%s732] sm:$0xff]
    %v734 = vld [vmem:[%s732 + $0x8] sm:$0xff]
    %v735 = vld [vmem:[%s732 + $0x10] sm:$0xff]
    %v736 = vld [vmem:[%s732 + $0x18] sm:$0xff]
    %v737 = vpack.c.bf16 %v407, %v407
    %v738 = vld [vmem:[#allocation10] sm:$0xff]
    %v739 = vld [vmem:[#allocation10 + $0x8] sm:$0xff]
    %v740 = vld [vmem:[#allocation10 + $0x10] sm:$0xff]
    %v741 = vld [vmem:[#allocation10 + $0x18] sm:$0xff]
    %v742 = vld [vmem:[#allocation10 + $0x20] sm:$0xff]
    %v743 = vld [vmem:[#allocation10 + $0x28] sm:$0xff]
    %v744 = vld [vmem:[#allocation10 + $0x30] sm:$0xff]
    %v745 = vld [vmem:[#allocation10 + $0x38] sm:$0xff]
    %v746 = vld [vmem:[#allocation10 + $0x40] sm:$0xff]
    %v747 = vld [vmem:[#allocation10 + $0x48] sm:$0xff]
    %v748 = vld [vmem:[#allocation10 + $0x50] sm:$0xff]
    %v749 = vld [vmem:[#allocation10 + $0x58] sm:$0xff]
    %v750 = vld [vmem:[#allocation10 + $0x60] sm:$0xff]
    %v751 = vld [vmem:[#allocation10 + $0x68] sm:$0xff]
    %v752 = vld [vmem:[#allocation10 + $0x70] sm:$0xff]
    %v753 = vld [vmem:[#allocation10 + $0x78] sm:$0xff]
    %v754 = vld [vmem:[#allocation10 + $0x80] sm:$0xff]
    %v755 = vld [vmem:[#allocation10 + $0x88] sm:$0xff]
    %v756 = vld [vmem:[#allocation10 + $0x90] sm:$0xff]
    %v757 = vld [vmem:[#allocation10 + $0x98] sm:$0xff]
    %v758 = vld [vmem:[#allocation10 + $0xa0] sm:$0xff]
    %v759 = vld [vmem:[#allocation10 + $0xa8] sm:$0xff]
    %v760 = vld [vmem:[#allocation10 + $0xb0] sm:$0xff]
    %v761 = vld [vmem:[#allocation10 + $0xb8] sm:$0xff]
    %v762 = vld [vmem:[#allocation10 + $0xc0] sm:$0xff]
    %v763 = vld [vmem:[#allocation10 + $0xc8] sm:$0xff]
    %v764 = vld [vmem:[#allocation10 + $0xd0] sm:$0xff]
    %v765 = vld [vmem:[#allocation10 + $0xd8] sm:$0xff]
    %v766 = vld [vmem:[#allocation10 + $0xe0] sm:$0xff]
    %v767 = vld [vmem:[#allocation10 + $0xe8] sm:$0xff]
    %v768 = vld [vmem:[#allocation10 + $0xf0] sm:$0xff]
    %v769 = vld [vmem:[#allocation10 + $0xf8] sm:$0xff]
    %v802 = vunpack.c.l.b16 %v738
    %v803 = vunpack.c.h.b16 %v738
    %v804 = vunpack.c.l.b16 %v739
    %v805 = vunpack.c.h.b16 %v739
    %v806 = vunpack.c.l.b16 %v740
    %v807 = vunpack.c.h.b16 %v740
    %v808 = vunpack.c.l.b16 %v741
    %v809 = vunpack.c.h.b16 %v741
    %v810 = vunpack.c.l.b16 %v742
    %v811 = vunpack.c.h.b16 %v742
    %v812 = vunpack.c.l.b16 %v743
    %v813 = vunpack.c.h.b16 %v743
    %v814 = vunpack.c.l.b16 %v744
    %v815 = vunpack.c.h.b16 %v744
    %v816 = vunpack.c.l.b16 %v745
    %v817 = vunpack.c.h.b16 %v745
    %v818 = vunpack.c.l.b16 %v746
    %v819 = vunpack.c.h.b16 %v746
    %v820 = vunpack.c.l.b16 %v747
    %v821 = vunpack.c.h.b16 %v747
    %v822 = vunpack.c.l.b16 %v748
    %v823 = vunpack.c.h.b16 %v748
    %v824 = vunpack.c.l.b16 %v749
    %v825 = vunpack.c.h.b16 %v749
    %v826 = vunpack.c.l.b16 %v750
    %v827 = vunpack.c.h.b16 %v750
    %v828 = vunpack.c.l.b16 %v751
    %v829 = vunpack.c.h.b16 %v751
    %v830 = vunpack.c.l.b16 %v752
    %v831 = vunpack.c.h.b16 %v752
    %v832 = vunpack.c.l.b16 %v753
    %v833 = vunpack.c.h.b16 %v753
    %v834 = vunpack.c.l.b16 %v754
    %v835 = vunpack.c.h.b16 %v754
    %v836 = vunpack.c.l.b16 %v755
    %v837 = vunpack.c.h.b16 %v755
    %v838 = vunpack.c.l.b16 %v756
    %v839 = vunpack.c.h.b16 %v756
    %v840 = vunpack.c.l.b16 %v757
    %v841 = vunpack.c.h.b16 %v757
    %v842 = vunpack.c.l.b16 %v758
    %v843 = vunpack.c.h.b16 %v758
    %v844 = vunpack.c.l.b16 %v759
    %v845 = vunpack.c.h.b16 %v759
    %v846 = vunpack.c.l.b16 %v760
    %v847 = vunpack.c.h.b16 %v760
    %v848 = vunpack.c.l.b16 %v761
    %v849 = vunpack.c.h.b16 %v761
    %v850 = vunpack.c.l.b16 %v762
    %v851 = vunpack.c.h.b16 %v762
    %v852 = vunpack.c.l.b16 %v763
    %v853 = vunpack.c.h.b16 %v763
    %v854 = vunpack.c.l.b16 %v764
    %v855 = vunpack.c.h.b16 %v764
    %v856 = vunpack.c.l.b16 %v765
    %v857 = vunpack.c.h.b16 %v765
    %v858 = vunpack.c.l.b16 %v766
    %v859 = vunpack.c.h.b16 %v766
    %v860 = vunpack.c.l.b16 %v767
    %v861 = vunpack.c.h.b16 %v767
    %v862 = vunpack.c.l.b16 %v768
    %v863 = vunpack.c.h.b16 %v768
    %v864 = vunpack.c.l.b16 %v769
    %v865 = vunpack.c.h.b16 %v769
    %v866 = vpack.c.b16 %v806, %v802
    %v867 = vpack.c.b16 %v807, %v803
    %v868 = vpack.c.b16 %v808, %v804
    %v869 = vpack.c.b16 %v809, %v805
    %v870 = vpack.c.b16 %v814, %v810
    %v871 = vpack.c.b16 %v815, %v811
    %v872 = vpack.c.b16 %v816, %v812
    %v873 = vpack.c.b16 %v817, %v813
    %v874 = vpack.c.b16 %v822, %v818
    %v875 = vpack.c.b16 %v823, %v819
    %v876 = vpack.c.b16 %v824, %v820
    %v877 = vpack.c.b16 %v825, %v821
    %v878 = vpack.c.b16 %v830, %v826
    %v879 = vpack.c.b16 %v831, %v827
    %v880 = vpack.c.b16 %v832, %v828
    %v881 = vpack.c.b16 %v833, %v829
    %v882 = vpack.c.b16 %v838, %v834
    %v883 = vpack.c.b16 %v839, %v835
    %v884 = vpack.c.b16 %v840, %v836
    %v885 = vpack.c.b16 %v841, %v837
    %v886 = vpack.c.b16 %v846, %v842
    %v887 = vpack.c.b16 %v847, %v843
    %v888 = vpack.c.b16 %v848, %v844
    %v889 = vpack.c.b16 %v849, %v845
    %v890 = vpack.c.b16 %v854, %v850
    %v891 = vpack.c.b16 %v855, %v851
    %v892 = vpack.c.b16 %v856, %v852
    %v893 = vpack.c.b16 %v857, %v853
    %v894 = vpack.c.b16 %v862, %v858
    %v895 = vpack.c.b16 %v863, %v859
    %v896 = vpack.c.b16 %v864, %v860
    %v897 = vpack.c.b16 %v865, %v861
    %930 = vmatpush.bf16.msra.mxu0 %v894
    %931 = vmatpush.bf16.msra.mxu0 %v890
    %932 = vmatpush.bf16.msra.mxu0 %v886
    %933 = vmatpush.bf16.msra.mxu0 %v882
    %934 = vmatpush.bf16.msra.mxu0 %v878
    %935 = vmatpush.bf16.msra.mxu0 %v874
    %936 = vmatpush.bf16.msra.mxu0 %v870
    %937 = vmatpush.bf16.msra.mxu0 %v866
    %938 = vmatmul.bf16.gmra.mxu0 %v737
    %v939 = vpop.f32.mrf.mxu0
    %v940 = vadd.f32 0.0, %v939
    %v941 = vpop.f32.mrf.mxu0
    %942 = vdwg.mxu0
    %943 = vmatpush.bf16.msra.mxu0 %v895
    %944 = vmatpush.bf16.msra.mxu0 %v891
    %945 = vmatpush.bf16.msra.mxu0 %v887
    %946 = vmatpush.bf16.msra.mxu0 %v883
    %947 = vmatpush.bf16.msra.mxu0 %v879
    %948 = vmatpush.bf16.msra.mxu0 %v875
    %949 = vmatpush.bf16.msra.mxu0 %v871
    %950 = vmatpush.bf16.msra.mxu0 %v867
    %951 = vmatmul.bf16.gmra.mxu0 %v737
    %v952 = vpop.f32.mrf.mxu0
    %v953 = vadd.f32 0.0, %v952
    %v954 = vpop.f32.mrf.mxu0
    %955 = vdwg.mxu0
    %956 = vmatpush.bf16.msra.mxu0 %v896
    %957 = vmatpush.bf16.msra.mxu0 %v892
    %958 = vmatpush.bf16.msra.mxu0 %v888
    %959 = vmatpush.bf16.msra.mxu0 %v884
    %960 = vmatpush.bf16.msra.mxu0 %v880
    %961 = vmatpush.bf16.msra.mxu0 %v876
    %962 = vmatpush.bf16.msra.mxu0 %v872
    %963 = vmatpush.bf16.msra.mxu0 %v868
    %964 = vmatmul.bf16.gmra.mxu0 %v737
    %v965 = vpop.f32.mrf.mxu0
    %v966 = vadd.f32 0.0, %v965
    %v967 = vpop.f32.mrf.mxu0
    %968 = vdwg.mxu0
    %969 = vmatpush.bf16.msra.mxu0 %v897
    %970 = vmatpush.bf16.msra.mxu0 %v893
    %971 = vmatpush.bf16.msra.mxu0 %v889
    %972 = vmatpush.bf16.msra.mxu0 %v885
    %973 = vmatpush.bf16.msra.mxu0 %v881
    %974 = vmatpush.bf16.msra.mxu0 %v877
    %975 = vmatpush.bf16.msra.mxu0 %v873
    %976 = vmatpush.bf16.msra.mxu0 %v869
    %977 = vmatmul.bf16.gmra.mxu0 %v737
    %v978 = vpop.f32.mrf.mxu0
    %v979 = vadd.f32 0.0, %v978
    %v980 = vpop.f32.mrf.mxu0
    %981 = vdwg.mxu0
    %v982 = vadd.f32 %v733, %v940
    %v983 = vadd.f32 %v734, %v953
    %v984 = vadd.f32 %v735, %v966
    %v985 = vadd.f32 %v736, %v979
    %v986 = vxor.u32 %v982, 2147483648
    %v987 = vmul.f32 %v986, 1.442695
    %v988 = vpow.pop %v987
    %v989 = vadd.f32 %v988, 1.0
    %v990 = vrcp.pop %v989
    %v991 = vmul.f32 %v989, %v990
    %v992 = vsub.f32 1.0, %v991
    %v993 = vmul.f32 %v990, %v992
    %v994 = vadd.f32 %v990, %v993
    %vm995 = vweird.f32 %v989
    %vm996 = vweird.f32 %v990
    %vm997 = vmor %vm995, %vm996
    %v998 = vsel %vm997, %v990, %v994
    %v999 = vand.u32 2147483647, %v989
    %vm1000 = vcmp.eq.f32.partialorder %v999, 8.507059e+37
    %v1001 = vand.u32 %v989, 2147483648
    %v1002 = vor.u32 1.1754944e-38, %v1001
    %v1003 = vsel %vm1000, %v1002, %v998
    %v1004 = vmul.f32 1.0, %v1003
    %v1005 = vxor.u32 %v983, 2147483648
    %v1006 = vmul.f32 %v1005, 1.442695
    %v1007 = vpow.pop %v1006
    %v1008 = vadd.f32 %v1007, 1.0
    %v1009 = vrcp.pop %v1008
    %v1010 = vmul.f32 %v1008, %v1009
    %v1011 = vsub.f32 1.0, %v1010
    %v1012 = vmul.f32 %v1009, %v1011
    %v1013 = vadd.f32 %v1009, %v1012
    %vm1014 = vweird.f32 %v1008
    %vm1015 = vweird.f32 %v1009
    %vm1016 = vmor %vm1014, %vm1015
    %v1017 = vsel %vm1016, %v1009, %v1013
    %v1018 = vand.u32 2147483647, %v1008
    %vm1019 = vcmp.eq.f32.partialorder %v1018, 8.507059e+37
    %v1020 = vand.u32 %v1008, 2147483648
    %v1021 = vor.u32 1.1754944e-38, %v1020
    %v1022 = vsel %vm1019, %v1021, %v1017
    %v1023 = vmul.f32 1.0, %v1022
    %v1024 = vtanh.pop %v984
    %v1025 = vxor.u32 %v985, 2147483648
    %v1026 = vmul.f32 %v1025, 1.442695
    %v1027 = vpow.pop %v1026
    %v1028 = vadd.f32 %v1027, 1.0
    %v1029 = vrcp.pop %v1028
    %v1030 = vmul.f32 %v1028, %v1029
    %v1031 = vsub.f32 1.0, %v1030
    %v1032 = vmul.f32 %v1029, %v1031
    %v1033 = vadd.f32 %v1029, %v1032
    %vm1034 = vweird.f32 %v1028
    %vm1035 = vweird.f32 %v1029
    %vm1036 = vmor %vm1034, %vm1035
    %v1037 = vsel %vm1036, %v1029, %v1033
    %v1038 = vand.u32 2147483647, %v1028
    %vm1039 = vcmp.eq.f32.partialorder %v1038, 8.507059e+37
    %v1040 = vand.u32 %v1028, 2147483648
    %v1041 = vor.u32 1.1754944e-38, %v1040
    %v1042 = vsel %vm1039, %v1041, %v1037
    %v1043 = vmul.f32 1.0, %v1042
    %v1044 = vmul.f32 %v1023, %v405
    %v1045 = vmul.f32 %v1004, %v1024
    %v1046 = vadd.f32 %v1044, %v1045
    %v1047 = vtanh.pop %v1046
    %v1048 = vmul.f32 %v1043, %v1047
    %s1049 = scalar_lea.vmem [#allocation8], 192
    %v1050 = vld [vmem:[%s1049] sm:$0xff]
    %v1051 = vld [vmem:[%s1049 + $0x8] sm:$0xff]
    %v1052 = vld [vmem:[%s1049 + $0x10] sm:$0xff]
    %v1053 = vld [vmem:[%s1049 + $0x18] sm:$0xff]
    %v1054 = vpack.c.bf16 %v724, %v724
    %v1055 = vld [vmem:[#allocation12] sm:$0xff]
    %v1056 = vld [vmem:[#allocation12 + $0x8] sm:$0xff]
    %v1057 = vld [vmem:[#allocation12 + $0x10] sm:$0xff]
    %v1058 = vld [vmem:[#allocation12 + $0x18] sm:$0xff]
    %v1059 = vld [vmem:[#allocation12 + $0x20] sm:$0xff]
    %v1060 = vld [vmem:[#allocation12 + $0x28] sm:$0xff]
    %v1061 = vld [vmem:[#allocation12 + $0x30] sm:$0xff]
    %v1062 = vld [vmem:[#allocation12 + $0x38] sm:$0xff]
    %v1063 = vld [vmem:[#allocation12 + $0x40] sm:$0xff]
    %v1064 = vld [vmem:[#allocation12 + $0x48] sm:$0xff]
    %v1065 = vld [vmem:[#allocation12 + $0x50] sm:$0xff]
    %v1066 = vld [vmem:[#allocation12 + $0x58] sm:$0xff]
    %v1067 = vld [vmem:[#allocation12 + $0x60] sm:$0xff]
    %v1068 = vld [vmem:[#allocation12 + $0x68] sm:$0xff]
    %v1069 = vld [vmem:[#allocation12 + $0x70] sm:$0xff]
    %v1070 = vld [vmem:[#allocation12 + $0x78] sm:$0xff]
    %v1071 = vld [vmem:[#allocation12 + $0x80] sm:$0xff]
    %v1072 = vld [vmem:[#allocation12 + $0x88] sm:$0xff]
    %v1073 = vld [vmem:[#allocation12 + $0x90] sm:$0xff]
    %v1074 = vld [vmem:[#allocation12 + $0x98] sm:$0xff]
    %v1075 = vld [vmem:[#allocation12 + $0xa0] sm:$0xff]
    %v1076 = vld [vmem:[#allocation12 + $0xa8] sm:$0xff]
    %v1077 = vld [vmem:[#allocation12 + $0xb0] sm:$0xff]
    %v1078 = vld [vmem:[#allocation12 + $0xb8] sm:$0xff]
    %v1079 = vld [vmem:[#allocation12 + $0xc0] sm:$0xff]
    %v1080 = vld [vmem:[#allocation12 + $0xc8] sm:$0xff]
    %v1081 = vld [vmem:[#allocation12 + $0xd0] sm:$0xff]
    %v1082 = vld [vmem:[#allocation12 + $0xd8] sm:$0xff]
    %v1083 = vld [vmem:[#allocation12 + $0xe0] sm:$0xff]
    %v1084 = vld [vmem:[#allocation12 + $0xe8] sm:$0xff]
    %v1085 = vld [vmem:[#allocation12 + $0xf0] sm:$0xff]
    %v1086 = vld [vmem:[#allocation12 + $0xf8] sm:$0xff]
    %v1119 = vunpack.c.l.b16 %v1055
    %v1120 = vunpack.c.h.b16 %v1055
    %v1121 = vunpack.c.l.b16 %v1056
    %v1122 = vunpack.c.h.b16 %v1056
    %v1123 = vunpack.c.l.b16 %v1057
    %v1124 = vunpack.c.h.b16 %v1057
    %v1125 = vunpack.c.l.b16 %v1058
    %v1126 = vunpack.c.h.b16 %v1058
    %v1127 = vunpack.c.l.b16 %v1059
    %v1128 = vunpack.c.h.b16 %v1059
    %v1129 = vunpack.c.l.b16 %v1060
    %v1130 = vunpack.c.h.b16 %v1060
    %v1131 = vunpack.c.l.b16 %v1061
    %v1132 = vunpack.c.h.b16 %v1061
    %v1133 = vunpack.c.l.b16 %v1062
    %v1134 = vunpack.c.h.b16 %v1062
    %v1135 = vunpack.c.l.b16 %v1063
    %v1136 = vunpack.c.h.b16 %v1063
    %v1137 = vunpack.c.l.b16 %v1064
    %v1138 = vunpack.c.h.b16 %v1064
    %v1139 = vunpack.c.l.b16 %v1065
    %v1140 = vunpack.c.h.b16 %v1065
    %v1141 = vunpack.c.l.b16 %v1066
    %v1142 = vunpack.c.h.b16 %v1066
    %v1143 = vunpack.c.l.b16 %v1067
    %v1144 = vunpack.c.h.b16 %v1067
    %v1145 = vunpack.c.l.b16 %v1068
    %v1146 = vunpack.c.h.b16 %v1068
    %v1147 = vunpack.c.l.b16 %v1069
    %v1148 = vunpack.c.h.b16 %v1069
    %v1149 = vunpack.c.l.b16 %v1070
    %v1150 = vunpack.c.h.b16 %v1070
    %v1151 = vunpack.c.l.b16 %v1071
    %v1152 = vunpack.c.h.b16 %v1071
    %v1153 = vunpack.c.l.b16 %v1072
    %v1154 = vunpack.c.h.b16 %v1072
    %v1155 = vunpack.c.l.b16 %v1073
    %v1156 = vunpack.c.h.b16 %v1073
    %v1157 = vunpack.c.l.b16 %v1074
    %v1158 = vunpack.c.h.b16 %v1074
    %v1159 = vunpack.c.l.b16 %v1075
    %v1160 = vunpack.c.h.b16 %v1075
    %v1161 = vunpack.c.l.b16 %v1076
    %v1162 = vunpack.c.h.b16 %v1076
    %v1163 = vunpack.c.l.b16 %v1077
    %v1164 = vunpack.c.h.b16 %v1077
    %v1165 = vunpack.c.l.b16 %v1078
    %v1166 = vunpack.c.h.b16 %v1078
    %v1167 = vunpack.c.l.b16 %v1079
    %v1168 = vunpack.c.h.b16 %v1079
    %v1169 = vunpack.c.l.b16 %v1080
    %v1170 = vunpack.c.h.b16 %v1080
    %v1171 = vunpack.c.l.b16 %v1081
    %v1172 = vunpack.c.h.b16 %v1081
    %v1173 = vunpack.c.l.b16 %v1082
    %v1174 = vunpack.c.h.b16 %v1082
    %v1175 = vunpack.c.l.b16 %v1083
    %v1176 = vunpack.c.h.b16 %v1083
    %v1177 = vunpack.c.l.b16 %v1084
    %v1178 = vunpack.c.h.b16 %v1084
    %v1179 = vunpack.c.l.b16 %v1085
    %v1180 = vunpack.c.h.b16 %v1085
    %v1181 = vunpack.c.l.b16 %v1086
    %v1182 = vunpack.c.h.b16 %v1086
    %v1183 = vpack.c.b16 %v1123, %v1119
    %v1184 = vpack.c.b16 %v1124, %v1120
    %v1185 = vpack.c.b16 %v1125, %v1121
    %v1186 = vpack.c.b16 %v1126, %v1122
    %v1187 = vpack.c.b16 %v1131, %v1127
    %v1188 = vpack.c.b16 %v1132, %v1128
    %v1189 = vpack.c.b16 %v1133, %v1129
    %v1190 = vpack.c.b16 %v1134, %v1130
    %v1191 = vpack.c.b16 %v1139, %v1135
    %v1192 = vpack.c.b16 %v1140, %v1136
    %v1193 = vpack.c.b16 %v1141, %v1137
    %v1194 = vpack.c.b16 %v1142, %v1138
    %v1195 = vpack.c.b16 %v1147, %v1143
    %v1196 = vpack.c.b16 %v1148, %v1144
    %v1197 = vpack.c.b16 %v1149, %v1145
    %v1198 = vpack.c.b16 %v1150, %v1146
    %v1199 = vpack.c.b16 %v1155, %v1151
    %v1200 = vpack.c.b16 %v1156, %v1152
    %v1201 = vpack.c.b16 %v1157, %v1153
    %v1202 = vpack.c.b16 %v1158, %v1154
    %v1203 = vpack.c.b16 %v1163, %v1159
    %v1204 = vpack.c.b16 %v1164, %v1160
    %v1205 = vpack.c.b16 %v1165, %v1161
    %v1206 = vpack.c.b16 %v1166, %v1162
    %v1207 = vpack.c.b16 %v1171, %v1167
    %v1208 = vpack.c.b16 %v1172, %v1168
    %v1209 = vpack.c.b16 %v1173, %v1169
    %v1210 = vpack.c.b16 %v1174, %v1170
    %v1211 = vpack.c.b16 %v1179, %v1175
    %v1212 = vpack.c.b16 %v1180, %v1176
    %v1213 = vpack.c.b16 %v1181, %v1177
    %v1214 = vpack.c.b16 %v1182, %v1178
    %1247 = vmatpush.bf16.msra.mxu0 %v1211
    %1248 = vmatpush.bf16.msra.mxu0 %v1207
    %1249 = vmatpush.bf16.msra.mxu0 %v1203
    %1250 = vmatpush.bf16.msra.mxu0 %v1199
    %1251 = vmatpush.bf16.msra.mxu0 %v1195
    %1252 = vmatpush.bf16.msra.mxu0 %v1191
    %1253 = vmatpush.bf16.msra.mxu0 %v1187
    %1254 = vmatpush.bf16.msra.mxu0 %v1183
    %1255 = vmatmul.bf16.gmra.mxu0 %v1054
    %v1256 = vpop.f32.mrf.mxu0
    %v1257 = vadd.f32 0.0, %v1256
    %v1258 = vpop.f32.mrf.mxu0
    %1259 = vdwg.mxu0
    %1260 = vmatpush.bf16.msra.mxu0 %v1212
    %1261 = vmatpush.bf16.msra.mxu0 %v1208
    %1262 = vmatpush.bf16.msra.mxu0 %v1204
    %1263 = vmatpush.bf16.msra.mxu0 %v1200
    %1264 = vmatpush.bf16.msra.mxu0 %v1196
    %1265 = vmatpush.bf16.msra.mxu0 %v1192
    %1266 = vmatpush.bf16.msra.mxu0 %v1188
    %1267 = vmatpush.bf16.msra.mxu0 %v1184
    %1268 = vmatmul.bf16.gmra.mxu0 %v1054
    %v1269 = vpop.f32.mrf.mxu0
    %v1270 = vadd.f32 0.0, %v1269
    %v1271 = vpop.f32.mrf.mxu0
    %1272 = vdwg.mxu0
    %1273 = vmatpush.bf16.msra.mxu0 %v1213
    %1274 = vmatpush.bf16.msra.mxu0 %v1209
    %1275 = vmatpush.bf16.msra.mxu0 %v1205
    %1276 = vmatpush.bf16.msra.mxu0 %v1201
    %1277 = vmatpush.bf16.msra.mxu0 %v1197
    %1278 = vmatpush.bf16.msra.mxu0 %v1193
    %1279 = vmatpush.bf16.msra.mxu0 %v1189
    %1280 = vmatpush.bf16.msra.mxu0 %v1185
    %1281 = vmatmul.bf16.gmra.mxu0 %v1054
    %v1282 = vpop.f32.mrf.mxu0
    %v1283 = vadd.f32 0.0, %v1282
    %v1284 = vpop.f32.mrf.mxu0
    %1285 = vdwg.mxu0
    %1286 = vmatpush.bf16.msra.mxu0 %v1214
    %1287 = vmatpush.bf16.msra.mxu0 %v1210
    %1288 = vmatpush.bf16.msra.mxu0 %v1206
    %1289 = vmatpush.bf16.msra.mxu0 %v1202
    %1290 = vmatpush.bf16.msra.mxu0 %v1198
    %1291 = vmatpush.bf16.msra.mxu0 %v1194
    %1292 = vmatpush.bf16.msra.mxu0 %v1190
    %1293 = vmatpush.bf16.msra.mxu0 %v1186
    %1294 = vmatmul.bf16.gmra.mxu0 %v1054
    %v1295 = vpop.f32.mrf.mxu0
    %v1296 = vadd.f32 0.0, %v1295
    %v1297 = vpop.f32.mrf.mxu0
    %1298 = vdwg.mxu0
    %v1299 = vadd.f32 %v1050, %v1257
    %v1300 = vadd.f32 %v1051, %v1270
    %v1301 = vadd.f32 %v1052, %v1283
    %v1302 = vadd.f32 %v1053, %v1296
    %v1303 = vxor.u32 %v1299, 2147483648
    %v1304 = vmul.f32 %v1303, 1.442695
    %v1305 = vpow.pop %v1304
    %v1306 = vadd.f32 %v1305, 1.0
    %v1307 = vrcp.pop %v1306
    %v1308 = vmul.f32 %v1306, %v1307
    %v1309 = vsub.f32 1.0, %v1308
    %v1310 = vmul.f32 %v1307, %v1309
    %v1311 = vadd.f32 %v1307, %v1310
    %vm1312 = vweird.f32 %v1306
    %vm1313 = vweird.f32 %v1307
    %vm1314 = vmor %vm1312, %vm1313
    %v1315 = vsel %vm1314, %v1307, %v1311
    %v1316 = vand.u32 2147483647, %v1306
    %vm1317 = vcmp.eq.f32.partialorder %v1316, 8.507059e+37
    %v1318 = vand.u32 %v1306, 2147483648
    %v1319 = vor.u32 1.1754944e-38, %v1318
    %v1320 = vsel %vm1317, %v1319, %v1315
    %v1321 = vmul.f32 1.0, %v1320
    %v1322 = vxor.u32 %v1300, 2147483648
    %v1323 = vmul.f32 %v1322, 1.442695
    %v1324 = vpow.pop %v1323
    %v1325 = vadd.f32 %v1324, 1.0
    %v1326 = vrcp.pop %v1325
    %v1327 = vmul.f32 %v1325, %v1326
    %v1328 = vsub.f32 1.0, %v1327
    %v1329 = vmul.f32 %v1326, %v1328
    %v1330 = vadd.f32 %v1326, %v1329
    %vm1331 = vweird.f32 %v1325
    %vm1332 = vweird.f32 %v1326
    %vm1333 = vmor %vm1331, %vm1332
    %v1334 = vsel %vm1333, %v1326, %v1330
    %v1335 = vand.u32 2147483647, %v1325
    %vm1336 = vcmp.eq.f32.partialorder %v1335, 8.507059e+37
    %v1337 = vand.u32 %v1325, 2147483648
    %v1338 = vor.u32 1.1754944e-38, %v1337
    %v1339 = vsel %vm1336, %v1338, %v1334
    %v1340 = vmul.f32 1.0, %v1339
    %v1341 = vtanh.pop %v1301
    %v1342 = vxor.u32 %v1302, 2147483648
    %v1343 = vmul.f32 %v1342, 1.442695
    %v1344 = vpow.pop %v1343
    %v1345 = vadd.f32 %v1344, 1.0
    %v1346 = vrcp.pop %v1345
    %v1347 = vmul.f32 %v1345, %v1346
    %v1348 = vsub.f32 1.0, %v1347
    %v1349 = vmul.f32 %v1346, %v1348
    %v1350 = vadd.f32 %v1346, %v1349
    %vm1351 = vweird.f32 %v1345
    %vm1352 = vweird.f32 %v1346
    %vm1353 = vmor %vm1351, %vm1352
    %v1354 = vsel %vm1353, %v1346, %v1350
    %v1355 = vand.u32 2147483647, %v1345
    %vm1356 = vcmp.eq.f32.partialorder %v1355, 8.507059e+37
    %v1357 = vand.u32 %v1345, 2147483648
    %v1358 = vor.u32 1.1754944e-38, %v1357
    %v1359 = vsel %vm1356, %v1358, %v1354
    %v1360 = vmul.f32 1.0, %v1359
    %v1361 = vmul.f32 %v1340, %v722
    %v1362 = vmul.f32 %v1321, %v1341
    %v1363 = vadd.f32 %v1361, %v1362
    %v1364 = vtanh.pop %v1363
    %v1365 = vmul.f32 %v1360, %v1364
    %s1366 = sadd.s32 %s85, 1
    %s1367 = smul.u32 %s1366, 8
    %s1368 = sadd.s32 %s87, 6
    %s1369 = smul.u32 %s1368, 8
    %s1370 = scalar_lea.vmem [#allocation2], %s1367
    %1371 = vst [vmem:[%s1370] sm:$0xff] %v1048
    %s1372 = scalar_lea.vmem [#allocation3], %s1369
    %1373 = vst [vmem:[%s1372] sm:$0xff] %v1365
    %s1374 = scalar_lea.vmem %s0, 64
    %v1375 = vld [vmem:[%s1374] sm:$0xff]
    %v1376 = vld [vmem:[%s1374 + $0x8] sm:$0xff]
    %v1377 = vld [vmem:[%s1374 + $0x10] sm:$0xff]
    %v1378 = vld [vmem:[%s1374 + $0x18] sm:$0xff]
    %v1379 = vpack.c.bf16 %v1048, %v1048
    %v1380 = vld [vmem:[#allocation10] sm:$0xff]
    %v1381 = vld [vmem:[#allocation10 + $0x8] sm:$0xff]
    %v1382 = vld [vmem:[#allocation10 + $0x10] sm:$0xff]
    %v1383 = vld [vmem:[#allocation10 + $0x18] sm:$0xff]
    %v1384 = vld [vmem:[#allocation10 + $0x20] sm:$0xff]
    %v1385 = vld [vmem:[#allocation10 + $0x28] sm:$0xff]
    %v1386 = vld [vmem:[#allocation10 + $0x30] sm:$0xff]
    %v1387 = vld [vmem:[#allocation10 + $0x38] sm:$0xff]
    %v1388 = vld [vmem:[#allocation10 + $0x40] sm:$0xff]
    %v1389 = vld [vmem:[#allocation10 + $0x48] sm:$0xff]
    %v1390 = vld [vmem:[#allocation10 + $0x50] sm:$0xff]
    %v1391 = vld [vmem:[#allocation10 + $0x58] sm:$0xff]
    %v1392 = vld [vmem:[#allocation10 + $0x60] sm:$0xff]
    %v1393 = vld [vmem:[#allocation10 + $0x68] sm:$0xff]
    %v1394 = vld [vmem:[#allocation10 + $0x70] sm:$0xff]
    %v1395 = vld [vmem:[#allocation10 + $0x78] sm:$0xff]
    %v1396 = vld [vmem:[#allocation10 + $0x80] sm:$0xff]
    %v1397 = vld [vmem:[#allocation10 + $0x88] sm:$0xff]
    %v1398 = vld [vmem:[#allocation10 + $0x90] sm:$0xff]
    %v1399 = vld [vmem:[#allocation10 + $0x98] sm:$0xff]
    %v1400 = vld [vmem:[#allocation10 + $0xa0] sm:$0xff]
    %v1401 = vld [vmem:[#allocation10 + $0xa8] sm:$0xff]
    %v1402 = vld [vmem:[#allocation10 + $0xb0] sm:$0xff]
    %v1403 = vld [vmem:[#allocation10 + $0xb8] sm:$0xff]
    %v1404 = vld [vmem:[#allocation10 + $0xc0] sm:$0xff]
    %v1405 = vld [vmem:[#allocation10 + $0xc8] sm:$0xff]
    %v1406 = vld [vmem:[#allocation10 + $0xd0] sm:$0xff]
    %v1407 = vld [vmem:[#allocation10 + $0xd8] sm:$0xff]
    %v1408 = vld [vmem:[#allocation10 + $0xe0] sm:$0xff]
    %v1409 = vld [vmem:[#allocation10 + $0xe8] sm:$0xff]
    %v1410 = vld [vmem:[#allocation10 + $0xf0] sm:$0xff]
    %v1411 = vld [vmem:[#allocation10 + $0xf8] sm:$0xff]
    %v1444 = vunpack.c.l.b16 %v1380
    %v1445 = vunpack.c.h.b16 %v1380
    %v1446 = vunpack.c.l.b16 %v1381
    %v1447 = vunpack.c.h.b16 %v1381
    %v1448 = vunpack.c.l.b16 %v1382
    %v1449 = vunpack.c.h.b16 %v1382
    %v1450 = vunpack.c.l.b16 %v1383
    %v1451 = vunpack.c.h.b16 %v1383
    %v1452 = vunpack.c.l.b16 %v1384
    %v1453 = vunpack.c.h.b16 %v1384
    %v1454 = vunpack.c.l.b16 %v1385
    %v1455 = vunpack.c.h.b16 %v1385
    %v1456 = vunpack.c.l.b16 %v1386
    %v1457 = vunpack.c.h.b16 %v1386
    %v1458 = vunpack.c.l.b16 %v1387
    %v1459 = vunpack.c.h.b16 %v1387
    %v1460 = vunpack.c.l.b16 %v1388
    %v1461 = vunpack.c.h.b16 %v1388
    %v1462 = vunpack.c.l.b16 %v1389
    %v1463 = vunpack.c.h.b16 %v1389
    %v1464 = vunpack.c.l.b16 %v1390
    %v1465 = vunpack.c.h.b16 %v1390
    %v1466 = vunpack.c.l.b16 %v1391
    %v1467 = vunpack.c.h.b16 %v1391
    %v1468 = vunpack.c.l.b16 %v1392
    %v1469 = vunpack.c.h.b16 %v1392
    %v1470 = vunpack.c.l.b16 %v1393
    %v1471 = vunpack.c.h.b16 %v1393
    %v1472 = vunpack.c.l.b16 %v1394
    %v1473 = vunpack.c.h.b16 %v1394
    %v1474 = vunpack.c.l.b16 %v1395
    %v1475 = vunpack.c.h.b16 %v1395
    %v1476 = vunpack.c.l.b16 %v1396
    %v1477 = vunpack.c.h.b16 %v1396
    %v1478 = vunpack.c.l.b16 %v1397
    %v1479 = vunpack.c.h.b16 %v1397
    %v1480 = vunpack.c.l.b16 %v1398
    %v1481 = vunpack.c.h.b16 %v1398
    %v1482 = vunpack.c.l.b16 %v1399
    %v1483 = vunpack.c.h.b16 %v1399
    %v1484 = vunpack.c.l.b16 %v1400
    %v1485 = vunpack.c.h.b16 %v1400
    %v1486 = vunpack.c.l.b16 %v1401
    %v1487 = vunpack.c.h.b16 %v1401
    %v1488 = vunpack.c.l.b16 %v1402
    %v1489 = vunpack.c.h.b16 %v1402
    %v1490 = vunpack.c.l.b16 %v1403
    %v1491 = vunpack.c.h.b16 %v1403
    %v1492 = vunpack.c.l.b16 %v1404
    %v1493 = vunpack.c.h.b16 %v1404
    %v1494 = vunpack.c.l.b16 %v1405
    %v1495 = vunpack.c.h.b16 %v1405
    %v1496 = vunpack.c.l.b16 %v1406
    %v1497 = vunpack.c.h.b16 %v1406
    %v1498 = vunpack.c.l.b16 %v1407
    %v1499 = vunpack.c.h.b16 %v1407
    %v1500 = vunpack.c.l.b16 %v1408
    %v1501 = vunpack.c.h.b16 %v1408
    %v1502 = vunpack.c.l.b16 %v1409
    %v1503 = vunpack.c.h.b16 %v1409
    %v1504 = vunpack.c.l.b16 %v1410
    %v1505 = vunpack.c.h.b16 %v1410
    %v1506 = vunpack.c.l.b16 %v1411
    %v1507 = vunpack.c.h.b16 %v1411
    %v1508 = vpack.c.b16 %v1448, %v1444
    %v1509 = vpack.c.b16 %v1449, %v1445
    %v1510 = vpack.c.b16 %v1450, %v1446
    %v1511 = vpack.c.b16 %v1451, %v1447
    %v1512 = vpack.c.b16 %v1456, %v1452
    %v1513 = vpack.c.b16 %v1457, %v1453
    %v1514 = vpack.c.b16 %v1458, %v1454
    %v1515 = vpack.c.b16 %v1459, %v1455
    %v1516 = vpack.c.b16 %v1464, %v1460
    %v1517 = vpack.c.b16 %v1465, %v1461
    %v1518 = vpack.c.b16 %v1466, %v1462
    %v1519 = vpack.c.b16 %v1467, %v1463
    %v1520 = vpack.c.b16 %v1472, %v1468
    %v1521 = vpack.c.b16 %v1473, %v1469
    %v1522 = vpack.c.b16 %v1474, %v1470
    %v1523 = vpack.c.b16 %v1475, %v1471
    %v1524 = vpack.c.b16 %v1480, %v1476
    %v1525 = vpack.c.b16 %v1481, %v1477
    %v1526 = vpack.c.b16 %v1482, %v1478
    %v1527 = vpack.c.b16 %v1483, %v1479
    %v1528 = vpack.c.b16 %v1488, %v1484
    %v1529 = vpack.c.b16 %v1489, %v1485
    %v1530 = vpack.c.b16 %v1490, %v1486
    %v1531 = vpack.c.b16 %v1491, %v1487
    %v1532 = vpack.c.b16 %v1496, %v1492
    %v1533 = vpack.c.b16 %v1497, %v1493
    %v1534 = vpack.c.b16 %v1498, %v1494
    %v1535 = vpack.c.b16 %v1499, %v1495
    %v1536 = vpack.c.b16 %v1504, %v1500
    %v1537 = vpack.c.b16 %v1505, %v1501
    %v1538 = vpack.c.b16 %v1506, %v1502
    %v1539 = vpack.c.b16 %v1507, %v1503
    %1572 = vmatpush.bf16.msra.mxu0 %v1536
    %1573 = vmatpush.bf16.msra.mxu0 %v1532
    %1574 = vmatpush.bf16.msra.mxu0 %v1528
    %1575 = vmatpush.bf16.msra.mxu0 %v1524
    %1576 = vmatpush.bf16.msra.mxu0 %v1520
    %1577 = vmatpush.bf16.msra.mxu0 %v1516
    %1578 = vmatpush.bf16.msra.mxu0 %v1512
    %1579 = vmatpush.bf16.msra.mxu0 %v1508
    %1580 = vmatmul.bf16.gmra.mxu0 %v1379
    %v1581 = vpop.f32.mrf.mxu0
    %v1582 = vadd.f32 0.0, %v1581
    %v1583 = vpop.f32.mrf.mxu0
    %1584 = vdwg.mxu0
    %1585 = vmatpush.bf16.msra.mxu0 %v1537
    %1586 = vmatpush.bf16.msra.mxu0 %v1533
    %1587 = vmatpush.bf16.msra.mxu0 %v1529
    %1588 = vmatpush.bf16.msra.mxu0 %v1525
    %1589 = vmatpush.bf16.msra.mxu0 %v1521
    %1590 = vmatpush.bf16.msra.mxu0 %v1517
    %1591 = vmatpush.bf16.msra.mxu0 %v1513
    %1592 = vmatpush.bf16.msra.mxu0 %v1509
    %1593 = vmatmul.bf16.gmra.mxu0 %v1379
    %v1594 = vpop.f32.mrf.mxu0
    %v1595 = vadd.f32 0.0, %v1594
    %v1596 = vpop.f32.mrf.mxu0
    %1597 = vdwg.mxu0
    %1598 = vmatpush.bf16.msra.mxu0 %v1538
    %1599 = vmatpush.bf16.msra.mxu0 %v1534
    %1600 = vmatpush.bf16.msra.mxu0 %v1530
    %1601 = vmatpush.bf16.msra.mxu0 %v1526
    %1602 = vmatpush.bf16.msra.mxu0 %v1522
    %1603 = vmatpush.bf16.msra.mxu0 %v1518
    %1604 = vmatpush.bf16.msra.mxu0 %v1514
    %1605 = vmatpush.bf16.msra.mxu0 %v1510
    %1606 = vmatmul.bf16.gmra.mxu0 %v1379
    %v1607 = vpop.f32.mrf.mxu0
    %v1608 = vadd.f32 0.0, %v1607
    %v1609 = vpop.f32.mrf.mxu0
    %1610 = vdwg.mxu0
    %1611 = vmatpush.bf16.msra.mxu0 %v1539
    %1612 = vmatpush.bf16.msra.mxu0 %v1535
    %1613 = vmatpush.bf16.msra.mxu0 %v1531
    %1614 = vmatpush.bf16.msra.mxu0 %v1527
    %1615 = vmatpush.bf16.msra.mxu0 %v1523
    %1616 = vmatpush.bf16.msra.mxu0 %v1519
    %1617 = vmatpush.bf16.msra.mxu0 %v1515
    %1618 = vmatpush.bf16.msra.mxu0 %v1511
    %1619 = vmatmul.bf16.gmra.mxu0 %v1379
    %v1620 = vpop.f32.mrf.mxu0
    %v1621 = vadd.f32 0.0, %v1620
    %v1622 = vpop.f32.mrf.mxu0
    %1623 = vdwg.mxu0
    %v1624 = vadd.f32 %v1375, %v1582
    %v1625 = vadd.f32 %v1376, %v1595
    %v1626 = vadd.f32 %v1377, %v1608
    %v1627 = vadd.f32 %v1378, %v1621
    %v1628 = vxor.u32 %v1624, 2147483648
    %v1629 = vmul.f32 %v1628, 1.442695
    %v1630 = vpow.pop %v1629
    %v1631 = vadd.f32 %v1630, 1.0
    %v1632 = vrcp.pop %v1631
    %v1633 = vmul.f32 %v1631, %v1632
    %v1634 = vsub.f32 1.0, %v1633
    %v1635 = vmul.f32 %v1632, %v1634
    %v1636 = vadd.f32 %v1632, %v1635
    %vm1637 = vweird.f32 %v1631
    %vm1638 = vweird.f32 %v1632
    %vm1639 = vmor %vm1637, %vm1638
    %v1640 = vsel %vm1639, %v1632, %v1636
    %v1641 = vand.u32 2147483647, %v1631
    %vm1642 = vcmp.eq.f32.partialorder %v1641, 8.507059e+37
    %v1643 = vand.u32 %v1631, 2147483648
    %v1644 = vor.u32 1.1754944e-38, %v1643
    %v1645 = vsel %vm1642, %v1644, %v1640
    %v1646 = vmul.f32 1.0, %v1645
    %v1647 = vxor.u32 %v1625, 2147483648
    %v1648 = vmul.f32 %v1647, 1.442695
    %v1649 = vpow.pop %v1648
    %v1650 = vadd.f32 %v1649, 1.0
    %v1651 = vrcp.pop %v1650
    %v1652 = vmul.f32 %v1650, %v1651
    %v1653 = vsub.f32 1.0, %v1652
    %v1654 = vmul.f32 %v1651, %v1653
    %v1655 = vadd.f32 %v1651, %v1654
    %vm1656 = vweird.f32 %v1650
    %vm1657 = vweird.f32 %v1651
    %vm1658 = vmor %vm1656, %vm1657
    %v1659 = vsel %vm1658, %v1651, %v1655
    %v1660 = vand.u32 2147483647, %v1650
    %vm1661 = vcmp.eq.f32.partialorder %v1660, 8.507059e+37
    %v1662 = vand.u32 %v1650, 2147483648
    %v1663 = vor.u32 1.1754944e-38, %v1662
    %v1664 = vsel %vm1661, %v1663, %v1659
    %v1665 = vmul.f32 1.0, %v1664
    %v1666 = vtanh.pop %v1626
    %v1667 = vxor.u32 %v1627, 2147483648
    %v1668 = vmul.f32 %v1667, 1.442695
    %v1669 = vpow.pop %v1668
    %v1670 = vadd.f32 %v1669, 1.0
    %v1671 = vrcp.pop %v1670
    %v1672 = vmul.f32 %v1670, %v1671
    %v1673 = vsub.f32 1.0, %v1672
    %v1674 = vmul.f32 %v1671, %v1673
    %v1675 = vadd.f32 %v1671, %v1674
    %vm1676 = vweird.f32 %v1670
    %vm1677 = vweird.f32 %v1671
    %vm1678 = vmor %vm1676, %vm1677
    %v1679 = vsel %vm1678, %v1671, %v1675
    %v1680 = vand.u32 2147483647, %v1670
    %vm1681 = vcmp.eq.f32.partialorder %v1680, 8.507059e+37
    %v1682 = vand.u32 %v1670, 2147483648
    %v1683 = vor.u32 1.1754944e-38, %v1682
    %v1684 = vsel %vm1681, %v1683, %v1679
    %v1685 = vmul.f32 1.0, %v1684
    %v1686 = vmul.f32 %v1665, %v1046
    %v1687 = vmul.f32 %v1646, %v1666
    %v1688 = vadd.f32 %v1686, %v1687
    %v1689 = vtanh.pop %v1688
    %v1690 = vmul.f32 %v1685, %v1689
    %s1691 = scalar_lea.vmem [#allocation8], 160
    %v1692 = vld [vmem:[%s1691] sm:$0xff]
    %v1693 = vld [vmem:[%s1691 + $0x8] sm:$0xff]
    %v1694 = vld [vmem:[%s1691 + $0x10] sm:$0xff]
    %v1695 = vld [vmem:[%s1691 + $0x18] sm:$0xff]
    %v1696 = vpack.c.bf16 %v1365, %v1365
    %v1697 = vld [vmem:[#allocation12] sm:$0xff]
    %v1698 = vld [vmem:[#allocation12 + $0x8] sm:$0xff]
    %v1699 = vld [vmem:[#allocation12 + $0x10] sm:$0xff]
    %v1700 = vld [vmem:[#allocation12 + $0x18] sm:$0xff]
    %v1701 = vld [vmem:[#allocation12 + $0x20] sm:$0xff]
    %v1702 = vld [vmem:[#allocation12 + $0x28] sm:$0xff]
    %v1703 = vld [vmem:[#allocation12 + $0x30] sm:$0xff]
    %v1704 = vld [vmem:[#allocation12 + $0x38] sm:$0xff]
    %v1705 = vld [vmem:[#allocation12 + $0x40] sm:$0xff]
    %v1706 = vld [vmem:[#allocation12 + $0x48] sm:$0xff]
    %v1707 = vld [vmem:[#allocation12 + $0x50] sm:$0xff]
    %v1708 = vld [vmem:[#allocation12 + $0x58] sm:$0xff]
    %v1709 = vld [vmem:[#allocation12 + $0x60] sm:$0xff]
    %v1710 = vld [vmem:[#allocation12 + $0x68] sm:$0xff]
    %v1711 = vld [vmem:[#allocation12 + $0x70] sm:$0xff]
    %v1712 = vld [vmem:[#allocation12 + $0x78] sm:$0xff]
    %v1713 = vld [vmem:[#allocation12 + $0x80] sm:$0xff]
    %v1714 = vld [vmem:[#allocation12 + $0x88] sm:$0xff]
    %v1715 = vld [vmem:[#allocation12 + $0x90] sm:$0xff]
    %v1716 = vld [vmem:[#allocation12 + $0x98] sm:$0xff]
    %v1717 = vld [vmem:[#allocation12 + $0xa0] sm:$0xff]
    %v1718 = vld [vmem:[#allocation12 + $0xa8] sm:$0xff]
    %v1719 = vld [vmem:[#allocation12 + $0xb0] sm:$0xff]
    %v1720 = vld [vmem:[#allocation12 + $0xb8] sm:$0xff]
    %v1721 = vld [vmem:[#allocation12 + $0xc0] sm:$0xff]
    %v1722 = vld [vmem:[#allocation12 + $0xc8] sm:$0xff]
    %v1723 = vld [vmem:[#allocation12 + $0xd0] sm:$0xff]
    %v1724 = vld [vmem:[#allocation12 + $0xd8] sm:$0xff]
    %v1725 = vld [vmem:[#allocation12 + $0xe0] sm:$0xff]
    %v1726 = vld [vmem:[#allocation12 + $0xe8] sm:$0xff]
    %v1727 = vld [vmem:[#allocation12 + $0xf0] sm:$0xff]
    %v1728 = vld [vmem:[#allocation12 + $0xf8] sm:$0xff]
    %v1761 = vunpack.c.l.b16 %v1697
    %v1762 = vunpack.c.h.b16 %v1697
    %v1763 = vunpack.c.l.b16 %v1698
    %v1764 = vunpack.c.h.b16 %v1698
    %v1765 = vunpack.c.l.b16 %v1699
    %v1766 = vunpack.c.h.b16 %v1699
    %v1767 = vunpack.c.l.b16 %v1700
    %v1768 = vunpack.c.h.b16 %v1700
    %v1769 = vunpack.c.l.b16 %v1701
    %v1770 = vunpack.c.h.b16 %v1701
    %v1771 = vunpack.c.l.b16 %v1702
    %v1772 = vunpack.c.h.b16 %v1702
    %v1773 = vunpack.c.l.b16 %v1703
    %v1774 = vunpack.c.h.b16 %v1703
    %v1775 = vunpack.c.l.b16 %v1704
    %v1776 = vunpack.c.h.b16 %v1704
    %v1777 = vunpack.c.l.b16 %v1705
    %v1778 = vunpack.c.h.b16 %v1705
    %v1779 = vunpack.c.l.b16 %v1706
    %v1780 = vunpack.c.h.b16 %v1706
    %v1781 = vunpack.c.l.b16 %v1707
    %v1782 = vunpack.c.h.b16 %v1707
    %v1783 = vunpack.c.l.b16 %v1708
    %v1784 = vunpack.c.h.b16 %v1708
    %v1785 = vunpack.c.l.b16 %v1709
    %v1786 = vunpack.c.h.b16 %v1709
    %v1787 = vunpack.c.l.b16 %v1710
    %v1788 = vunpack.c.h.b16 %v1710
    %v1789 = vunpack.c.l.b16 %v1711
    %v1790 = vunpack.c.h.b16 %v1711
    %v1791 = vunpack.c.l.b16 %v1712
    %v1792 = vunpack.c.h.b16 %v1712
    %v1793 = vunpack.c.l.b16 %v1713
    %v1794 = vunpack.c.h.b16 %v1713
    %v1795 = vunpack.c.l.b16 %v1714
    %v1796 = vunpack.c.h.b16 %v1714
    %v1797 = vunpack.c.l.b16 %v1715
    %v1798 = vunpack.c.h.b16 %v1715
    %v1799 = vunpack.c.l.b16 %v1716
    %v1800 = vunpack.c.h.b16 %v1716
    %v1801 = vunpack.c.l.b16 %v1717
    %v1802 = vunpack.c.h.b16 %v1717
    %v1803 = vunpack.c.l.b16 %v1718
    %v1804 = vunpack.c.h.b16 %v1718
    %v1805 = vunpack.c.l.b16 %v1719
    %v1806 = vunpack.c.h.b16 %v1719
    %v1807 = vunpack.c.l.b16 %v1720
    %v1808 = vunpack.c.h.b16 %v1720
    %v1809 = vunpack.c.l.b16 %v1721
    %v1810 = vunpack.c.h.b16 %v1721
    %v1811 = vunpack.c.l.b16 %v1722
    %v1812 = vunpack.c.h.b16 %v1722
    %v1813 = vunpack.c.l.b16 %v1723
    %v1814 = vunpack.c.h.b16 %v1723
    %v1815 = vunpack.c.l.b16 %v1724
    %v1816 = vunpack.c.h.b16 %v1724
    %v1817 = vunpack.c.l.b16 %v1725
    %v1818 = vunpack.c.h.b16 %v1725
    %v1819 = vunpack.c.l.b16 %v1726
    %v1820 = vunpack.c.h.b16 %v1726
    %v1821 = vunpack.c.l.b16 %v1727
    %v1822 = vunpack.c.h.b16 %v1727
    %v1823 = vunpack.c.l.b16 %v1728
    %v1824 = vunpack.c.h.b16 %v1728
    %v1825 = vpack.c.b16 %v1765, %v1761
    %v1826 = vpack.c.b16 %v1766, %v1762
    %v1827 = vpack.c.b16 %v1767, %v1763
    %v1828 = vpack.c.b16 %v1768, %v1764
    %v1829 = vpack.c.b16 %v1773, %v1769
    %v1830 = vpack.c.b16 %v1774, %v1770
    %v1831 = vpack.c.b16 %v1775, %v1771
    %v1832 = vpack.c.b16 %v1776, %v1772
    %v1833 = vpack.c.b16 %v1781, %v1777
    %v1834 = vpack.c.b16 %v1782, %v1778
    %v1835 = vpack.c.b16 %v1783, %v1779
    %v1836 = vpack.c.b16 %v1784, %v1780
    %v1837 = vpack.c.b16 %v1789, %v1785
    %v1838 = vpack.c.b16 %v1790, %v1786
    %v1839 = vpack.c.b16 %v1791, %v1787
    %v1840 = vpack.c.b16 %v1792, %v1788
    %v1841 = vpack.c.b16 %v1797, %v1793
    %v1842 = vpack.c.b16 %v1798, %v1794
    %v1843 = vpack.c.b16 %v1799, %v1795
    %v1844 = vpack.c.b16 %v1800, %v1796
    %v1845 = vpack.c.b16 %v1805, %v1801
    %v1846 = vpack.c.b16 %v1806, %v1802
    %v1847 = vpack.c.b16 %v1807, %v1803
    %v1848 = vpack.c.b16 %v1808, %v1804
    %v1849 = vpack.c.b16 %v1813, %v1809
    %v1850 = vpack.c.b16 %v1814, %v1810
    %v1851 = vpack.c.b16 %v1815, %v1811
    %v1852 = vpack.c.b16 %v1816, %v1812
    %v1853 = vpack.c.b16 %v1821, %v1817
    %v1854 = vpack.c.b16 %v1822, %v1818
    %v1855 = vpack.c.b16 %v1823, %v1819
    %v1856 = vpack.c.b16 %v1824, %v1820
    %1889 = vmatpush.bf16.msra.mxu0 %v1853
    %1890 = vmatpush.bf16.msra.mxu0 %v1849
    %1891 = vmatpush.bf16.msra.mxu0 %v1845
    %1892 = vmatpush.bf16.msra.mxu0 %v1841
    %1893 = vmatpush.bf16.msra.mxu0 %v1837
    %1894 = vmatpush.bf16.msra.mxu0 %v1833
    %1895 = vmatpush.bf16.msra.mxu0 %v1829
    %1896 = vmatpush.bf16.msra.mxu0 %v1825
    %1897 = vmatmul.bf16.gmra.mxu0 %v1696
    %v1898 = vpop.f32.mrf.mxu0
    %v1899 = vadd.f32 0.0, %v1898
    %v1900 = vpop.f32.mrf.mxu0
    %1901 = vdwg.mxu0
    %1902 = vmatpush.bf16.msra.mxu0 %v1854
    %1903 = vmatpush.bf16.msra.mxu0 %v1850
    %1904 = vmatpush.bf16.msra.mxu0 %v1846
    %1905 = vmatpush.bf16.msra.mxu0 %v1842
    %1906 = vmatpush.bf16.msra.mxu0 %v1838
    %1907 = vmatpush.bf16.msra.mxu0 %v1834
    %1908 = vmatpush.bf16.msra.mxu0 %v1830
    %1909 = vmatpush.bf16.msra.mxu0 %v1826
    %1910 = vmatmul.bf16.gmra.mxu0 %v1696
    %v1911 = vpop.f32.mrf.mxu0
    %v1912 = vadd.f32 0.0, %v1911
    %v1913 = vpop.f32.mrf.mxu0
    %1914 = vdwg.mxu0
    %1915 = vmatpush.bf16.msra.mxu0 %v1855
    %1916 = vmatpush.bf16.msra.mxu0 %v1851
    %1917 = vmatpush.bf16.msra.mxu0 %v1847
    %1918 = vmatpush.bf16.msra.mxu0 %v1843
    %1919 = vmatpush.bf16.msra.mxu0 %v1839
    %1920 = vmatpush.bf16.msra.mxu0 %v1835
    %1921 = vmatpush.bf16.msra.mxu0 %v1831
    %1922 = vmatpush.bf16.msra.mxu0 %v1827
    %1923 = vmatmul.bf16.gmra.mxu0 %v1696
    %v1924 = vpop.f32.mrf.mxu0
    %v1925 = vadd.f32 0.0, %v1924
    %v1926 = vpop.f32.mrf.mxu0
    %1927 = vdwg.mxu0
    %1928 = vmatpush.bf16.msra.mxu0 %v1856
    %1929 = vmatpush.bf16.msra.mxu0 %v1852
    %1930 = vmatpush.bf16.msra.mxu0 %v1848
    %1931 = vmatpush.bf16.msra.mxu0 %v1844
    %1932 = vmatpush.bf16.msra.mxu0 %v1840
    %1933 = vmatpush.bf16.msra.mxu0 %v1836
    %1934 = vmatpush.bf16.msra.mxu0 %v1832
    %1935 = vmatpush.bf16.msra.mxu0 %v1828
    %1936 = vmatmul.bf16.gmra.mxu0 %v1696
    %v1937 = vpop.f32.mrf.mxu0
    %v1938 = vadd.f32 0.0, %v1937
    %v1939 = vpop.f32.mrf.mxu0
    %1940 = vdwg.mxu0
    %v1941 = vadd.f32 %v1692, %v1899
    %v1942 = vadd.f32 %v1693, %v1912
    %v1943 = vadd.f32 %v1694, %v1925
    %v1944 = vadd.f32 %v1695, %v1938
    %v1945 = vxor.u32 %v1941, 2147483648
    %v1946 = vmul.f32 %v1945, 1.442695
    %v1947 = vpow.pop %v1946
    %v1948 = vadd.f32 %v1947, 1.0
    %v1949 = vrcp.pop %v1948
    %v1950 = vmul.f32 %v1948, %v1949
    %v1951 = vsub.f32 1.0, %v1950
    %v1952 = vmul.f32 %v1949, %v1951
    %v1953 = vadd.f32 %v1949, %v1952
    %vm1954 = vweird.f32 %v1948
    %vm1955 = vweird.f32 %v1949
    %vm1956 = vmor %vm1954, %vm1955
    %v1957 = vsel %vm1956, %v1949, %v1953
    %v1958 = vand.u32 2147483647, %v1948
    %vm1959 = vcmp.eq.f32.partialorder %v1958, 8.507059e+37
    %v1960 = vand.u32 %v1948, 2147483648
    %v1961 = vor.u32 1.1754944e-38, %v1960
    %v1962 = vsel %vm1959, %v1961, %v1957
    %v1963 = vmul.f32 1.0, %v1962
    %v1964 = vxor.u32 %v1942, 2147483648
    %v1965 = vmul.f32 %v1964, 1.442695
    %v1966 = vpow.pop %v1965
    %v1967 = vadd.f32 %v1966, 1.0
    %v1968 = vrcp.pop %v1967
    %v1969 = vmul.f32 %v1967, %v1968
    %v1970 = vsub.f32 1.0, %v1969
    %v1971 = vmul.f32 %v1968, %v1970
    %v1972 = vadd.f32 %v1968, %v1971
    %vm1973 = vweird.f32 %v1967
    %vm1974 = vweird.f32 %v1968
    %vm1975 = vmor %vm1973, %vm1974
    %v1976 = vsel %vm1975, %v1968, %v1972
    %v1977 = vand.u32 2147483647, %v1967
    %vm1978 = vcmp.eq.f32.partialorder %v1977, 8.507059e+37
    %v1979 = vand.u32 %v1967, 2147483648
    %v1980 = vor.u32 1.1754944e-38, %v1979
    %v1981 = vsel %vm1978, %v1980, %v1976
    %v1982 = vmul.f32 1.0, %v1981
    %v1983 = vtanh.pop %v1943
    %v1984 = vxor.u32 %v1944, 2147483648
    %v1985 = vmul.f32 %v1984, 1.442695
    %v1986 = vpow.pop %v1985
    %v1987 = vadd.f32 %v1986, 1.0
    %v1988 = vrcp.pop %v1987
    %v1989 = vmul.f32 %v1987, %v1988
    %v1990 = vsub.f32 1.0, %v1989
    %v1991 = vmul.f32 %v1988, %v1990
    %v1992 = vadd.f32 %v1988, %v1991
    %vm1993 = vweird.f32 %v1987
    %vm1994 = vweird.f32 %v1988
    %vm1995 = vmor %vm1993, %vm1994
    %v1996 = vsel %vm1995, %v1988, %v1992
    %v1997 = vand.u32 2147483647, %v1987
    %vm1998 = vcmp.eq.f32.partialorder %v1997, 8.507059e+37
    %v1999 = vand.u32 %v1987, 2147483648
    %v2000 = vor.u32 1.1754944e-38, %v1999
    %v2001 = vsel %vm1998, %v2000, %v1996
    %v2002 = vmul.f32 1.0, %v2001
    %v2003 = vmul.f32 %v1982, %v1363
    %v2004 = vmul.f32 %v1963, %v1983
    %v2005 = vadd.f32 %v2003, %v2004
    %v2006 = vtanh.pop %v2005
    %v2007 = vmul.f32 %v2002, %v2006
    %s2008 = sadd.s32 %s85, 2
    %s2009 = smul.u32 %s2008, 8
    %s2010 = sadd.s32 %s87, 5
    %s2011 = smul.u32 %s2010, 8
    %s2012 = scalar_lea.vmem [#allocation2], %s2009
    %2013 = vst [vmem:[%s2012] sm:$0xff] %v1690
    %s2014 = scalar_lea.vmem [#allocation3], %s2011
    %2015 = vst [vmem:[%s2014] sm:$0xff] %v2007
    %s2016 = scalar_lea.vmem %s0, 96
    %v2017 = vld [vmem:[%s2016] sm:$0xff]
    %v2018 = vld [vmem:[%s2016 + $0x8] sm:$0xff]
    %v2019 = vld [vmem:[%s2016 + $0x10] sm:$0xff]
    %v2020 = vld [vmem:[%s2016 + $0x18] sm:$0xff]
    %v2021 = vpack.c.bf16 %v1690, %v1690
    %v2022 = vld [vmem:[#allocation10] sm:$0xff]
    %v2023 = vld [vmem:[#allocation10 + $0x8] sm:$0xff]
    %v2024 = vld [vmem:[#allocation10 + $0x10] sm:$0xff]
    %v2025 = vld [vmem:[#allocation10 + $0x18] sm:$0xff]
    %v2026 = vld [vmem:[#allocation10 + $0x20] sm:$0xff]
    %v2027 = vld [vmem:[#allocation10 + $0x28] sm:$0xff]
    %v2028 = vld [vmem:[#allocation10 + $0x30] sm:$0xff]
    %v2029 = vld [vmem:[#allocation10 + $0x38] sm:$0xff]
    %v2030 = vld [vmem:[#allocation10 + $0x40] sm:$0xff]
    %v2031 = vld [vmem:[#allocation10 + $0x48] sm:$0xff]
    %v2032 = vld [vmem:[#allocation10 + $0x50] sm:$0xff]
    %v2033 = vld [vmem:[#allocation10 + $0x58] sm:$0xff]
    %v2034 = vld [vmem:[#allocation10 + $0x60] sm:$0xff]
    %v2035 = vld [vmem:[#allocation10 + $0x68] sm:$0xff]
    %v2036 = vld [vmem:[#allocation10 + $0x70] sm:$0xff]
    %v2037 = vld [vmem:[#allocation10 + $0x78] sm:$0xff]
    %v2038 = vld [vmem:[#allocation10 + $0x80] sm:$0xff]
    %v2039 = vld [vmem:[#allocation10 + $0x88] sm:$0xff]
    %v2040 = vld [vmem:[#allocation10 + $0x90] sm:$0xff]
    %v2041 = vld [vmem:[#allocation10 + $0x98] sm:$0xff]
    %v2042 = vld [vmem:[#allocation10 + $0xa0] sm:$0xff]
    %v2043 = vld [vmem:[#allocation10 + $0xa8] sm:$0xff]
    %v2044 = vld [vmem:[#allocation10 + $0xb0] sm:$0xff]
    %v2045 = vld [vmem:[#allocation10 + $0xb8] sm:$0xff]
    %v2046 = vld [vmem:[#allocation10 + $0xc0] sm:$0xff]
    %v2047 = vld [vmem:[#allocation10 + $0xc8] sm:$0xff]
    %v2048 = vld [vmem:[#allocation10 + $0xd0] sm:$0xff]
    %v2049 = vld [vmem:[#allocation10 + $0xd8] sm:$0xff]
    %v2050 = vld [vmem:[#allocation10 + $0xe0] sm:$0xff]
    %v2051 = vld [vmem:[#allocation10 + $0xe8] sm:$0xff]
    %v2052 = vld [vmem:[#allocation10 + $0xf0] sm:$0xff]
    %v2053 = vld [vmem:[#allocation10 + $0xf8] sm:$0xff]
    %v2086 = vunpack.c.l.b16 %v2022
    %v2087 = vunpack.c.h.b16 %v2022
    %v2088 = vunpack.c.l.b16 %v2023
    %v2089 = vunpack.c.h.b16 %v2023
    %v2090 = vunpack.c.l.b16 %v2024
    %v2091 = vunpack.c.h.b16 %v2024
    %v2092 = vunpack.c.l.b16 %v2025
    %v2093 = vunpack.c.h.b16 %v2025
    %v2094 = vunpack.c.l.b16 %v2026
    %v2095 = vunpack.c.h.b16 %v2026
    %v2096 = vunpack.c.l.b16 %v2027
    %v2097 = vunpack.c.h.b16 %v2027
    %v2098 = vunpack.c.l.b16 %v2028
    %v2099 = vunpack.c.h.b16 %v2028
    %v2100 = vunpack.c.l.b16 %v2029
    %v2101 = vunpack.c.h.b16 %v2029
    %v2102 = vunpack.c.l.b16 %v2030
    %v2103 = vunpack.c.h.b16 %v2030
    %v2104 = vunpack.c.l.b16 %v2031
    %v2105 = vunpack.c.h.b16 %v2031
    %v2106 = vunpack.c.l.b16 %v2032
    %v2107 = vunpack.c.h.b16 %v2032
    %v2108 = vunpack.c.l.b16 %v2033
    %v2109 = vunpack.c.h.b16 %v2033
    %v2110 = vunpack.c.l.b16 %v2034
    %v2111 = vunpack.c.h.b16 %v2034
    %v2112 = vunpack.c.l.b16 %v2035
    %v2113 = vunpack.c.h.b16 %v2035
    %v2114 = vunpack.c.l.b16 %v2036
    %v2115 = vunpack.c.h.b16 %v2036
    %v2116 = vunpack.c.l.b16 %v2037
    %v2117 = vunpack.c.h.b16 %v2037
    %v2118 = vunpack.c.l.b16 %v2038
    %v2119 = vunpack.c.h.b16 %v2038
    %v2120 = vunpack.c.l.b16 %v2039
    %v2121 = vunpack.c.h.b16 %v2039
    %v2122 = vunpack.c.l.b16 %v2040
    %v2123 = vunpack.c.h.b16 %v2040
    %v2124 = vunpack.c.l.b16 %v2041
    %v2125 = vunpack.c.h.b16 %v2041
    %v2126 = vunpack.c.l.b16 %v2042
    %v2127 = vunpack.c.h.b16 %v2042
    %v2128 = vunpack.c.l.b16 %v2043
    %v2129 = vunpack.c.h.b16 %v2043
    %v2130 = vunpack.c.l.b16 %v2044
    %v2131 = vunpack.c.h.b16 %v2044
    %v2132 = vunpack.c.l.b16 %v2045
    %v2133 = vunpack.c.h.b16 %v2045
    %v2134 = vunpack.c.l.b16 %v2046
    %v2135 = vunpack.c.h.b16 %v2046
    %v2136 = vunpack.c.l.b16 %v2047
    %v2137 = vunpack.c.h.b16 %v2047
    %v2138 = vunpack.c.l.b16 %v2048
    %v2139 = vunpack.c.h.b16 %v2048
    %v2140 = vunpack.c.l.b16 %v2049
    %v2141 = vunpack.c.h.b16 %v2049
    %v2142 = vunpack.c.l.b16 %v2050
    %v2143 = vunpack.c.h.b16 %v2050
    %v2144 = vunpack.c.l.b16 %v2051
    %v2145 = vunpack.c.h.b16 %v2051
    %v2146 = vunpack.c.l.b16 %v2052
    %v2147 = vunpack.c.h.b16 %v2052
    %v2148 = vunpack.c.l.b16 %v2053
    %v2149 = vunpack.c.h.b16 %v2053
    %v2150 = vpack.c.b16 %v2090, %v2086
    %v2151 = vpack.c.b16 %v2091, %v2087
    %v2152 = vpack.c.b16 %v2092, %v2088
    %v2153 = vpack.c.b16 %v2093, %v2089
    %v2154 = vpack.c.b16 %v2098, %v2094
    %v2155 = vpack.c.b16 %v2099, %v2095
    %v2156 = vpack.c.b16 %v2100, %v2096
    %v2157 = vpack.c.b16 %v2101, %v2097
    %v2158 = vpack.c.b16 %v2106, %v2102
    %v2159 = vpack.c.b16 %v2107, %v2103
    %v2160 = vpack.c.b16 %v2108, %v2104
    %v2161 = vpack.c.b16 %v2109, %v2105
    %v2162 = vpack.c.b16 %v2114, %v2110
    %v2163 = vpack.c.b16 %v2115, %v2111
    %v2164 = vpack.c.b16 %v2116, %v2112
    %v2165 = vpack.c.b16 %v2117, %v2113
    %v2166 = vpack.c.b16 %v2122, %v2118
    %v2167 = vpack.c.b16 %v2123, %v2119
    %v2168 = vpack.c.b16 %v2124, %v2120
    %v2169 = vpack.c.b16 %v2125, %v2121
    %v2170 = vpack.c.b16 %v2130, %v2126
    %v2171 = vpack.c.b16 %v2131, %v2127
    %v2172 = vpack.c.b16 %v2132, %v2128
    %v2173 = vpack.c.b16 %v2133, %v2129
    %v2174 = vpack.c.b16 %v2138, %v2134
    %v2175 = vpack.c.b16 %v2139, %v2135
    %v2176 = vpack.c.b16 %v2140, %v2136
    %v2177 = vpack.c.b16 %v2141, %v2137
    %v2178 = vpack.c.b16 %v2146, %v2142
    %v2179 = vpack.c.b16 %v2147, %v2143
    %v2180 = vpack.c.b16 %v2148, %v2144
    %v2181 = vpack.c.b16 %v2149, %v2145
    %2214 = vmatpush.bf16.msra.mxu0 %v2178
    %2215 = vmatpush.bf16.msra.mxu0 %v2174
    %2216 = vmatpush.bf16.msra.mxu0 %v2170
    %2217 = vmatpush.bf16.msra.mxu0 %v2166
    %2218 = vmatpush.bf16.msra.mxu0 %v2162
    %2219 = vmatpush.bf16.msra.mxu0 %v2158
    %2220 = vmatpush.bf16.msra.mxu0 %v2154
    %2221 = vmatpush.bf16.msra.mxu0 %v2150
    %2222 = vmatmul.bf16.gmra.mxu0 %v2021
    %v2223 = vpop.f32.mrf.mxu0
    %v2224 = vadd.f32 0.0, %v2223
    %v2225 = vpop.f32.mrf.mxu0
    %2226 = vdwg.mxu0
    %2227 = vmatpush.bf16.msra.mxu0 %v2179
    %2228 = vmatpush.bf16.msra.mxu0 %v2175
    %2229 = vmatpush.bf16.msra.mxu0 %v2171
    %2230 = vmatpush.bf16.msra.mxu0 %v2167
    %2231 = vmatpush.bf16.msra.mxu0 %v2163
    %2232 = vmatpush.bf16.msra.mxu0 %v2159
    %2233 = vmatpush.bf16.msra.mxu0 %v2155
    %2234 = vmatpush.bf16.msra.mxu0 %v2151
    %2235 = vmatmul.bf16.gmra.mxu0 %v2021
    %v2236 = vpop.f32.mrf.mxu0
    %v2237 = vadd.f32 0.0, %v2236
    %v2238 = vpop.f32.mrf.mxu0
    %2239 = vdwg.mxu0
    %2240 = vmatpush.bf16.msra.mxu0 %v2180
    %2241 = vmatpush.bf16.msra.mxu0 %v2176
    %2242 = vmatpush.bf16.msra.mxu0 %v2172
    %2243 = vmatpush.bf16.msra.mxu0 %v2168
    %2244 = vmatpush.bf16.msra.mxu0 %v2164
    %2245 = vmatpush.bf16.msra.mxu0 %v2160
    %2246 = vmatpush.bf16.msra.mxu0 %v2156
    %2247 = vmatpush.bf16.msra.mxu0 %v2152
    %2248 = vmatmul.bf16.gmra.mxu0 %v2021
    %v2249 = vpop.f32.mrf.mxu0
    %v2250 = vadd.f32 0.0, %v2249
    %v2251 = vpop.f32.mrf.mxu0
    %2252 = vdwg.mxu0
    %2253 = vmatpush.bf16.msra.mxu0 %v2181
    %2254 = vmatpush.bf16.msra.mxu0 %v2177
    %2255 = vmatpush.bf16.msra.mxu0 %v2173
    %2256 = vmatpush.bf16.msra.mxu0 %v2169
    %2257 = vmatpush.bf16.msra.mxu0 %v2165
    %2258 = vmatpush.bf16.msra.mxu0 %v2161
    %2259 = vmatpush.bf16.msra.mxu0 %v2157
    %2260 = vmatpush.bf16.msra.mxu0 %v2153
    %2261 = vmatmul.bf16.gmra.mxu0 %v2021
    %v2262 = vpop.f32.mrf.mxu0
    %v2263 = vadd.f32 0.0, %v2262
    %v2264 = vpop.f32.mrf.mxu0
    %2265 = vdwg.mxu0
    %v2266 = vadd.f32 %v2017, %v2224
    %v2267 = vadd.f32 %v2018, %v2237
    %v2268 = vadd.f32 %v2019, %v2250
    %v2269 = vadd.f32 %v2020, %v2263
    %v2270 = vxor.u32 %v2266, 2147483648
    %v2271 = vmul.f32 %v2270, 1.442695
    %v2272 = vpow.pop %v2271
    %v2273 = vadd.f32 %v2272, 1.0
    %v2274 = vrcp.pop %v2273
    %v2275 = vmul.f32 %v2273, %v2274
    %v2276 = vsub.f32 1.0, %v2275
    %v2277 = vmul.f32 %v2274, %v2276
    %v2278 = vadd.f32 %v2274, %v2277
    %vm2279 = vweird.f32 %v2273
    %vm2280 = vweird.f32 %v2274
    %vm2281 = vmor %vm2279, %vm2280
    %v2282 = vsel %vm2281, %v2274, %v2278
    %v2283 = vand.u32 2147483647, %v2273
    %vm2284 = vcmp.eq.f32.partialorder %v2283, 8.507059e+37
    %v2285 = vand.u32 %v2273, 2147483648
    %v2286 = vor.u32 1.1754944e-38, %v2285
    %v2287 = vsel %vm2284, %v2286, %v2282
    %v2288 = vmul.f32 1.0, %v2287
    %v2289 = vxor.u32 %v2267, 2147483648
    %v2290 = vmul.f32 %v2289, 1.442695
    %v2291 = vpow.pop %v2290
    %v2292 = vadd.f32 %v2291, 1.0
    %v2293 = vrcp.pop %v2292
    %v2294 = vmul.f32 %v2292, %v2293
    %v2295 = vsub.f32 1.0, %v2294
    %v2296 = vmul.f32 %v2293, %v2295
    %v2297 = vadd.f32 %v2293, %v2296
    %vm2298 = vweird.f32 %v2292
    %vm2299 = vweird.f32 %v2293
    %vm2300 = vmor %vm2298, %vm2299
    %v2301 = vsel %vm2300, %v2293, %v2297
    %v2302 = vand.u32 2147483647, %v2292
    %vm2303 = vcmp.eq.f32.partialorder %v2302, 8.507059e+37
    %v2304 = vand.u32 %v2292, 2147483648
    %v2305 = vor.u32 1.1754944e-38, %v2304
    %v2306 = vsel %vm2303, %v2305, %v2301
    %v2307 = vmul.f32 1.0, %v2306
    %v2308 = vtanh.pop %v2268
    %v2309 = vxor.u32 %v2269, 2147483648
    %v2310 = vmul.f32 %v2309, 1.442695
    %v2311 = vpow.pop %v2310
    %v2312 = vadd.f32 %v2311, 1.0
    %v2313 = vrcp.pop %v2312
    %v2314 = vmul.f32 %v2312, %v2313
    %v2315 = vsub.f32 1.0, %v2314
    %v2316 = vmul.f32 %v2313, %v2315
    %v2317 = vadd.f32 %v2313, %v2316
    %vm2318 = vweird.f32 %v2312
    %vm2319 = vweird.f32 %v2313
    %vm2320 = vmor %vm2318, %vm2319
    %v2321 = vsel %vm2320, %v2313, %v2317
    %v2322 = vand.u32 2147483647, %v2312
    %vm2323 = vcmp.eq.f32.partialorder %v2322, 8.507059e+37
    %v2324 = vand.u32 %v2312, 2147483648
    %v2325 = vor.u32 1.1754944e-38, %v2324
    %v2326 = vsel %vm2323, %v2325, %v2321
    %v2327 = vmul.f32 1.0, %v2326
    %v2328 = vmul.f32 %v2307, %v1688
    %v2329 = vmul.f32 %v2288, %v2308
    %v2330 = vadd.f32 %v2328, %v2329
    %v2331 = vtanh.pop %v2330
    %v2332 = vmul.f32 %v2327, %v2331
    %s2333 = scalar_lea.vmem [#allocation8], 128
    %v2334 = vld [vmem:[%s2333] sm:$0xff]
    %v2335 = vld [vmem:[%s2333 + $0x8] sm:$0xff]
    %v2336 = vld [vmem:[%s2333 + $0x10] sm:$0xff]
    %v2337 = vld [vmem:[%s2333 + $0x18] sm:$0xff]
    %v2338 = vpack.c.bf16 %v2007, %v2007
    %v2339 = vld [vmem:[#allocation12] sm:$0xff]
    %v2340 = vld [vmem:[#allocation12 + $0x8] sm:$0xff]
    %v2341 = vld [vmem:[#allocation12 + $0x10] sm:$0xff]
    %v2342 = vld [vmem:[#allocation12 + $0x18] sm:$0xff]
    %v2343 = vld [vmem:[#allocation12 + $0x20] sm:$0xff]
    %v2344 = vld [vmem:[#allocation12 + $0x28] sm:$0xff]
    %v2345 = vld [vmem:[#allocation12 + $0x30] sm:$0xff]
    %v2346 = vld [vmem:[#allocation12 + $0x38] sm:$0xff]
    %v2347 = vld [vmem:[#allocation12 + $0x40] sm:$0xff]
    %v2348 = vld [vmem:[#allocation12 + $0x48] sm:$0xff]
    %v2349 = vld [vmem:[#allocation12 + $0x50] sm:$0xff]
    %v2350 = vld [vmem:[#allocation12 + $0x58] sm:$0xff]
    %v2351 = vld [vmem:[#allocation12 + $0x60] sm:$0xff]
    %v2352 = vld [vmem:[#allocation12 + $0x68] sm:$0xff]
    %v2353 = vld [vmem:[#allocation12 + $0x70] sm:$0xff]
    %v2354 = vld [vmem:[#allocation12 + $0x78] sm:$0xff]
    %v2355 = vld [vmem:[#allocation12 + $0x80] sm:$0xff]
    %v2356 = vld [vmem:[#allocation12 + $0x88] sm:$0xff]
    %v2357 = vld [vmem:[#allocation12 + $0x90] sm:$0xff]
    %v2358 = vld [vmem:[#allocation12 + $0x98] sm:$0xff]
    %v2359 = vld [vmem:[#allocation12 + $0xa0] sm:$0xff]
    %v2360 = vld [vmem:[#allocation12 + $0xa8] sm:$0xff]
    %v2361 = vld [vmem:[#allocation12 + $0xb0] sm:$0xff]
    %v2362 = vld [vmem:[#allocation12 + $0xb8] sm:$0xff]
    %v2363 = vld [vmem:[#allocation12 + $0xc0] sm:$0xff]
    %v2364 = vld [vmem:[#allocation12 + $0xc8] sm:$0xff]
    %v2365 = vld [vmem:[#allocation12 + $0xd0] sm:$0xff]
    %v2366 = vld [vmem:[#allocation12 + $0xd8] sm:$0xff]
    %v2367 = vld [vmem:[#allocation12 + $0xe0] sm:$0xff]
    %v2368 = vld [vmem:[#allocation12 + $0xe8] sm:$0xff]
    %v2369 = vld [vmem:[#allocation12 + $0xf0] sm:$0xff]
    %v2370 = vld [vmem:[#allocation12 + $0xf8] sm:$0xff]
    %v2403 = vunpack.c.l.b16 %v2339
    %v2404 = vunpack.c.h.b16 %v2339
    %v2405 = vunpack.c.l.b16 %v2340
    %v2406 = vunpack.c.h.b16 %v2340
    %v2407 = vunpack.c.l.b16 %v2341
    %v2408 = vunpack.c.h.b16 %v2341
    %v2409 = vunpack.c.l.b16 %v2342
    %v2410 = vunpack.c.h.b16 %v2342
    %v2411 = vunpack.c.l.b16 %v2343
    %v2412 = vunpack.c.h.b16 %v2343
    %v2413 = vunpack.c.l.b16 %v2344
    %v2414 = vunpack.c.h.b16 %v2344
    %v2415 = vunpack.c.l.b16 %v2345
    %v2416 = vunpack.c.h.b16 %v2345
    %v2417 = vunpack.c.l.b16 %v2346
    %v2418 = vunpack.c.h.b16 %v2346
    %v2419 = vunpack.c.l.b16 %v2347
    %v2420 = vunpack.c.h.b16 %v2347
    %v2421 = vunpack.c.l.b16 %v2348
    %v2422 = vunpack.c.h.b16 %v2348
    %v2423 = vunpack.c.l.b16 %v2349
    %v2424 = vunpack.c.h.b16 %v2349
    %v2425 = vunpack.c.l.b16 %v2350
    %v2426 = vunpack.c.h.b16 %v2350
    %v2427 = vunpack.c.l.b16 %v2351
    %v2428 = vunpack.c.h.b16 %v2351
    %v2429 = vunpack.c.l.b16 %v2352
    %v2430 = vunpack.c.h.b16 %v2352
    %v2431 = vunpack.c.l.b16 %v2353
    %v2432 = vunpack.c.h.b16 %v2353
    %v2433 = vunpack.c.l.b16 %v2354
    %v2434 = vunpack.c.h.b16 %v2354
    %v2435 = vunpack.c.l.b16 %v2355
    %v2436 = vunpack.c.h.b16 %v2355
    %v2437 = vunpack.c.l.b16 %v2356
    %v2438 = vunpack.c.h.b16 %v2356
    %v2439 = vunpack.c.l.b16 %v2357
    %v2440 = vunpack.c.h.b16 %v2357
    %v2441 = vunpack.c.l.b16 %v2358
    %v2442 = vunpack.c.h.b16 %v2358
    %v2443 = vunpack.c.l.b16 %v2359
    %v2444 = vunpack.c.h.b16 %v2359
    %v2445 = vunpack.c.l.b16 %v2360
    %v2446 = vunpack.c.h.b16 %v2360
    %v2447 = vunpack.c.l.b16 %v2361
    %v2448 = vunpack.c.h.b16 %v2361
    %v2449 = vunpack.c.l.b16 %v2362
    %v2450 = vunpack.c.h.b16 %v2362
    %v2451 = vunpack.c.l.b16 %v2363
    %v2452 = vunpack.c.h.b16 %v2363
    %v2453 = vunpack.c.l.b16 %v2364
    %v2454 = vunpack.c.h.b16 %v2364
    %v2455 = vunpack.c.l.b16 %v2365
    %v2456 = vunpack.c.h.b16 %v2365
    %v2457 = vunpack.c.l.b16 %v2366
    %v2458 = vunpack.c.h.b16 %v2366
    %v2459 = vunpack.c.l.b16 %v2367
    %v2460 = vunpack.c.h.b16 %v2367
    %v2461 = vunpack.c.l.b16 %v2368
    %v2462 = vunpack.c.h.b16 %v2368
    %v2463 = vunpack.c.l.b16 %v2369
    %v2464 = vunpack.c.h.b16 %v2369
    %v2465 = vunpack.c.l.b16 %v2370
    %v2466 = vunpack.c.h.b16 %v2370
    %v2467 = vpack.c.b16 %v2407, %v2403
    %v2468 = vpack.c.b16 %v2408, %v2404
    %v2469 = vpack.c.b16 %v2409, %v2405
    %v2470 = vpack.c.b16 %v2410, %v2406
    %v2471 = vpack.c.b16 %v2415, %v2411
    %v2472 = vpack.c.b16 %v2416, %v2412
    %v2473 = vpack.c.b16 %v2417, %v2413
    %v2474 = vpack.c.b16 %v2418, %v2414
    %v2475 = vpack.c.b16 %v2423, %v2419
    %v2476 = vpack.c.b16 %v2424, %v2420
    %v2477 = vpack.c.b16 %v2425, %v2421
    %v2478 = vpack.c.b16 %v2426, %v2422
    %v2479 = vpack.c.b16 %v2431, %v2427
    %v2480 = vpack.c.b16 %v2432, %v2428
    %v2481 = vpack.c.b16 %v2433, %v2429
    %v2482 = vpack.c.b16 %v2434, %v2430
    %v2483 = vpack.c.b16 %v2439, %v2435
    %v2484 = vpack.c.b16 %v2440, %v2436
    %v2485 = vpack.c.b16 %v2441, %v2437
    %v2486 = vpack.c.b16 %v2442, %v2438
    %v2487 = vpack.c.b16 %v2447, %v2443
    %v2488 = vpack.c.b16 %v2448, %v2444
    %v2489 = vpack.c.b16 %v2449, %v2445
    %v2490 = vpack.c.b16 %v2450, %v2446
    %v2491 = vpack.c.b16 %v2455, %v2451
    %v2492 = vpack.c.b16 %v2456, %v2452
    %v2493 = vpack.c.b16 %v2457, %v2453
    %v2494 = vpack.c.b16 %v2458, %v2454
    %v2495 = vpack.c.b16 %v2463, %v2459
    %v2496 = vpack.c.b16 %v2464, %v2460
    %v2497 = vpack.c.b16 %v2465, %v2461
    %v2498 = vpack.c.b16 %v2466, %v2462
    %2531 = vmatpush.bf16.msra.mxu0 %v2495
    %2532 = vmatpush.bf16.msra.mxu0 %v2491
    %2533 = vmatpush.bf16.msra.mxu0 %v2487
    %2534 = vmatpush.bf16.msra.mxu0 %v2483
    %2535 = vmatpush.bf16.msra.mxu0 %v2479
    %2536 = vmatpush.bf16.msra.mxu0 %v2475
    %2537 = vmatpush.bf16.msra.mxu0 %v2471
    %2538 = vmatpush.bf16.msra.mxu0 %v2467
    %2539 = vmatmul.bf16.gmra.mxu0 %v2338
    %v2540 = vpop.f32.mrf.mxu0
    %v2541 = vadd.f32 0.0, %v2540
    %v2542 = vpop.f32.mrf.mxu0
    %2543 = vdwg.mxu0
    %2544 = vmatpush.bf16.msra.mxu0 %v2496
    %2545 = vmatpush.bf16.msra.mxu0 %v2492
    %2546 = vmatpush.bf16.msra.mxu0 %v2488
    %2547 = vmatpush.bf16.msra.mxu0 %v2484
    %2548 = vmatpush.bf16.msra.mxu0 %v2480
    %2549 = vmatpush.bf16.msra.mxu0 %v2476
    %2550 = vmatpush.bf16.msra.mxu0 %v2472
    %2551 = vmatpush.bf16.msra.mxu0 %v2468
    %2552 = vmatmul.bf16.gmra.mxu0 %v2338
    %v2553 = vpop.f32.mrf.mxu0
    %v2554 = vadd.f32 0.0, %v2553
    %v2555 = vpop.f32.mrf.mxu0
    %2556 = vdwg.mxu0
    %2557 = vmatpush.bf16.msra.mxu0 %v2497
    %2558 = vmatpush.bf16.msra.mxu0 %v2493
    %2559 = vmatpush.bf16.msra.mxu0 %v2489
    %2560 = vmatpush.bf16.msra.mxu0 %v2485
    %2561 = vmatpush.bf16.msra.mxu0 %v2481
    %2562 = vmatpush.bf16.msra.mxu0 %v2477
    %2563 = vmatpush.bf16.msra.mxu0 %v2473
    %2564 = vmatpush.bf16.msra.mxu0 %v2469
    %2565 = vmatmul.bf16.gmra.mxu0 %v2338
    %v2566 = vpop.f32.mrf.mxu0
    %v2567 = vadd.f32 0.0, %v2566
    %v2568 = vpop.f32.mrf.mxu0
    %2569 = vdwg.mxu0
    %2570 = vmatpush.bf16.msra.mxu0 %v2498
    %2571 = vmatpush.bf16.msra.mxu0 %v2494
    %2572 = vmatpush.bf16.msra.mxu0 %v2490
    %2573 = vmatpush.bf16.msra.mxu0 %v2486
    %2574 = vmatpush.bf16.msra.mxu0 %v2482
    %2575 = vmatpush.bf16.msra.mxu0 %v2478
    %2576 = vmatpush.bf16.msra.mxu0 %v2474
    %2577 = vmatpush.bf16.msra.mxu0 %v2470
    %2578 = vmatmul.bf16.gmra.mxu0 %v2338
    %v2579 = vpop.f32.mrf.mxu0
    %v2580 = vadd.f32 0.0, %v2579
    %v2581 = vpop.f32.mrf.mxu0
    %2582 = vdwg.mxu0
    %v2583 = vadd.f32 %v2334, %v2541
    %v2584 = vadd.f32 %v2335, %v2554
    %v2585 = vadd.f32 %v2336, %v2567
    %v2586 = vadd.f32 %v2337, %v2580
    %v2587 = vxor.u32 %v2583, 2147483648
    %v2588 = vmul.f32 %v2587, 1.442695
    %v2589 = vpow.pop %v2588
    %v2590 = vadd.f32 %v2589, 1.0
    %v2591 = vrcp.pop %v2590
    %v2592 = vmul.f32 %v2590, %v2591
    %v2593 = vsub.f32 1.0, %v2592
    %v2594 = vmul.f32 %v2591, %v2593
    %v2595 = vadd.f32 %v2591, %v2594
    %vm2596 = vweird.f32 %v2590
    %vm2597 = vweird.f32 %v2591
    %vm2598 = vmor %vm2596, %vm2597
    %v2599 = vsel %vm2598, %v2591, %v2595
    %v2600 = vand.u32 2147483647, %v2590
    %vm2601 = vcmp.eq.f32.partialorder %v2600, 8.507059e+37
    %v2602 = vand.u32 %v2590, 2147483648
    %v2603 = vor.u32 1.1754944e-38, %v2602
    %v2604 = vsel %vm2601, %v2603, %v2599
    %v2605 = vmul.f32 1.0, %v2604
    %v2606 = vxor.u32 %v2584, 2147483648
    %v2607 = vmul.f32 %v2606, 1.442695
    %v2608 = vpow.pop %v2607
    %v2609 = vadd.f32 %v2608, 1.0
    %v2610 = vrcp.pop %v2609
    %v2611 = vmul.f32 %v2609, %v2610
    %v2612 = vsub.f32 1.0, %v2611
    %v2613 = vmul.f32 %v2610, %v2612
    %v2614 = vadd.f32 %v2610, %v2613
    %vm2615 = vweird.f32 %v2609
    %vm2616 = vweird.f32 %v2610
    %vm2617 = vmor %vm2615, %vm2616
    %v2618 = vsel %vm2617, %v2610, %v2614
    %v2619 = vand.u32 2147483647, %v2609
    %vm2620 = vcmp.eq.f32.partialorder %v2619, 8.507059e+37
    %v2621 = vand.u32 %v2609, 2147483648
    %v2622 = vor.u32 1.1754944e-38, %v2621
    %v2623 = vsel %vm2620, %v2622, %v2618
    %v2624 = vmul.f32 1.0, %v2623
    %v2625 = vtanh.pop %v2585
    %v2626 = vxor.u32 %v2586, 2147483648
    %v2627 = vmul.f32 %v2626, 1.442695
    %v2628 = vpow.pop %v2627
    %v2629 = vadd.f32 %v2628, 1.0
    %v2630 = vrcp.pop %v2629
    %v2631 = vmul.f32 %v2629, %v2630
    %v2632 = vsub.f32 1.0, %v2631
    %v2633 = vmul.f32 %v2630, %v2632
    %v2634 = vadd.f32 %v2630, %v2633
    %vm2635 = vweird.f32 %v2629
    %vm2636 = vweird.f32 %v2630
    %vm2637 = vmor %vm2635, %vm2636
    %v2638 = vsel %vm2637, %v2630, %v2634
    %v2639 = vand.u32 2147483647, %v2629
    %vm2640 = vcmp.eq.f32.partialorder %v2639, 8.507059e+37
    %v2641 = vand.u32 %v2629, 2147483648
    %v2642 = vor.u32 1.1754944e-38, %v2641
    %v2643 = vsel %vm2640, %v2642, %v2638
    %v2644 = vmul.f32 1.0, %v2643
    %v2645 = vmul.f32 %v2624, %v2005
    %v2646 = vmul.f32 %v2605, %v2625
    %v2647 = vadd.f32 %v2645, %v2646
    %v2648 = vtanh.pop %v2647
    %v2649 = vmul.f32 %v2644, %v2648
    %s2650 = sadd.s32 %s85, 3
    %s2651 = smul.u32 %s2650, 8
    %s2652 = sadd.s32 %s87, 4
    %s2653 = smul.u32 %s2652, 8
    %s2654 = scalar_lea.vmem [#allocation2], %s2651
    %2655 = vst [vmem:[%s2654] sm:$0xff] %v2332
    %s2656 = scalar_lea.vmem [#allocation3], %s2653
    %2657 = vst [vmem:[%s2656] sm:$0xff] %v2649
    %s2658 = scalar_lea.vmem %s0, 128
    %v2659 = vld [vmem:[%s2658] sm:$0xff]
    %v2660 = vld [vmem:[%s2658 + $0x8] sm:$0xff]
    %v2661 = vld [vmem:[%s2658 + $0x10] sm:$0xff]
    %v2662 = vld [vmem:[%s2658 + $0x18] sm:$0xff]
    %v2663 = vpack.c.bf16 %v2332, %v2332
    %v2664 = vld [vmem:[#allocation10] sm:$0xff]
    %v2665 = vld [vmem:[#allocation10 + $0x8] sm:$0xff]
    %v2666 = vld [vmem:[#allocation10 + $0x10] sm:$0xff]
    %v2667 = vld [vmem:[#allocation10 + $0x18] sm:$0xff]
    %v2668 = vld [vmem:[#allocation10 + $0x20] sm:$0xff]
    %v2669 = vld [vmem:[#allocation10 + $0x28] sm:$0xff]
    %v2670 = vld [vmem:[#allocation10 + $0x30] sm:$0xff]
    %v2671 = vld [vmem:[#allocation10 + $0x38] sm:$0xff]
    %v2672 = vld [vmem:[#allocation10 + $0x40] sm:$0xff]
    %v2673 = vld [vmem:[#allocation10 + $0x48] sm:$0xff]
    %v2674 = vld [vmem:[#allocation10 + $0x50] sm:$0xff]
    %v2675 = vld [vmem:[#allocation10 + $0x58] sm:$0xff]
    %v2676 = vld [vmem:[#allocation10 + $0x60] sm:$0xff]
    %v2677 = vld [vmem:[#allocation10 + $0x68] sm:$0xff]
    %v2678 = vld [vmem:[#allocation10 + $0x70] sm:$0xff]
    %v2679 = vld [vmem:[#allocation10 + $0x78] sm:$0xff]
    %v2680 = vld [vmem:[#allocation10 + $0x80] sm:$0xff]
    %v2681 = vld [vmem:[#allocation10 + $0x88] sm:$0xff]
    %v2682 = vld [vmem:[#allocation10 + $0x90] sm:$0xff]
    %v2683 = vld [vmem:[#allocation10 + $0x98] sm:$0xff]
    %v2684 = vld [vmem:[#allocation10 + $0xa0] sm:$0xff]
    %v2685 = vld [vmem:[#allocation10 + $0xa8] sm:$0xff]
    %v2686 = vld [vmem:[#allocation10 + $0xb0] sm:$0xff]
    %v2687 = vld [vmem:[#allocation10 + $0xb8] sm:$0xff]
    %v2688 = vld [vmem:[#allocation10 + $0xc0] sm:$0xff]
    %v2689 = vld [vmem:[#allocation10 + $0xc8] sm:$0xff]
    %v2690 = vld [vmem:[#allocation10 + $0xd0] sm:$0xff]
    %v2691 = vld [vmem:[#allocation10 + $0xd8] sm:$0xff]
    %v2692 = vld [vmem:[#allocation10 + $0xe0] sm:$0xff]
    %v2693 = vld [vmem:[#allocation10 + $0xe8] sm:$0xff]
    %v2694 = vld [vmem:[#allocation10 + $0xf0] sm:$0xff]
    %v2695 = vld [vmem:[#allocation10 + $0xf8] sm:$0xff]
    %v2728 = vunpack.c.l.b16 %v2664
    %v2729 = vunpack.c.h.b16 %v2664
    %v2730 = vunpack.c.l.b16 %v2665
    %v2731 = vunpack.c.h.b16 %v2665
    %v2732 = vunpack.c.l.b16 %v2666
    %v2733 = vunpack.c.h.b16 %v2666
    %v2734 = vunpack.c.l.b16 %v2667
    %v2735 = vunpack.c.h.b16 %v2667
    %v2736 = vunpack.c.l.b16 %v2668
    %v2737 = vunpack.c.h.b16 %v2668
    %v2738 = vunpack.c.l.b16 %v2669
    %v2739 = vunpack.c.h.b16 %v2669
    %v2740 = vunpack.c.l.b16 %v2670
    %v2741 = vunpack.c.h.b16 %v2670
    %v2742 = vunpack.c.l.b16 %v2671
    %v2743 = vunpack.c.h.b16 %v2671
    %v2744 = vunpack.c.l.b16 %v2672
    %v2745 = vunpack.c.h.b16 %v2672
    %v2746 = vunpack.c.l.b16 %v2673
    %v2747 = vunpack.c.h.b16 %v2673
    %v2748 = vunpack.c.l.b16 %v2674
    %v2749 = vunpack.c.h.b16 %v2674
    %v2750 = vunpack.c.l.b16 %v2675
    %v2751 = vunpack.c.h.b16 %v2675
    %v2752 = vunpack.c.l.b16 %v2676
    %v2753 = vunpack.c.h.b16 %v2676
    %v2754 = vunpack.c.l.b16 %v2677
    %v2755 = vunpack.c.h.b16 %v2677
    %v2756 = vunpack.c.l.b16 %v2678
    %v2757 = vunpack.c.h.b16 %v2678
    %v2758 = vunpack.c.l.b16 %v2679
    %v2759 = vunpack.c.h.b16 %v2679
    %v2760 = vunpack.c.l.b16 %v2680
    %v2761 = vunpack.c.h.b16 %v2680
    %v2762 = vunpack.c.l.b16 %v2681
    %v2763 = vunpack.c.h.b16 %v2681
    %v2764 = vunpack.c.l.b16 %v2682
    %v2765 = vunpack.c.h.b16 %v2682
    %v2766 = vunpack.c.l.b16 %v2683
    %v2767 = vunpack.c.h.b16 %v2683
    %v2768 = vunpack.c.l.b16 %v2684
    %v2769 = vunpack.c.h.b16 %v2684
    %v2770 = vunpack.c.l.b16 %v2685
    %v2771 = vunpack.c.h.b16 %v2685
    %v2772 = vunpack.c.l.b16 %v2686
    %v2773 = vunpack.c.h.b16 %v2686
    %v2774 = vunpack.c.l.b16 %v2687
    %v2775 = vunpack.c.h.b16 %v2687
    %v2776 = vunpack.c.l.b16 %v2688
    %v2777 = vunpack.c.h.b16 %v2688
    %v2778 = vunpack.c.l.b16 %v2689
    %v2779 = vunpack.c.h.b16 %v2689
    %v2780 = vunpack.c.l.b16 %v2690
    %v2781 = vunpack.c.h.b16 %v2690
    %v2782 = vunpack.c.l.b16 %v2691
    %v2783 = vunpack.c.h.b16 %v2691
    %v2784 = vunpack.c.l.b16 %v2692
    %v2785 = vunpack.c.h.b16 %v2692
    %v2786 = vunpack.c.l.b16 %v2693
    %v2787 = vunpack.c.h.b16 %v2693
    %v2788 = vunpack.c.l.b16 %v2694
    %v2789 = vunpack.c.h.b16 %v2694
    %v2790 = vunpack.c.l.b16 %v2695
    %v2791 = vunpack.c.h.b16 %v2695
    %v2792 = vpack.c.b16 %v2732, %v2728
    %v2793 = vpack.c.b16 %v2733, %v2729
    %v2794 = vpack.c.b16 %v2734, %v2730
    %v2795 = vpack.c.b16 %v2735, %v2731
    %v2796 = vpack.c.b16 %v2740, %v2736
    %v2797 = vpack.c.b16 %v2741, %v2737
    %v2798 = vpack.c.b16 %v2742, %v2738
    %v2799 = vpack.c.b16 %v2743, %v2739
    %v2800 = vpack.c.b16 %v2748, %v2744
    %v2801 = vpack.c.b16 %v2749, %v2745
    %v2802 = vpack.c.b16 %v2750, %v2746
    %v2803 = vpack.c.b16 %v2751, %v2747
    %v2804 = vpack.c.b16 %v2756, %v2752
    %v2805 = vpack.c.b16 %v2757, %v2753
    %v2806 = vpack.c.b16 %v2758, %v2754
    %v2807 = vpack.c.b16 %v2759, %v2755
    %v2808 = vpack.c.b16 %v2764, %v2760
    %v2809 = vpack.c.b16 %v2765, %v2761
    %v2810 = vpack.c.b16 %v2766, %v2762
    %v2811 = vpack.c.b16 %v2767, %v2763
    %v2812 = vpack.c.b16 %v2772, %v2768
    %v2813 = vpack.c.b16 %v2773, %v2769
    %v2814 = vpack.c.b16 %v2774, %v2770
    %v2815 = vpack.c.b16 %v2775, %v2771
    %v2816 = vpack.c.b16 %v2780, %v2776
    %v2817 = vpack.c.b16 %v2781, %v2777
    %v2818 = vpack.c.b16 %v2782, %v2778
    %v2819 = vpack.c.b16 %v2783, %v2779
    %v2820 = vpack.c.b16 %v2788, %v2784
    %v2821 = vpack.c.b16 %v2789, %v2785
    %v2822 = vpack.c.b16 %v2790, %v2786
    %v2823 = vpack.c.b16 %v2791, %v2787
    %2856 = vmatpush.bf16.msra.mxu0 %v2820
    %2857 = vmatpush.bf16.msra.mxu0 %v2816
    %2858 = vmatpush.bf16.msra.mxu0 %v2812
    %2859 = vmatpush.bf16.msra.mxu0 %v2808
    %2860 = vmatpush.bf16.msra.mxu0 %v2804
    %2861 = vmatpush.bf16.msra.mxu0 %v2800
    %2862 = vmatpush.bf16.msra.mxu0 %v2796
    %2863 = vmatpush.bf16.msra.mxu0 %v2792
    %2864 = vmatmul.bf16.gmra.mxu0 %v2663
    %v2865 = vpop.f32.mrf.mxu0
    %v2866 = vadd.f32 0.0, %v2865
    %v2867 = vpop.f32.mrf.mxu0
    %2868 = vdwg.mxu0
    %2869 = vmatpush.bf16.msra.mxu0 %v2821
    %2870 = vmatpush.bf16.msra.mxu0 %v2817
    %2871 = vmatpush.bf16.msra.mxu0 %v2813
    %2872 = vmatpush.bf16.msra.mxu0 %v2809
    %2873 = vmatpush.bf16.msra.mxu0 %v2805
    %2874 = vmatpush.bf16.msra.mxu0 %v2801
    %2875 = vmatpush.bf16.msra.mxu0 %v2797
    %2876 = vmatpush.bf16.msra.mxu0 %v2793
    %2877 = vmatmul.bf16.gmra.mxu0 %v2663
    %v2878 = vpop.f32.mrf.mxu0
    %v2879 = vadd.f32 0.0, %v2878
    %v2880 = vpop.f32.mrf.mxu0
    %2881 = vdwg.mxu0
    %2882 = vmatpush.bf16.msra.mxu0 %v2822
    %2883 = vmatpush.bf16.msra.mxu0 %v2818
    %2884 = vmatpush.bf16.msra.mxu0 %v2814
    %2885 = vmatpush.bf16.msra.mxu0 %v2810
    %2886 = vmatpush.bf16.msra.mxu0 %v2806
    %2887 = vmatpush.bf16.msra.mxu0 %v2802
    %2888 = vmatpush.bf16.msra.mxu0 %v2798
    %2889 = vmatpush.bf16.msra.mxu0 %v2794
    %2890 = vmatmul.bf16.gmra.mxu0 %v2663
    %v2891 = vpop.f32.mrf.mxu0
    %v2892 = vadd.f32 0.0, %v2891
    %v2893 = vpop.f32.mrf.mxu0
    %2894 = vdwg.mxu0
    %2895 = vmatpush.bf16.msra.mxu0 %v2823
    %2896 = vmatpush.bf16.msra.mxu0 %v2819
    %2897 = vmatpush.bf16.msra.mxu0 %v2815
    %2898 = vmatpush.bf16.msra.mxu0 %v2811
    %2899 = vmatpush.bf16.msra.mxu0 %v2807
    %2900 = vmatpush.bf16.msra.mxu0 %v2803
    %2901 = vmatpush.bf16.msra.mxu0 %v2799
    %2902 = vmatpush.bf16.msra.mxu0 %v2795
    %2903 = vmatmul.bf16.gmra.mxu0 %v2663
    %v2904 = vpop.f32.mrf.mxu0
    %v2905 = vadd.f32 0.0, %v2904
    %v2906 = vpop.f32.mrf.mxu0
    %2907 = vdwg.mxu0
    %v2908 = vadd.f32 %v2659, %v2866
    %v2909 = vadd.f32 %v2660, %v2879
    %v2910 = vadd.f32 %v2661, %v2892
    %v2911 = vadd.f32 %v2662, %v2905
    %v2912 = vxor.u32 %v2908, 2147483648
    %v2913 = vmul.f32 %v2912, 1.442695
    %v2914 = vpow.pop %v2913
    %v2915 = vadd.f32 %v2914, 1.0
    %v2916 = vrcp.pop %v2915
    %v2917 = vmul.f32 %v2915, %v2916
    %v2918 = vsub.f32 1.0, %v2917
    %v2919 = vmul.f32 %v2916, %v2918
    %v2920 = vadd.f32 %v2916, %v2919
    %vm2921 = vweird.f32 %v2915
    %vm2922 = vweird.f32 %v2916
    %vm2923 = vmor %vm2921, %vm2922
    %v2924 = vsel %vm2923, %v2916, %v2920
    %v2925 = vand.u32 2147483647, %v2915
    %vm2926 = vcmp.eq.f32.partialorder %v2925, 8.507059e+37
    %v2927 = vand.u32 %v2915, 2147483648
    %v2928 = vor.u32 1.1754944e-38, %v2927
    %v2929 = vsel %vm2926, %v2928, %v2924
    %v2930 = vmul.f32 1.0, %v2929
    %v2931 = vxor.u32 %v2909, 2147483648
    %v2932 = vmul.f32 %v2931, 1.442695
    %v2933 = vpow.pop %v2932
    %v2934 = vadd.f32 %v2933, 1.0
    %v2935 = vrcp.pop %v2934
    %v2936 = vmul.f32 %v2934, %v2935
    %v2937 = vsub.f32 1.0, %v2936
    %v2938 = vmul.f32 %v2935, %v2937
    %v2939 = vadd.f32 %v2935, %v2938
    %vm2940 = vweird.f32 %v2934
    %vm2941 = vweird.f32 %v2935
    %vm2942 = vmor %vm2940, %vm2941
    %v2943 = vsel %vm2942, %v2935, %v2939
    %v2944 = vand.u32 2147483647, %v2934
    %vm2945 = vcmp.eq.f32.partialorder %v2944, 8.507059e+37
    %v2946 = vand.u32 %v2934, 2147483648
    %v2947 = vor.u32 1.1754944e-38, %v2946
    %v2948 = vsel %vm2945, %v2947, %v2943
    %v2949 = vmul.f32 1.0, %v2948
    %v2950 = vtanh.pop %v2910
    %v2951 = vxor.u32 %v2911, 2147483648
    %v2952 = vmul.f32 %v2951, 1.442695
    %v2953 = vpow.pop %v2952
    %v2954 = vadd.f32 %v2953, 1.0
    %v2955 = vrcp.pop %v2954
    %v2956 = vmul.f32 %v2954, %v2955
    %v2957 = vsub.f32 1.0, %v2956
    %v2958 = vmul.f32 %v2955, %v2957
    %v2959 = vadd.f32 %v2955, %v2958
    %vm2960 = vweird.f32 %v2954
    %vm2961 = vweird.f32 %v2955
    %vm2962 = vmor %vm2960, %vm2961
    %v2963 = vsel %vm2962, %v2955, %v2959
    %v2964 = vand.u32 2147483647, %v2954
    %vm2965 = vcmp.eq.f32.partialorder %v2964, 8.507059e+37
    %v2966 = vand.u32 %v2954, 2147483648
    %v2967 = vor.u32 1.1754944e-38, %v2966
    %v2968 = vsel %vm2965, %v2967, %v2963
    %v2969 = vmul.f32 1.0, %v2968
    %v2970 = vmul.f32 %v2949, %v2330
    %v2971 = vmul.f32 %v2930, %v2950
    %v2972 = vadd.f32 %v2970, %v2971
    %v2973 = vtanh.pop %v2972
    %v2974 = vmul.f32 %v2969, %v2973
    %s2975 = scalar_lea.vmem [#allocation8], 96
    %v2976 = vld [vmem:[%s2975] sm:$0xff]
    %v2977 = vld [vmem:[%s2975 + $0x8] sm:$0xff]
    %v2978 = vld [vmem:[%s2975 + $0x10] sm:$0xff]
    %v2979 = vld [vmem:[%s2975 + $0x18] sm:$0xff]
    %v2980 = vpack.c.bf16 %v2649, %v2649
    %v2981 = vld [vmem:[#allocation12] sm:$0xff]
    %v2982 = vld [vmem:[#allocation12 + $0x8] sm:$0xff]
    %v2983 = vld [vmem:[#allocation12 + $0x10] sm:$0xff]
    %v2984 = vld [vmem:[#allocation12 + $0x18] sm:$0xff]
    %v2985 = vld [vmem:[#allocation12 + $0x20] sm:$0xff]
    %v2986 = vld [vmem:[#allocation12 + $0x28] sm:$0xff]
    %v2987 = vld [vmem:[#allocation12 + $0x30] sm:$0xff]
    %v2988 = vld [vmem:[#allocation12 + $0x38] sm:$0xff]
    %v2989 = vld [vmem:[#allocation12 + $0x40] sm:$0xff]
    %v2990 = vld [vmem:[#allocation12 + $0x48] sm:$0xff]
    %v2991 = vld [vmem:[#allocation12 + $0x50] sm:$0xff]
    %v2992 = vld [vmem:[#allocation12 + $0x58] sm:$0xff]
    %v2993 = vld [vmem:[#allocation12 + $0x60] sm:$0xff]
    %v2994 = vld [vmem:[#allocation12 + $0x68] sm:$0xff]
    %v2995 = vld [vmem:[#allocation12 + $0x70] sm:$0xff]
    %v2996 = vld [vmem:[#allocation12 + $0x78] sm:$0xff]
    %v2997 = vld [vmem:[#allocation12 + $0x80] sm:$0xff]
    %v2998 = vld [vmem:[#allocation12 + $0x88] sm:$0xff]
    %v2999 = vld [vmem:[#allocation12 + $0x90] sm:$0xff]
    %v3000 = vld [vmem:[#allocation12 + $0x98] sm:$0xff]
    %v3001 = vld [vmem:[#allocation12 + $0xa0] sm:$0xff]
    %v3002 = vld [vmem:[#allocation12 + $0xa8] sm:$0xff]
    %v3003 = vld [vmem:[#allocation12 + $0xb0] sm:$0xff]
    %v3004 = vld [vmem:[#allocation12 + $0xb8] sm:$0xff]
    %v3005 = vld [vmem:[#allocation12 + $0xc0] sm:$0xff]
    %v3006 = vld [vmem:[#allocation12 + $0xc8] sm:$0xff]
    %v3007 = vld [vmem:[#allocation12 + $0xd0] sm:$0xff]
    %v3008 = vld [vmem:[#allocation12 + $0xd8] sm:$0xff]
    %v3009 = vld [vmem:[#allocation12 + $0xe0] sm:$0xff]
    %v3010 = vld [vmem:[#allocation12 + $0xe8] sm:$0xff]
    %v3011 = vld [vmem:[#allocation12 + $0xf0] sm:$0xff]
    %v3012 = vld [vmem:[#allocation12 + $0xf8] sm:$0xff]
    %v3045 = vunpack.c.l.b16 %v2981
    %v3046 = vunpack.c.h.b16 %v2981
    %v3047 = vunpack.c.l.b16 %v2982
    %v3048 = vunpack.c.h.b16 %v2982
    %v3049 = vunpack.c.l.b16 %v2983
    %v3050 = vunpack.c.h.b16 %v2983
    %v3051 = vunpack.c.l.b16 %v2984
    %v3052 = vunpack.c.h.b16 %v2984
    %v3053 = vunpack.c.l.b16 %v2985
    %v3054 = vunpack.c.h.b16 %v2985
    %v3055 = vunpack.c.l.b16 %v2986
    %v3056 = vunpack.c.h.b16 %v2986
    %v3057 = vunpack.c.l.b16 %v2987
    %v3058 = vunpack.c.h.b16 %v2987
    %v3059 = vunpack.c.l.b16 %v2988
    %v3060 = vunpack.c.h.b16 %v2988
    %v3061 = vunpack.c.l.b16 %v2989
    %v3062 = vunpack.c.h.b16 %v2989
    %v3063 = vunpack.c.l.b16 %v2990
    %v3064 = vunpack.c.h.b16 %v2990
    %v3065 = vunpack.c.l.b16 %v2991
    %v3066 = vunpack.c.h.b16 %v2991
    %v3067 = vunpack.c.l.b16 %v2992
    %v3068 = vunpack.c.h.b16 %v2992
    %v3069 = vunpack.c.l.b16 %v2993
    %v3070 = vunpack.c.h.b16 %v2993
    %v3071 = vunpack.c.l.b16 %v2994
    %v3072 = vunpack.c.h.b16 %v2994
    %v3073 = vunpack.c.l.b16 %v2995
    %v3074 = vunpack.c.h.b16 %v2995
    %v3075 = vunpack.c.l.b16 %v2996
    %v3076 = vunpack.c.h.b16 %v2996
    %v3077 = vunpack.c.l.b16 %v2997
    %v3078 = vunpack.c.h.b16 %v2997
    %v3079 = vunpack.c.l.b16 %v2998
    %v3080 = vunpack.c.h.b16 %v2998
    %v3081 = vunpack.c.l.b16 %v2999
    %v3082 = vunpack.c.h.b16 %v2999
    %v3083 = vunpack.c.l.b16 %v3000
    %v3084 = vunpack.c.h.b16 %v3000
    %v3085 = vunpack.c.l.b16 %v3001
    %v3086 = vunpack.c.h.b16 %v3001
    %v3087 = vunpack.c.l.b16 %v3002
    %v3088 = vunpack.c.h.b16 %v3002
    %v3089 = vunpack.c.l.b16 %v3003
    %v3090 = vunpack.c.h.b16 %v3003
    %v3091 = vunpack.c.l.b16 %v3004
    %v3092 = vunpack.c.h.b16 %v3004
    %v3093 = vunpack.c.l.b16 %v3005
    %v3094 = vunpack.c.h.b16 %v3005
    %v3095 = vunpack.c.l.b16 %v3006
    %v3096 = vunpack.c.h.b16 %v3006
    %v3097 = vunpack.c.l.b16 %v3007
    %v3098 = vunpack.c.h.b16 %v3007
    %v3099 = vunpack.c.l.b16 %v3008
    %v3100 = vunpack.c.h.b16 %v3008
    %v3101 = vunpack.c.l.b16 %v3009
    %v3102 = vunpack.c.h.b16 %v3009
    %v3103 = vunpack.c.l.b16 %v3010
    %v3104 = vunpack.c.h.b16 %v3010
    %v3105 = vunpack.c.l.b16 %v3011
    %v3106 = vunpack.c.h.b16 %v3011
    %v3107 = vunpack.c.l.b16 %v3012
    %v3108 = vunpack.c.h.b16 %v3012
    %v3109 = vpack.c.b16 %v3049, %v3045
    %v3110 = vpack.c.b16 %v3050, %v3046
    %v3111 = vpack.c.b16 %v3051, %v3047
    %v3112 = vpack.c.b16 %v3052, %v3048
    %v3113 = vpack.c.b16 %v3057, %v3053
    %v3114 = vpack.c.b16 %v3058, %v3054
    %v3115 = vpack.c.b16 %v3059, %v3055
    %v3116 = vpack.c.b16 %v3060, %v3056
    %v3117 = vpack.c.b16 %v3065, %v3061
    %v3118 = vpack.c.b16 %v3066, %v3062
    %v3119 = vpack.c.b16 %v3067, %v3063
    %v3120 = vpack.c.b16 %v3068, %v3064
    %v3121 = vpack.c.b16 %v3073, %v3069
    %v3122 = vpack.c.b16 %v3074, %v3070
    %v3123 = vpack.c.b16 %v3075, %v3071
    %v3124 = vpack.c.b16 %v3076, %v3072
    %v3125 = vpack.c.b16 %v3081, %v3077
    %v3126 = vpack.c.b16 %v3082, %v3078
    %v3127 = vpack.c.b16 %v3083, %v3079
    %v3128 = vpack.c.b16 %v3084, %v3080
    %v3129 = vpack.c.b16 %v3089, %v3085
    %v3130 = vpack.c.b16 %v3090, %v3086
    %v3131 = vpack.c.b16 %v3091, %v3087
    %v3132 = vpack.c.b16 %v3092, %v3088
    %v3133 = vpack.c.b16 %v3097, %v3093
    %v3134 = vpack.c.b16 %v3098, %v3094
    %v3135 = vpack.c.b16 %v3099, %v3095
    %v3136 = vpack.c.b16 %v3100, %v3096
    %v3137 = vpack.c.b16 %v3105, %v3101
    %v3138 = vpack.c.b16 %v3106, %v3102
    %v3139 = vpack.c.b16 %v3107, %v3103
    %v3140 = vpack.c.b16 %v3108, %v3104
    %3173 = vmatpush.bf16.msra.mxu0 %v3137
    %3174 = vmatpush.bf16.msra.mxu0 %v3133
    %3175 = vmatpush.bf16.msra.mxu0 %v3129
    %3176 = vmatpush.bf16.msra.mxu0 %v3125
    %3177 = vmatpush.bf16.msra.mxu0 %v3121
    %3178 = vmatpush.bf16.msra.mxu0 %v3117
    %3179 = vmatpush.bf16.msra.mxu0 %v3113
    %3180 = vmatpush.bf16.msra.mxu0 %v3109
    %3181 = vmatmul.bf16.gmra.mxu0 %v2980
    %v3182 = vpop.f32.mrf.mxu0
    %v3183 = vadd.f32 0.0, %v3182
    %v3184 = vpop.f32.mrf.mxu0
    %3185 = vdwg.mxu0
    %3186 = vmatpush.bf16.msra.mxu0 %v3138
    %3187 = vmatpush.bf16.msra.mxu0 %v3134
    %3188 = vmatpush.bf16.msra.mxu0 %v3130
    %3189 = vmatpush.bf16.msra.mxu0 %v3126
    %3190 = vmatpush.bf16.msra.mxu0 %v3122
    %3191 = vmatpush.bf16.msra.mxu0 %v3118
    %3192 = vmatpush.bf16.msra.mxu0 %v3114
    %3193 = vmatpush.bf16.msra.mxu0 %v3110
    %3194 = vmatmul.bf16.gmra.mxu0 %v2980
    %v3195 = vpop.f32.mrf.mxu0
    %v3196 = vadd.f32 0.0, %v3195
    %v3197 = vpop.f32.mrf.mxu0
    %3198 = vdwg.mxu0
    %3199 = vmatpush.bf16.msra.mxu0 %v3139
    %3200 = vmatpush.bf16.msra.mxu0 %v3135
    %3201 = vmatpush.bf16.msra.mxu0 %v3131
    %3202 = vmatpush.bf16.msra.mxu0 %v3127
    %3203 = vmatpush.bf16.msra.mxu0 %v3123
    %3204 = vmatpush.bf16.msra.mxu0 %v3119
    %3205 = vmatpush.bf16.msra.mxu0 %v3115
    %3206 = vmatpush.bf16.msra.mxu0 %v3111
    %3207 = vmatmul.bf16.gmra.mxu0 %v2980
    %v3208 = vpop.f32.mrf.mxu0
    %v3209 = vadd.f32 0.0, %v3208
    %v3210 = vpop.f32.mrf.mxu0
    %3211 = vdwg.mxu0
    %3212 = vmatpush.bf16.msra.mxu0 %v3140
    %3213 = vmatpush.bf16.msra.mxu0 %v3136
    %3214 = vmatpush.bf16.msra.mxu0 %v3132
    %3215 = vmatpush.bf16.msra.mxu0 %v3128
    %3216 = vmatpush.bf16.msra.mxu0 %v3124
    %3217 = vmatpush.bf16.msra.mxu0 %v3120
    %3218 = vmatpush.bf16.msra.mxu0 %v3116
    %3219 = vmatpush.bf16.msra.mxu0 %v3112
    %3220 = vmatmul.bf16.gmra.mxu0 %v2980
    %v3221 = vpop.f32.mrf.mxu0
    %v3222 = vadd.f32 0.0, %v3221
    %v3223 = vpop.f32.mrf.mxu0
    %3224 = vdwg.mxu0
    %v3225 = vadd.f32 %v2976, %v3183
    %v3226 = vadd.f32 %v2977, %v3196
    %v3227 = vadd.f32 %v2978, %v3209
    %v3228 = vadd.f32 %v2979, %v3222
    %v3229 = vxor.u32 %v3225, 2147483648
    %v3230 = vmul.f32 %v3229, 1.442695
    %v3231 = vpow.pop %v3230
    %v3232 = vadd.f32 %v3231, 1.0
    %v3233 = vrcp.pop %v3232
    %v3234 = vmul.f32 %v3232, %v3233
    %v3235 = vsub.f32 1.0, %v3234
    %v3236 = vmul.f32 %v3233, %v3235
    %v3237 = vadd.f32 %v3233, %v3236
    %vm3238 = vweird.f32 %v3232
    %vm3239 = vweird.f32 %v3233
    %vm3240 = vmor %vm3238, %vm3239
    %v3241 = vsel %vm3240, %v3233, %v3237
    %v3242 = vand.u32 2147483647, %v3232
    %vm3243 = vcmp.eq.f32.partialorder %v3242, 8.507059e+37
    %v3244 = vand.u32 %v3232, 2147483648
    %v3245 = vor.u32 1.1754944e-38, %v3244
    %v3246 = vsel %vm3243, %v3245, %v3241
    %v3247 = vmul.f32 1.0, %v3246
    %v3248 = vxor.u32 %v3226, 2147483648
    %v3249 = vmul.f32 %v3248, 1.442695
    %v3250 = vpow.pop %v3249
    %v3251 = vadd.f32 %v3250, 1.0
    %v3252 = vrcp.pop %v3251
    %v3253 = vmul.f32 %v3251, %v3252
    %v3254 = vsub.f32 1.0, %v3253
    %v3255 = vmul.f32 %v3252, %v3254
    %v3256 = vadd.f32 %v3252, %v3255
    %vm3257 = vweird.f32 %v3251
    %vm3258 = vweird.f32 %v3252
    %vm3259 = vmor %vm3257, %vm3258
    %v3260 = vsel %vm3259, %v3252, %v3256
    %v3261 = vand.u32 2147483647, %v3251
    %vm3262 = vcmp.eq.f32.partialorder %v3261, 8.507059e+37
    %v3263 = vand.u32 %v3251, 2147483648
    %v3264 = vor.u32 1.1754944e-38, %v3263
    %v3265 = vsel %vm3262, %v3264, %v3260
    %v3266 = vmul.f32 1.0, %v3265
    %v3267 = vtanh.pop %v3227
    %v3268 = vxor.u32 %v3228, 2147483648
    %v3269 = vmul.f32 %v3268, 1.442695
    %v3270 = vpow.pop %v3269
    %v3271 = vadd.f32 %v3270, 1.0
    %v3272 = vrcp.pop %v3271
    %v3273 = vmul.f32 %v3271, %v3272
    %v3274 = vsub.f32 1.0, %v3273
    %v3275 = vmul.f32 %v3272, %v3274
    %v3276 = vadd.f32 %v3272, %v3275
    %vm3277 = vweird.f32 %v3271
    %vm3278 = vweird.f32 %v3272
    %vm3279 = vmor %vm3277, %vm3278
    %v3280 = vsel %vm3279, %v3272, %v3276
    %v3281 = vand.u32 2147483647, %v3271
    %vm3282 = vcmp.eq.f32.partialorder %v3281, 8.507059e+37
    %v3283 = vand.u32 %v3271, 2147483648
    %v3284 = vor.u32 1.1754944e-38, %v3283
    %v3285 = vsel %vm3282, %v3284, %v3280
    %v3286 = vmul.f32 1.0, %v3285
    %v3287 = vmul.f32 %v3266, %v2647
    %v3288 = vmul.f32 %v3247, %v3267
    %v3289 = vadd.f32 %v3287, %v3288
    %v3290 = vtanh.pop %v3289
    %v3291 = vmul.f32 %v3286, %v3290
    %s3292 = sadd.s32 %s85, 4
    %s3293 = smul.u32 %s3292, 8
    %s3294 = sadd.s32 %s87, 3
    %s3295 = smul.u32 %s3294, 8
    %s3296 = scalar_lea.vmem [#allocation2], %s3293
    %3297 = vst [vmem:[%s3296] sm:$0xff] %v2974
    %s3298 = scalar_lea.vmem [#allocation3], %s3295
    %3299 = vst [vmem:[%s3298] sm:$0xff] %v3291
    %s3300 = scalar_lea.vmem %s0, 160
    %v3301 = vld [vmem:[%s3300] sm:$0xff]
    %v3302 = vld [vmem:[%s3300 + $0x8] sm:$0xff]
    %v3303 = vld [vmem:[%s3300 + $0x10] sm:$0xff]
    %v3304 = vld [vmem:[%s3300 + $0x18] sm:$0xff]
    %v3305 = vpack.c.bf16 %v2974, %v2974
    %v3306 = vld [vmem:[#allocation10] sm:$0xff]
    %v3307 = vld [vmem:[#allocation10 + $0x8] sm:$0xff]
    %v3308 = vld [vmem:[#allocation10 + $0x10] sm:$0xff]
    %v3309 = vld [vmem:[#allocation10 + $0x18] sm:$0xff]
    %v3310 = vld [vmem:[#allocation10 + $0x20] sm:$0xff]
    %v3311 = vld [vmem:[#allocation10 + $0x28] sm:$0xff]
    %v3312 = vld [vmem:[#allocation10 + $0x30] sm:$0xff]
    %v3313 = vld [vmem:[#allocation10 + $0x38] sm:$0xff]
    %v3314 = vld [vmem:[#allocation10 + $0x40] sm:$0xff]
    %v3315 = vld [vmem:[#allocation10 + $0x48] sm:$0xff]
    %v3316 = vld [vmem:[#allocation10 + $0x50] sm:$0xff]
    %v3317 = vld [vmem:[#allocation10 + $0x58] sm:$0xff]
    %v3318 = vld [vmem:[#allocation10 + $0x60] sm:$0xff]
    %v3319 = vld [vmem:[#allocation10 + $0x68] sm:$0xff]
    %v3320 = vld [vmem:[#allocation10 + $0x70] sm:$0xff]
    %v3321 = vld [vmem:[#allocation10 + $0x78] sm:$0xff]
    %v3322 = vld [vmem:[#allocation10 + $0x80] sm:$0xff]
    %v3323 = vld [vmem:[#allocation10 + $0x88] sm:$0xff]
    %v3324 = vld [vmem:[#allocation10 + $0x90] sm:$0xff]
    %v3325 = vld [vmem:[#allocation10 + $0x98] sm:$0xff]
    %v3326 = vld [vmem:[#allocation10 + $0xa0] sm:$0xff]
    %v3327 = vld [vmem:[#allocation10 + $0xa8] sm:$0xff]
    %v3328 = vld [vmem:[#allocation10 + $0xb0] sm:$0xff]
    %v3329 = vld [vmem:[#allocation10 + $0xb8] sm:$0xff]
    %v3330 = vld [vmem:[#allocation10 + $0xc0] sm:$0xff]
    %v3331 = vld [vmem:[#allocation10 + $0xc8] sm:$0xff]
    %v3332 = vld [vmem:[#allocation10 + $0xd0] sm:$0xff]
    %v3333 = vld [vmem:[#allocation10 + $0xd8] sm:$0xff]
    %v3334 = vld [vmem:[#allocation10 + $0xe0] sm:$0xff]
    %v3335 = vld [vmem:[#allocation10 + $0xe8] sm:$0xff]
    %v3336 = vld [vmem:[#allocation10 + $0xf0] sm:$0xff]
    %v3337 = vld [vmem:[#allocation10 + $0xf8] sm:$0xff]
    %v3370 = vunpack.c.l.b16 %v3306
    %v3371 = vunpack.c.h.b16 %v3306
    %v3372 = vunpack.c.l.b16 %v3307
    %v3373 = vunpack.c.h.b16 %v3307
    %v3374 = vunpack.c.l.b16 %v3308
    %v3375 = vunpack.c.h.b16 %v3308
    %v3376 = vunpack.c.l.b16 %v3309
    %v3377 = vunpack.c.h.b16 %v3309
    %v3378 = vunpack.c.l.b16 %v3310
    %v3379 = vunpack.c.h.b16 %v3310
    %v3380 = vunpack.c.l.b16 %v3311
    %v3381 = vunpack.c.h.b16 %v3311
    %v3382 = vunpack.c.l.b16 %v3312
    %v3383 = vunpack.c.h.b16 %v3312
    %v3384 = vunpack.c.l.b16 %v3313
    %v3385 = vunpack.c.h.b16 %v3313
    %v3386 = vunpack.c.l.b16 %v3314
    %v3387 = vunpack.c.h.b16 %v3314
    %v3388 = vunpack.c.l.b16 %v3315
    %v3389 = vunpack.c.h.b16 %v3315
    %v3390 = vunpack.c.l.b16 %v3316
    %v3391 = vunpack.c.h.b16 %v3316
    %v3392 = vunpack.c.l.b16 %v3317
    %v3393 = vunpack.c.h.b16 %v3317
    %v3394 = vunpack.c.l.b16 %v3318
    %v3395 = vunpack.c.h.b16 %v3318
    %v3396 = vunpack.c.l.b16 %v3319
    %v3397 = vunpack.c.h.b16 %v3319
    %v3398 = vunpack.c.l.b16 %v3320
    %v3399 = vunpack.c.h.b16 %v3320
    %v3400 = vunpack.c.l.b16 %v3321
    %v3401 = vunpack.c.h.b16 %v3321
    %v3402 = vunpack.c.l.b16 %v3322
    %v3403 = vunpack.c.h.b16 %v3322
    %v3404 = vunpack.c.l.b16 %v3323
    %v3405 = vunpack.c.h.b16 %v3323
    %v3406 = vunpack.c.l.b16 %v3324
    %v3407 = vunpack.c.h.b16 %v3324
    %v3408 = vunpack.c.l.b16 %v3325
    %v3409 = vunpack.c.h.b16 %v3325
    %v3410 = vunpack.c.l.b16 %v3326
    %v3411 = vunpack.c.h.b16 %v3326
    %v3412 = vunpack.c.l.b16 %v3327
    %v3413 = vunpack.c.h.b16 %v3327
    %v3414 = vunpack.c.l.b16 %v3328
    %v3415 = vunpack.c.h.b16 %v3328
    %v3416 = vunpack.c.l.b16 %v3329
    %v3417 = vunpack.c.h.b16 %v3329
    %v3418 = vunpack.c.l.b16 %v3330
    %v3419 = vunpack.c.h.b16 %v3330
    %v3420 = vunpack.c.l.b16 %v3331
    %v3421 = vunpack.c.h.b16 %v3331
    %v3422 = vunpack.c.l.b16 %v3332
    %v3423 = vunpack.c.h.b16 %v3332
    %v3424 = vunpack.c.l.b16 %v3333
    %v3425 = vunpack.c.h.b16 %v3333
    %v3426 = vunpack.c.l.b16 %v3334
    %v3427 = vunpack.c.h.b16 %v3334
    %v3428 = vunpack.c.l.b16 %v3335
    %v3429 = vunpack.c.h.b16 %v3335
    %v3430 = vunpack.c.l.b16 %v3336
    %v3431 = vunpack.c.h.b16 %v3336
    %v3432 = vunpack.c.l.b16 %v3337
    %v3433 = vunpack.c.h.b16 %v3337
    %v3434 = vpack.c.b16 %v3374, %v3370
    %v3435 = vpack.c.b16 %v3375, %v3371
    %v3436 = vpack.c.b16 %v3376, %v3372
    %v3437 = vpack.c.b16 %v3377, %v3373
    %v3438 = vpack.c.b16 %v3382, %v3378
    %v3439 = vpack.c.b16 %v3383, %v3379
    %v3440 = vpack.c.b16 %v3384, %v3380
    %v3441 = vpack.c.b16 %v3385, %v3381
    %v3442 = vpack.c.b16 %v3390, %v3386
    %v3443 = vpack.c.b16 %v3391, %v3387
    %v3444 = vpack.c.b16 %v3392, %v3388
    %v3445 = vpack.c.b16 %v3393, %v3389
    %v3446 = vpack.c.b16 %v3398, %v3394
    %v3447 = vpack.c.b16 %v3399, %v3395
    %v3448 = vpack.c.b16 %v3400, %v3396
    %v3449 = vpack.c.b16 %v3401, %v3397
    %v3450 = vpack.c.b16 %v3406, %v3402
    %v3451 = vpack.c.b16 %v3407, %v3403
    %v3452 = vpack.c.b16 %v3408, %v3404
    %v3453 = vpack.c.b16 %v3409, %v3405
    %v3454 = vpack.c.b16 %v3414, %v3410
    %v3455 = vpack.c.b16 %v3415, %v3411
    %v3456 = vpack.c.b16 %v3416, %v3412
    %v3457 = vpack.c.b16 %v3417, %v3413
    %v3458 = vpack.c.b16 %v3422, %v3418
    %v3459 = vpack.c.b16 %v3423, %v3419
    %v3460 = vpack.c.b16 %v3424, %v3420
    %v3461 = vpack.c.b16 %v3425, %v3421
    %v3462 = vpack.c.b16 %v3430, %v3426
    %v3463 = vpack.c.b16 %v3431, %v3427
    %v3464 = vpack.c.b16 %v3432, %v3428
    %v3465 = vpack.c.b16 %v3433, %v3429
    %3498 = vmatpush.bf16.msra.mxu0 %v3462
    %3499 = vmatpush.bf16.msra.mxu0 %v3458
    %3500 = vmatpush.bf16.msra.mxu0 %v3454
    %3501 = vmatpush.bf16.msra.mxu0 %v3450
    %3502 = vmatpush.bf16.msra.mxu0 %v3446
    %3503 = vmatpush.bf16.msra.mxu0 %v3442
    %3504 = vmatpush.bf16.msra.mxu0 %v3438
    %3505 = vmatpush.bf16.msra.mxu0 %v3434
    %3506 = vmatmul.bf16.gmra.mxu0 %v3305
    %v3507 = vpop.f32.mrf.mxu0
    %v3508 = vadd.f32 0.0, %v3507
    %v3509 = vpop.f32.mrf.mxu0
    %3510 = vdwg.mxu0
    %3511 = vmatpush.bf16.msra.mxu0 %v3463
    %3512 = vmatpush.bf16.msra.mxu0 %v3459
    %3513 = vmatpush.bf16.msra.mxu0 %v3455
    %3514 = vmatpush.bf16.msra.mxu0 %v3451
    %3515 = vmatpush.bf16.msra.mxu0 %v3447
    %3516 = vmatpush.bf16.msra.mxu0 %v3443
    %3517 = vmatpush.bf16.msra.mxu0 %v3439
    %3518 = vmatpush.bf16.msra.mxu0 %v3435
    %3519 = vmatmul.bf16.gmra.mxu0 %v3305
    %v3520 = vpop.f32.mrf.mxu0
    %v3521 = vadd.f32 0.0, %v3520
    %v3522 = vpop.f32.mrf.mxu0
    %3523 = vdwg.mxu0
    %3524 = vmatpush.bf16.msra.mxu0 %v3464
    %3525 = vmatpush.bf16.msra.mxu0 %v3460
    %3526 = vmatpush.bf16.msra.mxu0 %v3456
    %3527 = vmatpush.bf16.msra.mxu0 %v3452
    %3528 = vmatpush.bf16.msra.mxu0 %v3448
    %3529 = vmatpush.bf16.msra.mxu0 %v3444
    %3530 = vmatpush.bf16.msra.mxu0 %v3440
    %3531 = vmatpush.bf16.msra.mxu0 %v3436
    %3532 = vmatmul.bf16.gmra.mxu0 %v3305
    %v3533 = vpop.f32.mrf.mxu0
    %v3534 = vadd.f32 0.0, %v3533
    %v3535 = vpop.f32.mrf.mxu0
    %3536 = vdwg.mxu0
    %3537 = vmatpush.bf16.msra.mxu0 %v3465
    %3538 = vmatpush.bf16.msra.mxu0 %v3461
    %3539 = vmatpush.bf16.msra.mxu0 %v3457
    %3540 = vmatpush.bf16.msra.mxu0 %v3453
    %3541 = vmatpush.bf16.msra.mxu0 %v3449
    %3542 = vmatpush.bf16.msra.mxu0 %v3445
    %3543 = vmatpush.bf16.msra.mxu0 %v3441
    %3544 = vmatpush.bf16.msra.mxu0 %v3437
    %3545 = vmatmul.bf16.gmra.mxu0 %v3305
    %v3546 = vpop.f32.mrf.mxu0
    %v3547 = vadd.f32 0.0, %v3546
    %v3548 = vpop.f32.mrf.mxu0
    %3549 = vdwg.mxu0
    %v3550 = vadd.f32 %v3301, %v3508
    %v3551 = vadd.f32 %v3302, %v3521
    %v3552 = vadd.f32 %v3303, %v3534
    %v3553 = vadd.f32 %v3304, %v3547
    %v3554 = vxor.u32 %v3550, 2147483648
    %v3555 = vmul.f32 %v3554, 1.442695
    %v3556 = vpow.pop %v3555
    %v3557 = vadd.f32 %v3556, 1.0
    %v3558 = vrcp.pop %v3557
    %v3559 = vmul.f32 %v3557, %v3558
    %v3560 = vsub.f32 1.0, %v3559
    %v3561 = vmul.f32 %v3558, %v3560
    %v3562 = vadd.f32 %v3558, %v3561
    %vm3563 = vweird.f32 %v3557
    %vm3564 = vweird.f32 %v3558
    %vm3565 = vmor %vm3563, %vm3564
    %v3566 = vsel %vm3565, %v3558, %v3562
    %v3567 = vand.u32 2147483647, %v3557
    %vm3568 = vcmp.eq.f32.partialorder %v3567, 8.507059e+37
    %v3569 = vand.u32 %v3557, 2147483648
    %v3570 = vor.u32 1.1754944e-38, %v3569
    %v3571 = vsel %vm3568, %v3570, %v3566
    %v3572 = vmul.f32 1.0, %v3571
    %v3573 = vxor.u32 %v3551, 2147483648
    %v3574 = vmul.f32 %v3573, 1.442695
    %v3575 = vpow.pop %v3574
    %v3576 = vadd.f32 %v3575, 1.0
    %v3577 = vrcp.pop %v3576
    %v3578 = vmul.f32 %v3576, %v3577
    %v3579 = vsub.f32 1.0, %v3578
    %v3580 = vmul.f32 %v3577, %v3579
    %v3581 = vadd.f32 %v3577, %v3580
    %vm3582 = vweird.f32 %v3576
    %vm3583 = vweird.f32 %v3577
    %vm3584 = vmor %vm3582, %vm3583
    %v3585 = vsel %vm3584, %v3577, %v3581
    %v3586 = vand.u32 2147483647, %v3576
    %vm3587 = vcmp.eq.f32.partialorder %v3586, 8.507059e+37
    %v3588 = vand.u32 %v3576, 2147483648
    %v3589 = vor.u32 1.1754944e-38, %v3588
    %v3590 = vsel %vm3587, %v3589, %v3585
    %v3591 = vmul.f32 1.0, %v3590
    %v3592 = vtanh.pop %v3552
    %v3593 = vxor.u32 %v3553, 2147483648
    %v3594 = vmul.f32 %v3593, 1.442695
    %v3595 = vpow.pop %v3594
    %v3596 = vadd.f32 %v3595, 1.0
    %v3597 = vrcp.pop %v3596
    %v3598 = vmul.f32 %v3596, %v3597
    %v3599 = vsub.f32 1.0, %v3598
    %v3600 = vmul.f32 %v3597, %v3599
    %v3601 = vadd.f32 %v3597, %v3600
    %vm3602 = vweird.f32 %v3596
    %vm3603 = vweird.f32 %v3597
    %vm3604 = vmor %vm3602, %vm3603
    %v3605 = vsel %vm3604, %v3597, %v3601
    %v3606 = vand.u32 2147483647, %v3596
    %vm3607 = vcmp.eq.f32.partialorder %v3606, 8.507059e+37
    %v3608 = vand.u32 %v3596, 2147483648
    %v3609 = vor.u32 1.1754944e-38, %v3608
    %v3610 = vsel %vm3607, %v3609, %v3605
    %v3611 = vmul.f32 1.0, %v3610
    %v3612 = vmul.f32 %v3591, %v2972
    %v3613 = vmul.f32 %v3572, %v3592
    %v3614 = vadd.f32 %v3612, %v3613
    %v3615 = vtanh.pop %v3614
    %v3616 = vmul.f32 %v3611, %v3615
    %s3617 = scalar_lea.vmem [#allocation8], 64
    %v3618 = vld [vmem:[%s3617] sm:$0xff]
    %v3619 = vld [vmem:[%s3617 + $0x8] sm:$0xff]
    %v3620 = vld [vmem:[%s3617 + $0x10] sm:$0xff]
    %v3621 = vld [vmem:[%s3617 + $0x18] sm:$0xff]
    %v3622 = vpack.c.bf16 %v3291, %v3291
    %v3623 = vld [vmem:[#allocation12] sm:$0xff]
    %v3624 = vld [vmem:[#allocation12 + $0x8] sm:$0xff]
    %v3625 = vld [vmem:[#allocation12 + $0x10] sm:$0xff]
    %v3626 = vld [vmem:[#allocation12 + $0x18] sm:$0xff]
    %v3627 = vld [vmem:[#allocation12 + $0x20] sm:$0xff]
    %v3628 = vld [vmem:[#allocation12 + $0x28] sm:$0xff]
    %v3629 = vld [vmem:[#allocation12 + $0x30] sm:$0xff]
    %v3630 = vld [vmem:[#allocation12 + $0x38] sm:$0xff]
    %v3631 = vld [vmem:[#allocation12 + $0x40] sm:$0xff]
    %v3632 = vld [vmem:[#allocation12 + $0x48] sm:$0xff]
    %v3633 = vld [vmem:[#allocation12 + $0x50] sm:$0xff]
    %v3634 = vld [vmem:[#allocation12 + $0x58] sm:$0xff]
    %v3635 = vld [vmem:[#allocation12 + $0x60] sm:$0xff]
    %v3636 = vld [vmem:[#allocation12 + $0x68] sm:$0xff]
    %v3637 = vld [vmem:[#allocation12 + $0x70] sm:$0xff]
    %v3638 = vld [vmem:[#allocation12 + $0x78] sm:$0xff]
    %v3639 = vld [vmem:[#allocation12 + $0x80] sm:$0xff]
    %v3640 = vld [vmem:[#allocation12 + $0x88] sm:$0xff]
    %v3641 = vld [vmem:[#allocation12 + $0x90] sm:$0xff]
    %v3642 = vld [vmem:[#allocation12 + $0x98] sm:$0xff]
    %v3643 = vld [vmem:[#allocation12 + $0xa0] sm:$0xff]
    %v3644 = vld [vmem:[#allocation12 + $0xa8] sm:$0xff]
    %v3645 = vld [vmem:[#allocation12 + $0xb0] sm:$0xff]
    %v3646 = vld [vmem:[#allocation12 + $0xb8] sm:$0xff]
    %v3647 = vld [vmem:[#allocation12 + $0xc0] sm:$0xff]
    %v3648 = vld [vmem:[#allocation12 + $0xc8] sm:$0xff]
    %v3649 = vld [vmem:[#allocation12 + $0xd0] sm:$0xff]
    %v3650 = vld [vmem:[#allocation12 + $0xd8] sm:$0xff]
    %v3651 = vld [vmem:[#allocation12 + $0xe0] sm:$0xff]
    %v3652 = vld [vmem:[#allocation12 + $0xe8] sm:$0xff]
    %v3653 = vld [vmem:[#allocation12 + $0xf0] sm:$0xff]
    %v3654 = vld [vmem:[#allocation12 + $0xf8] sm:$0xff]
    %v3687 = vunpack.c.l.b16 %v3623
    %v3688 = vunpack.c.h.b16 %v3623
    %v3689 = vunpack.c.l.b16 %v3624
    %v3690 = vunpack.c.h.b16 %v3624
    %v3691 = vunpack.c.l.b16 %v3625
    %v3692 = vunpack.c.h.b16 %v3625
    %v3693 = vunpack.c.l.b16 %v3626
    %v3694 = vunpack.c.h.b16 %v3626
    %v3695 = vunpack.c.l.b16 %v3627
    %v3696 = vunpack.c.h.b16 %v3627
    %v3697 = vunpack.c.l.b16 %v3628
    %v3698 = vunpack.c.h.b16 %v3628
    %v3699 = vunpack.c.l.b16 %v3629
    %v3700 = vunpack.c.h.b16 %v3629
    %v3701 = vunpack.c.l.b16 %v3630
    %v3702 = vunpack.c.h.b16 %v3630
    %v3703 = vunpack.c.l.b16 %v3631
    %v3704 = vunpack.c.h.b16 %v3631
    %v3705 = vunpack.c.l.b16 %v3632
    %v3706 = vunpack.c.h.b16 %v3632
    %v3707 = vunpack.c.l.b16 %v3633
    %v3708 = vunpack.c.h.b16 %v3633
    %v3709 = vunpack.c.l.b16 %v3634
    %v3710 = vunpack.c.h.b16 %v3634
    %v3711 = vunpack.c.l.b16 %v3635
    %v3712 = vunpack.c.h.b16 %v3635
    %v3713 = vunpack.c.l.b16 %v3636
    %v3714 = vunpack.c.h.b16 %v3636
    %v3715 = vunpack.c.l.b16 %v3637
    %v3716 = vunpack.c.h.b16 %v3637
    %v3717 = vunpack.c.l.b16 %v3638
    %v3718 = vunpack.c.h.b16 %v3638
    %v3719 = vunpack.c.l.b16 %v3639
    %v3720 = vunpack.c.h.b16 %v3639
    %v3721 = vunpack.c.l.b16 %v3640
    %v3722 = vunpack.c.h.b16 %v3640
    %v3723 = vunpack.c.l.b16 %v3641
    %v3724 = vunpack.c.h.b16 %v3641
    %v3725 = vunpack.c.l.b16 %v3642
    %v3726 = vunpack.c.h.b16 %v3642
    %v3727 = vunpack.c.l.b16 %v3643
    %v3728 = vunpack.c.h.b16 %v3643
    %v3729 = vunpack.c.l.b16 %v3644
    %v3730 = vunpack.c.h.b16 %v3644
    %v3731 = vunpack.c.l.b16 %v3645
    %v3732 = vunpack.c.h.b16 %v3645
    %v3733 = vunpack.c.l.b16 %v3646
    %v3734 = vunpack.c.h.b16 %v3646
    %v3735 = vunpack.c.l.b16 %v3647
    %v3736 = vunpack.c.h.b16 %v3647
    %v3737 = vunpack.c.l.b16 %v3648
    %v3738 = vunpack.c.h.b16 %v3648
    %v3739 = vunpack.c.l.b16 %v3649
    %v3740 = vunpack.c.h.b16 %v3649
    %v3741 = vunpack.c.l.b16 %v3650
    %v3742 = vunpack.c.h.b16 %v3650
    %v3743 = vunpack.c.l.b16 %v3651
    %v3744 = vunpack.c.h.b16 %v3651
    %v3745 = vunpack.c.l.b16 %v3652
    %v3746 = vunpack.c.h.b16 %v3652
    %v3747 = vunpack.c.l.b16 %v3653
    %v3748 = vunpack.c.h.b16 %v3653
    %v3749 = vunpack.c.l.b16 %v3654
    %v3750 = vunpack.c.h.b16 %v3654
    %v3751 = vpack.c.b16 %v3691, %v3687
    %v3752 = vpack.c.b16 %v3692, %v3688
    %v3753 = vpack.c.b16 %v3693, %v3689
    %v3754 = vpack.c.b16 %v3694, %v3690
    %v3755 = vpack.c.b16 %v3699, %v3695
    %v3756 = vpack.c.b16 %v3700, %v3696
    %v3757 = vpack.c.b16 %v3701, %v3697
    %v3758 = vpack.c.b16 %v3702, %v3698
    %v3759 = vpack.c.b16 %v3707, %v3703
    %v3760 = vpack.c.b16 %v3708, %v3704
    %v3761 = vpack.c.b16 %v3709, %v3705
    %v3762 = vpack.c.b16 %v3710, %v3706
    %v3763 = vpack.c.b16 %v3715, %v3711
    %v3764 = vpack.c.b16 %v3716, %v3712
    %v3765 = vpack.c.b16 %v3717, %v3713
    %v3766 = vpack.c.b16 %v3718, %v3714
    %v3767 = vpack.c.b16 %v3723, %v3719
    %v3768 = vpack.c.b16 %v3724, %v3720
    %v3769 = vpack.c.b16 %v3725, %v3721
    %v3770 = vpack.c.b16 %v3726, %v3722
    %v3771 = vpack.c.b16 %v3731, %v3727
    %v3772 = vpack.c.b16 %v3732, %v3728
    %v3773 = vpack.c.b16 %v3733, %v3729
    %v3774 = vpack.c.b16 %v3734, %v3730
    %v3775 = vpack.c.b16 %v3739, %v3735
    %v3776 = vpack.c.b16 %v3740, %v3736
    %v3777 = vpack.c.b16 %v3741, %v3737
    %v3778 = vpack.c.b16 %v3742, %v3738
    %v3779 = vpack.c.b16 %v3747, %v3743
    %v3780 = vpack.c.b16 %v3748, %v3744
    %v3781 = vpack.c.b16 %v3749, %v3745
    %v3782 = vpack.c.b16 %v3750, %v3746
    %3815 = vmatpush.bf16.msra.mxu0 %v3779
    %3816 = vmatpush.bf16.msra.mxu0 %v3775
    %3817 = vmatpush.bf16.msra.mxu0 %v3771
    %3818 = vmatpush.bf16.msra.mxu0 %v3767
    %3819 = vmatpush.bf16.msra.mxu0 %v3763
    %3820 = vmatpush.bf16.msra.mxu0 %v3759
    %3821 = vmatpush.bf16.msra.mxu0 %v3755
    %3822 = vmatpush.bf16.msra.mxu0 %v3751
    %3823 = vmatmul.bf16.gmra.mxu0 %v3622
    %v3824 = vpop.f32.mrf.mxu0
    %v3825 = vadd.f32 0.0, %v3824
    %v3826 = vpop.f32.mrf.mxu0
    %3827 = vdwg.mxu0
    %3828 = vmatpush.bf16.msra.mxu0 %v3780
    %3829 = vmatpush.bf16.msra.mxu0 %v3776
    %3830 = vmatpush.bf16.msra.mxu0 %v3772
    %3831 = vmatpush.bf16.msra.mxu0 %v3768
    %3832 = vmatpush.bf16.msra.mxu0 %v3764
    %3833 = vmatpush.bf16.msra.mxu0 %v3760
    %3834 = vmatpush.bf16.msra.mxu0 %v3756
    %3835 = vmatpush.bf16.msra.mxu0 %v3752
    %3836 = vmatmul.bf16.gmra.mxu0 %v3622
    %v3837 = vpop.f32.mrf.mxu0
    %v3838 = vadd.f32 0.0, %v3837
    %v3839 = vpop.f32.mrf.mxu0
    %3840 = vdwg.mxu0
    %3841 = vmatpush.bf16.msra.mxu0 %v3781
    %3842 = vmatpush.bf16.msra.mxu0 %v3777
    %3843 = vmatpush.bf16.msra.mxu0 %v3773
    %3844 = vmatpush.bf16.msra.mxu0 %v3769
    %3845 = vmatpush.bf16.msra.mxu0 %v3765
    %3846 = vmatpush.bf16.msra.mxu0 %v3761
    %3847 = vmatpush.bf16.msra.mxu0 %v3757
    %3848 = vmatpush.bf16.msra.mxu0 %v3753
    %3849 = vmatmul.bf16.gmra.mxu0 %v3622
    %v3850 = vpop.f32.mrf.mxu0
    %v3851 = vadd.f32 0.0, %v3850
    %v3852 = vpop.f32.mrf.mxu0
    %3853 = vdwg.mxu0
    %3854 = vmatpush.bf16.msra.mxu0 %v3782
    %3855 = vmatpush.bf16.msra.mxu0 %v3778
    %3856 = vmatpush.bf16.msra.mxu0 %v3774
    %3857 = vmatpush.bf16.msra.mxu0 %v3770
    %3858 = vmatpush.bf16.msra.mxu0 %v3766
    %3859 = vmatpush.bf16.msra.mxu0 %v3762
    %3860 = vmatpush.bf16.msra.mxu0 %v3758
    %3861 = vmatpush.bf16.msra.mxu0 %v3754
    %3862 = vmatmul.bf16.gmra.mxu0 %v3622
    %v3863 = vpop.f32.mrf.mxu0
    %v3864 = vadd.f32 0.0, %v3863
    %v3865 = vpop.f32.mrf.mxu0
    %3866 = vdwg.mxu0
    %v3867 = vadd.f32 %v3618, %v3825
    %v3868 = vadd.f32 %v3619, %v3838
    %v3869 = vadd.f32 %v3620, %v3851
    %v3870 = vadd.f32 %v3621, %v3864
    %v3871 = vxor.u32 %v3867, 2147483648
    %v3872 = vmul.f32 %v3871, 1.442695
    %v3873 = vpow.pop %v3872
    %v3874 = vadd.f32 %v3873, 1.0
    %v3875 = vrcp.pop %v3874
    %v3876 = vmul.f32 %v3874, %v3875
    %v3877 = vsub.f32 1.0, %v3876
    %v3878 = vmul.f32 %v3875, %v3877
    %v3879 = vadd.f32 %v3875, %v3878
    %vm3880 = vweird.f32 %v3874
    %vm3881 = vweird.f32 %v3875
    %vm3882 = vmor %vm3880, %vm3881
    %v3883 = vsel %vm3882, %v3875, %v3879
    %v3884 = vand.u32 2147483647, %v3874
    %vm3885 = vcmp.eq.f32.partialorder %v3884, 8.507059e+37
    %v3886 = vand.u32 %v3874, 2147483648
    %v3887 = vor.u32 1.1754944e-38, %v3886
    %v3888 = vsel %vm3885, %v3887, %v3883
    %v3889 = vmul.f32 1.0, %v3888
    %v3890 = vxor.u32 %v3868, 2147483648
    %v3891 = vmul.f32 %v3890, 1.442695
    %v3892 = vpow.pop %v3891
    %v3893 = vadd.f32 %v3892, 1.0
    %v3894 = vrcp.pop %v3893
    %v3895 = vmul.f32 %v3893, %v3894
    %v3896 = vsub.f32 1.0, %v3895
    %v3897 = vmul.f32 %v3894, %v3896
    %v3898 = vadd.f32 %v3894, %v3897
    %vm3899 = vweird.f32 %v3893
    %vm3900 = vweird.f32 %v3894
    %vm3901 = vmor %vm3899, %vm3900
    %v3902 = vsel %vm3901, %v3894, %v3898
    %v3903 = vand.u32 2147483647, %v3893
    %vm3904 = vcmp.eq.f32.partialorder %v3903, 8.507059e+37
    %v3905 = vand.u32 %v3893, 2147483648
    %v3906 = vor.u32 1.1754944e-38, %v3905
    %v3907 = vsel %vm3904, %v3906, %v3902
    %v3908 = vmul.f32 1.0, %v3907
    %v3909 = vtanh.pop %v3869
    %v3910 = vxor.u32 %v3870, 2147483648
    %v3911 = vmul.f32 %v3910, 1.442695
    %v3912 = vpow.pop %v3911
    %v3913 = vadd.f32 %v3912, 1.0
    %v3914 = vrcp.pop %v3913
    %v3915 = vmul.f32 %v3913, %v3914
    %v3916 = vsub.f32 1.0, %v3915
    %v3917 = vmul.f32 %v3914, %v3916
    %v3918 = vadd.f32 %v3914, %v3917
    %vm3919 = vweird.f32 %v3913
    %vm3920 = vweird.f32 %v3914
    %vm3921 = vmor %vm3919, %vm3920
    %v3922 = vsel %vm3921, %v3914, %v3918
    %v3923 = vand.u32 2147483647, %v3913
    %vm3924 = vcmp.eq.f32.partialorder %v3923, 8.507059e+37
    %v3925 = vand.u32 %v3913, 2147483648
    %v3926 = vor.u32 1.1754944e-38, %v3925
    %v3927 = vsel %vm3924, %v3926, %v3922
    %v3928 = vmul.f32 1.0, %v3927
    %v3929 = vmul.f32 %v3908, %v3289
    %v3930 = vmul.f32 %v3889, %v3909
    %v3931 = vadd.f32 %v3929, %v3930
    %v3932 = vtanh.pop %v3931
    %v3933 = vmul.f32 %v3928, %v3932
    %s3934 = sadd.s32 %s85, 5
    %s3935 = smul.u32 %s3934, 8
    %s3936 = sadd.s32 %s87, 2
    %s3937 = smul.u32 %s3936, 8
    %s3938 = scalar_lea.vmem [#allocation2], %s3935
    %3939 = vst [vmem:[%s3938] sm:$0xff] %v3616
    %s3940 = scalar_lea.vmem [#allocation3], %s3937
    %3941 = vst [vmem:[%s3940] sm:$0xff] %v3933
    %s3942 = scalar_lea.vmem %s0, 192
    %v3943 = vld [vmem:[%s3942] sm:$0xff]
    %v3944 = vld [vmem:[%s3942 + $0x8] sm:$0xff]
    %v3945 = vld [vmem:[%s3942 + $0x10] sm:$0xff]
    %v3946 = vld [vmem:[%s3942 + $0x18] sm:$0xff]
    %v3947 = vpack.c.bf16 %v3616, %v3616
    %v3948 = vld [vmem:[#allocation10] sm:$0xff]
    %v3949 = vld [vmem:[#allocation10 + $0x8] sm:$0xff]
    %v3950 = vld [vmem:[#allocation10 + $0x10] sm:$0xff]
    %v3951 = vld [vmem:[#allocation10 + $0x18] sm:$0xff]
    %v3952 = vld [vmem:[#allocation10 + $0x20] sm:$0xff]
    %v3953 = vld [vmem:[#allocation10 + $0x28] sm:$0xff]
    %v3954 = vld [vmem:[#allocation10 + $0x30] sm:$0xff]
    %v3955 = vld [vmem:[#allocation10 + $0x38] sm:$0xff]
    %v3956 = vld [vmem:[#allocation10 + $0x40] sm:$0xff]
    %v3957 = vld [vmem:[#allocation10 + $0x48] sm:$0xff]
    %v3958 = vld [vmem:[#allocation10 + $0x50] sm:$0xff]
    %v3959 = vld [vmem:[#allocation10 + $0x58] sm:$0xff]
    %v3960 = vld [vmem:[#allocation10 + $0x60] sm:$0xff]
    %v3961 = vld [vmem:[#allocation10 + $0x68] sm:$0xff]
    %v3962 = vld [vmem:[#allocation10 + $0x70] sm:$0xff]
    %v3963 = vld [vmem:[#allocation10 + $0x78] sm:$0xff]
    %v3964 = vld [vmem:[#allocation10 + $0x80] sm:$0xff]
    %v3965 = vld [vmem:[#allocation10 + $0x88] sm:$0xff]
    %v3966 = vld [vmem:[#allocation10 + $0x90] sm:$0xff]
    %v3967 = vld [vmem:[#allocation10 + $0x98] sm:$0xff]
    %v3968 = vld [vmem:[#allocation10 + $0xa0] sm:$0xff]
    %v3969 = vld [vmem:[#allocation10 + $0xa8] sm:$0xff]
    %v3970 = vld [vmem:[#allocation10 + $0xb0] sm:$0xff]
    %v3971 = vld [vmem:[#allocation10 + $0xb8] sm:$0xff]
    %v3972 = vld [vmem:[#allocation10 + $0xc0] sm:$0xff]
    %v3973 = vld [vmem:[#allocation10 + $0xc8] sm:$0xff]
    %v3974 = vld [vmem:[#allocation10 + $0xd0] sm:$0xff]
    %v3975 = vld [vmem:[#allocation10 + $0xd8] sm:$0xff]
    %v3976 = vld [vmem:[#allocation10 + $0xe0] sm:$0xff]
    %v3977 = vld [vmem:[#allocation10 + $0xe8] sm:$0xff]
    %v3978 = vld [vmem:[#allocation10 + $0xf0] sm:$0xff]
    %v3979 = vld [vmem:[#allocation10 + $0xf8] sm:$0xff]
    %v4012 = vunpack.c.l.b16 %v3948
    %v4013 = vunpack.c.h.b16 %v3948
    %v4014 = vunpack.c.l.b16 %v3949
    %v4015 = vunpack.c.h.b16 %v3949
    %v4016 = vunpack.c.l.b16 %v3950
    %v4017 = vunpack.c.h.b16 %v3950
    %v4018 = vunpack.c.l.b16 %v3951
    %v4019 = vunpack.c.h.b16 %v3951
    %v4020 = vunpack.c.l.b16 %v3952
    %v4021 = vunpack.c.h.b16 %v3952
    %v4022 = vunpack.c.l.b16 %v3953
    %v4023 = vunpack.c.h.b16 %v3953
    %v4024 = vunpack.c.l.b16 %v3954
    %v4025 = vunpack.c.h.b16 %v3954
    %v4026 = vunpack.c.l.b16 %v3955
    %v4027 = vunpack.c.h.b16 %v3955
    %v4028 = vunpack.c.l.b16 %v3956
    %v4029 = vunpack.c.h.b16 %v3956
    %v4030 = vunpack.c.l.b16 %v3957
    %v4031 = vunpack.c.h.b16 %v3957
    %v4032 = vunpack.c.l.b16 %v3958
    %v4033 = vunpack.c.h.b16 %v3958
    %v4034 = vunpack.c.l.b16 %v3959
    %v4035 = vunpack.c.h.b16 %v3959
    %v4036 = vunpack.c.l.b16 %v3960
    %v4037 = vunpack.c.h.b16 %v3960
    %v4038 = vunpack.c.l.b16 %v3961
    %v4039 = vunpack.c.h.b16 %v3961
    %v4040 = vunpack.c.l.b16 %v3962
    %v4041 = vunpack.c.h.b16 %v3962
    %v4042 = vunpack.c.l.b16 %v3963
    %v4043 = vunpack.c.h.b16 %v3963
    %v4044 = vunpack.c.l.b16 %v3964
    %v4045 = vunpack.c.h.b16 %v3964
    %v4046 = vunpack.c.l.b16 %v3965
    %v4047 = vunpack.c.h.b16 %v3965
    %v4048 = vunpack.c.l.b16 %v3966
    %v4049 = vunpack.c.h.b16 %v3966
    %v4050 = vunpack.c.l.b16 %v3967
    %v4051 = vunpack.c.h.b16 %v3967
    %v4052 = vunpack.c.l.b16 %v3968
    %v4053 = vunpack.c.h.b16 %v3968
    %v4054 = vunpack.c.l.b16 %v3969
    %v4055 = vunpack.c.h.b16 %v3969
    %v4056 = vunpack.c.l.b16 %v3970
    %v4057 = vunpack.c.h.b16 %v3970
    %v4058 = vunpack.c.l.b16 %v3971
    %v4059 = vunpack.c.h.b16 %v3971
    %v4060 = vunpack.c.l.b16 %v3972
    %v4061 = vunpack.c.h.b16 %v3972
    %v4062 = vunpack.c.l.b16 %v3973
    %v4063 = vunpack.c.h.b16 %v3973
    %v4064 = vunpack.c.l.b16 %v3974
    %v4065 = vunpack.c.h.b16 %v3974
    %v4066 = vunpack.c.l.b16 %v3975
    %v4067 = vunpack.c.h.b16 %v3975
    %v4068 = vunpack.c.l.b16 %v3976
    %v4069 = vunpack.c.h.b16 %v3976
    %v4070 = vunpack.c.l.b16 %v3977
    %v4071 = vunpack.c.h.b16 %v3977
    %v4072 = vunpack.c.l.b16 %v3978
    %v4073 = vunpack.c.h.b16 %v3978
    %v4074 = vunpack.c.l.b16 %v3979
    %v4075 = vunpack.c.h.b16 %v3979
    %v4076 = vpack.c.b16 %v4016, %v4012
    %v4077 = vpack.c.b16 %v4017, %v4013
    %v4078 = vpack.c.b16 %v4018, %v4014
    %v4079 = vpack.c.b16 %v4019, %v4015
    %v4080 = vpack.c.b16 %v4024, %v4020
    %v4081 = vpack.c.b16 %v4025, %v4021
    %v4082 = vpack.c.b16 %v4026, %v4022
    %v4083 = vpack.c.b16 %v4027, %v4023
    %v4084 = vpack.c.b16 %v4032, %v4028
    %v4085 = vpack.c.b16 %v4033, %v4029
    %v4086 = vpack.c.b16 %v4034, %v4030
    %v4087 = vpack.c.b16 %v4035, %v4031
    %v4088 = vpack.c.b16 %v4040, %v4036
    %v4089 = vpack.c.b16 %v4041, %v4037
    %v4090 = vpack.c.b16 %v4042, %v4038
    %v4091 = vpack.c.b16 %v4043, %v4039
    %v4092 = vpack.c.b16 %v4048, %v4044
    %v4093 = vpack.c.b16 %v4049, %v4045
    %v4094 = vpack.c.b16 %v4050, %v4046
    %v4095 = vpack.c.b16 %v4051, %v4047
    %v4096 = vpack.c.b16 %v4056, %v4052
    %v4097 = vpack.c.b16 %v4057, %v4053
    %v4098 = vpack.c.b16 %v4058, %v4054
    %v4099 = vpack.c.b16 %v4059, %v4055
    %v4100 = vpack.c.b16 %v4064, %v4060
    %v4101 = vpack.c.b16 %v4065, %v4061
    %v4102 = vpack.c.b16 %v4066, %v4062
    %v4103 = vpack.c.b16 %v4067, %v4063
    %v4104 = vpack.c.b16 %v4072, %v4068
    %v4105 = vpack.c.b16 %v4073, %v4069
    %v4106 = vpack.c.b16 %v4074, %v4070
    %v4107 = vpack.c.b16 %v4075, %v4071
    %4140 = vmatpush.bf16.msra.mxu0 %v4104
    %4141 = vmatpush.bf16.msra.mxu0 %v4100
    %4142 = vmatpush.bf16.msra.mxu0 %v4096
    %4143 = vmatpush.bf16.msra.mxu0 %v4092
    %4144 = vmatpush.bf16.msra.mxu0 %v4088
    %4145 = vmatpush.bf16.msra.mxu0 %v4084
    %4146 = vmatpush.bf16.msra.mxu0 %v4080
    %4147 = vmatpush.bf16.msra.mxu0 %v4076
    %4148 = vmatmul.bf16.gmra.mxu0 %v3947
    %v4149 = vpop.f32.mrf.mxu0
    %v4150 = vadd.f32 0.0, %v4149
    %v4151 = vpop.f32.mrf.mxu0
    %4152 = vdwg.mxu0
    %4153 = vmatpush.bf16.msra.mxu0 %v4105
    %4154 = vmatpush.bf16.msra.mxu0 %v4101
    %4155 = vmatpush.bf16.msra.mxu0 %v4097
    %4156 = vmatpush.bf16.msra.mxu0 %v4093
    %4157 = vmatpush.bf16.msra.mxu0 %v4089
    %4158 = vmatpush.bf16.msra.mxu0 %v4085
    %4159 = vmatpush.bf16.msra.mxu0 %v4081
    %4160 = vmatpush.bf16.msra.mxu0 %v4077
    %4161 = vmatmul.bf16.gmra.mxu0 %v3947
    %v4162 = vpop.f32.mrf.mxu0
    %v4163 = vadd.f32 0.0, %v4162
    %v4164 = vpop.f32.mrf.mxu0
    %4165 = vdwg.mxu0
    %4166 = vmatpush.bf16.msra.mxu0 %v4106
    %4167 = vmatpush.bf16.msra.mxu0 %v4102
    %4168 = vmatpush.bf16.msra.mxu0 %v4098
    %4169 = vmatpush.bf16.msra.mxu0 %v4094
    %4170 = vmatpush.bf16.msra.mxu0 %v4090
    %4171 = vmatpush.bf16.msra.mxu0 %v4086
    %4172 = vmatpush.bf16.msra.mxu0 %v4082
    %4173 = vmatpush.bf16.msra.mxu0 %v4078
    %4174 = vmatmul.bf16.gmra.mxu0 %v3947
    %v4175 = vpop.f32.mrf.mxu0
    %v4176 = vadd.f32 0.0, %v4175
    %v4177 = vpop.f32.mrf.mxu0
    %4178 = vdwg.mxu0
    %4179 = vmatpush.bf16.msra.mxu0 %v4107
    %4180 = vmatpush.bf16.msra.mxu0 %v4103
    %4181 = vmatpush.bf16.msra.mxu0 %v4099
    %4182 = vmatpush.bf16.msra.mxu0 %v4095
    %4183 = vmatpush.bf16.msra.mxu0 %v4091
    %4184 = vmatpush.bf16.msra.mxu0 %v4087
    %4185 = vmatpush.bf16.msra.mxu0 %v4083
    %4186 = vmatpush.bf16.msra.mxu0 %v4079
    %4187 = vmatmul.bf16.gmra.mxu0 %v3947
    %v4188 = vpop.f32.mrf.mxu0
    %v4189 = vadd.f32 0.0, %v4188
    %v4190 = vpop.f32.mrf.mxu0
    %4191 = vdwg.mxu0
    %v4192 = vadd.f32 %v3943, %v4150
    %v4193 = vadd.f32 %v3944, %v4163
    %v4194 = vadd.f32 %v3945, %v4176
    %v4195 = vadd.f32 %v3946, %v4189
    %v4196 = vxor.u32 %v4192, 2147483648
    %v4197 = vmul.f32 %v4196, 1.442695
    %v4198 = vpow.pop %v4197
    %v4199 = vadd.f32 %v4198, 1.0
    %v4200 = vrcp.pop %v4199
    %v4201 = vmul.f32 %v4199, %v4200
    %v4202 = vsub.f32 1.0, %v4201
    %v4203 = vmul.f32 %v4200, %v4202
    %v4204 = vadd.f32 %v4200, %v4203
    %vm4205 = vweird.f32 %v4199
    %vm4206 = vweird.f32 %v4200
    %vm4207 = vmor %vm4205, %vm4206
    %v4208 = vsel %vm4207, %v4200, %v4204
    %v4209 = vand.u32 2147483647, %v4199
    %vm4210 = vcmp.eq.f32.partialorder %v4209, 8.507059e+37
    %v4211 = vand.u32 %v4199, 2147483648
    %v4212 = vor.u32 1.1754944e-38, %v4211
    %v4213 = vsel %vm4210, %v4212, %v4208
    %v4214 = vmul.f32 1.0, %v4213
    %v4215 = vxor.u32 %v4193, 2147483648
    %v4216 = vmul.f32 %v4215, 1.442695
    %v4217 = vpow.pop %v4216
    %v4218 = vadd.f32 %v4217, 1.0
    %v4219 = vrcp.pop %v4218
    %v4220 = vmul.f32 %v4218, %v4219
    %v4221 = vsub.f32 1.0, %v4220
    %v4222 = vmul.f32 %v4219, %v4221
    %v4223 = vadd.f32 %v4219, %v4222
    %vm4224 = vweird.f32 %v4218
    %vm4225 = vweird.f32 %v4219
    %vm4226 = vmor %vm4224, %vm4225
    %v4227 = vsel %vm4226, %v4219, %v4223
    %v4228 = vand.u32 2147483647, %v4218
    %vm4229 = vcmp.eq.f32.partialorder %v4228, 8.507059e+37
    %v4230 = vand.u32 %v4218, 2147483648
    %v4231 = vor.u32 1.1754944e-38, %v4230
    %v4232 = vsel %vm4229, %v4231, %v4227
    %v4233 = vmul.f32 1.0, %v4232
    %v4234 = vtanh.pop %v4194
    %v4235 = vxor.u32 %v4195, 2147483648
    %v4236 = vmul.f32 %v4235, 1.442695
    %v4237 = vpow.pop %v4236
    %v4238 = vadd.f32 %v4237, 1.0
    %v4239 = vrcp.pop %v4238
    %v4240 = vmul.f32 %v4238, %v4239
    %v4241 = vsub.f32 1.0, %v4240
    %v4242 = vmul.f32 %v4239, %v4241
    %v4243 = vadd.f32 %v4239, %v4242
    %vm4244 = vweird.f32 %v4238
    %vm4245 = vweird.f32 %v4239
    %vm4246 = vmor %vm4244, %vm4245
    %v4247 = vsel %vm4246, %v4239, %v4243
    %v4248 = vand.u32 2147483647, %v4238
    %vm4249 = vcmp.eq.f32.partialorder %v4248, 8.507059e+37
    %v4250 = vand.u32 %v4238, 2147483648
    %v4251 = vor.u32 1.1754944e-38, %v4250
    %v4252 = vsel %vm4249, %v4251, %v4247
    %v4253 = vmul.f32 1.0, %v4252
    %v4254 = vmul.f32 %v4233, %v3614
    %v4255 = vmul.f32 %v4214, %v4234
    %v4256 = vadd.f32 %v4254, %v4255
    %v4257 = vtanh.pop %v4256
    %v4258 = vmul.f32 %v4253, %v4257
    %s4259 = scalar_lea.vmem [#allocation8], 32
    %v4260 = vld [vmem:[%s4259] sm:$0xff]
    %v4261 = vld [vmem:[%s4259 + $0x8] sm:$0xff]
    %v4262 = vld [vmem:[%s4259 + $0x10] sm:$0xff]
    %v4263 = vld [vmem:[%s4259 + $0x18] sm:$0xff]
    %v4264 = vpack.c.bf16 %v3933, %v3933
    %v4265 = vld [vmem:[#allocation12] sm:$0xff]
    %v4266 = vld [vmem:[#allocation12 + $0x8] sm:$0xff]
    %v4267 = vld [vmem:[#allocation12 + $0x10] sm:$0xff]
    %v4268 = vld [vmem:[#allocation12 + $0x18] sm:$0xff]
    %v4269 = vld [vmem:[#allocation12 + $0x20] sm:$0xff]
    %v4270 = vld [vmem:[#allocation12 + $0x28] sm:$0xff]
    %v4271 = vld [vmem:[#allocation12 + $0x30] sm:$0xff]
    %v4272 = vld [vmem:[#allocation12 + $0x38] sm:$0xff]
    %v4273 = vld [vmem:[#allocation12 + $0x40] sm:$0xff]
    %v4274 = vld [vmem:[#allocation12 + $0x48] sm:$0xff]
    %v4275 = vld [vmem:[#allocation12 + $0x50] sm:$0xff]
    %v4276 = vld [vmem:[#allocation12 + $0x58] sm:$0xff]
    %v4277 = vld [vmem:[#allocation12 + $0x60] sm:$0xff]
    %v4278 = vld [vmem:[#allocation12 + $0x68] sm:$0xff]
    %v4279 = vld [vmem:[#allocation12 + $0x70] sm:$0xff]
    %v4280 = vld [vmem:[#allocation12 + $0x78] sm:$0xff]
    %v4281 = vld [vmem:[#allocation12 + $0x80] sm:$0xff]
    %v4282 = vld [vmem:[#allocation12 + $0x88] sm:$0xff]
    %v4283 = vld [vmem:[#allocation12 + $0x90] sm:$0xff]
    %v4284 = vld [vmem:[#allocation12 + $0x98] sm:$0xff]
    %v4285 = vld [vmem:[#allocation12 + $0xa0] sm:$0xff]
    %v4286 = vld [vmem:[#allocation12 + $0xa8] sm:$0xff]
    %v4287 = vld [vmem:[#allocation12 + $0xb0] sm:$0xff]
    %v4288 = vld [vmem:[#allocation12 + $0xb8] sm:$0xff]
    %v4289 = vld [vmem:[#allocation12 + $0xc0] sm:$0xff]
    %v4290 = vld [vmem:[#allocation12 + $0xc8] sm:$0xff]
    %v4291 = vld [vmem:[#allocation12 + $0xd0] sm:$0xff]
    %v4292 = vld [vmem:[#allocation12 + $0xd8] sm:$0xff]
    %v4293 = vld [vmem:[#allocation12 + $0xe0] sm:$0xff]
    %v4294 = vld [vmem:[#allocation12 + $0xe8] sm:$0xff]
    %v4295 = vld [vmem:[#allocation12 + $0xf0] sm:$0xff]
    %v4296 = vld [vmem:[#allocation12 + $0xf8] sm:$0xff]
    %v4329 = vunpack.c.l.b16 %v4265
    %v4330 = vunpack.c.h.b16 %v4265
    %v4331 = vunpack.c.l.b16 %v4266
    %v4332 = vunpack.c.h.b16 %v4266
    %v4333 = vunpack.c.l.b16 %v4267
    %v4334 = vunpack.c.h.b16 %v4267
    %v4335 = vunpack.c.l.b16 %v4268
    %v4336 = vunpack.c.h.b16 %v4268
    %v4337 = vunpack.c.l.b16 %v4269
    %v4338 = vunpack.c.h.b16 %v4269
    %v4339 = vunpack.c.l.b16 %v4270
    %v4340 = vunpack.c.h.b16 %v4270
    %v4341 = vunpack.c.l.b16 %v4271
    %v4342 = vunpack.c.h.b16 %v4271
    %v4343 = vunpack.c.l.b16 %v4272
    %v4344 = vunpack.c.h.b16 %v4272
    %v4345 = vunpack.c.l.b16 %v4273
    %v4346 = vunpack.c.h.b16 %v4273
    %v4347 = vunpack.c.l.b16 %v4274
    %v4348 = vunpack.c.h.b16 %v4274
    %v4349 = vunpack.c.l.b16 %v4275
    %v4350 = vunpack.c.h.b16 %v4275
    %v4351 = vunpack.c.l.b16 %v4276
    %v4352 = vunpack.c.h.b16 %v4276
    %v4353 = vunpack.c.l.b16 %v4277
    %v4354 = vunpack.c.h.b16 %v4277
    %v4355 = vunpack.c.l.b16 %v4278
    %v4356 = vunpack.c.h.b16 %v4278
    %v4357 = vunpack.c.l.b16 %v4279
    %v4358 = vunpack.c.h.b16 %v4279
    %v4359 = vunpack.c.l.b16 %v4280
    %v4360 = vunpack.c.h.b16 %v4280
    %v4361 = vunpack.c.l.b16 %v4281
    %v4362 = vunpack.c.h.b16 %v4281
    %v4363 = vunpack.c.l.b16 %v4282
    %v4364 = vunpack.c.h.b16 %v4282
    %v4365 = vunpack.c.l.b16 %v4283
    %v4366 = vunpack.c.h.b16 %v4283
    %v4367 = vunpack.c.l.b16 %v4284
    %v4368 = vunpack.c.h.b16 %v4284
    %v4369 = vunpack.c.l.b16 %v4285
    %v4370 = vunpack.c.h.b16 %v4285
    %v4371 = vunpack.c.l.b16 %v4286
    %v4372 = vunpack.c.h.b16 %v4286
    %v4373 = vunpack.c.l.b16 %v4287
    %v4374 = vunpack.c.h.b16 %v4287
    %v4375 = vunpack.c.l.b16 %v4288
    %v4376 = vunpack.c.h.b16 %v4288
    %v4377 = vunpack.c.l.b16 %v4289
    %v4378 = vunpack.c.h.b16 %v4289
    %v4379 = vunpack.c.l.b16 %v4290
    %v4380 = vunpack.c.h.b16 %v4290
    %v4381 = vunpack.c.l.b16 %v4291
    %v4382 = vunpack.c.h.b16 %v4291
    %v4383 = vunpack.c.l.b16 %v4292
    %v4384 = vunpack.c.h.b16 %v4292
    %v4385 = vunpack.c.l.b16 %v4293
    %v4386 = vunpack.c.h.b16 %v4293
    %v4387 = vunpack.c.l.b16 %v4294
    %v4388 = vunpack.c.h.b16 %v4294
    %v4389 = vunpack.c.l.b16 %v4295
    %v4390 = vunpack.c.h.b16 %v4295
    %v4391 = vunpack.c.l.b16 %v4296
    %v4392 = vunpack.c.h.b16 %v4296
    %v4393 = vpack.c.b16 %v4333, %v4329
    %v4394 = vpack.c.b16 %v4334, %v4330
    %v4395 = vpack.c.b16 %v4335, %v4331
    %v4396 = vpack.c.b16 %v4336, %v4332
    %v4397 = vpack.c.b16 %v4341, %v4337
    %v4398 = vpack.c.b16 %v4342, %v4338
    %v4399 = vpack.c.b16 %v4343, %v4339
    %v4400 = vpack.c.b16 %v4344, %v4340
    %v4401 = vpack.c.b16 %v4349, %v4345
    %v4402 = vpack.c.b16 %v4350, %v4346
    %v4403 = vpack.c.b16 %v4351, %v4347
    %v4404 = vpack.c.b16 %v4352, %v4348
    %v4405 = vpack.c.b16 %v4357, %v4353
    %v4406 = vpack.c.b16 %v4358, %v4354
    %v4407 = vpack.c.b16 %v4359, %v4355
    %v4408 = vpack.c.b16 %v4360, %v4356
    %v4409 = vpack.c.b16 %v4365, %v4361
    %v4410 = vpack.c.b16 %v4366, %v4362
    %v4411 = vpack.c.b16 %v4367, %v4363
    %v4412 = vpack.c.b16 %v4368, %v4364
    %v4413 = vpack.c.b16 %v4373, %v4369
    %v4414 = vpack.c.b16 %v4374, %v4370
    %v4415 = vpack.c.b16 %v4375, %v4371
    %v4416 = vpack.c.b16 %v4376, %v4372
    %v4417 = vpack.c.b16 %v4381, %v4377
    %v4418 = vpack.c.b16 %v4382, %v4378
    %v4419 = vpack.c.b16 %v4383, %v4379
    %v4420 = vpack.c.b16 %v4384, %v4380
    %v4421 = vpack.c.b16 %v4389, %v4385
    %v4422 = vpack.c.b16 %v4390, %v4386
    %v4423 = vpack.c.b16 %v4391, %v4387
    %v4424 = vpack.c.b16 %v4392, %v4388
    %4457 = vmatpush.bf16.msra.mxu0 %v4421
    %4458 = vmatpush.bf16.msra.mxu0 %v4417
    %4459 = vmatpush.bf16.msra.mxu0 %v4413
    %4460 = vmatpush.bf16.msra.mxu0 %v4409
    %4461 = vmatpush.bf16.msra.mxu0 %v4405
    %4462 = vmatpush.bf16.msra.mxu0 %v4401
    %4463 = vmatpush.bf16.msra.mxu0 %v4397
    %4464 = vmatpush.bf16.msra.mxu0 %v4393
    %4465 = vmatmul.bf16.gmra.mxu0 %v4264
    %v4466 = vpop.f32.mrf.mxu0
    %v4467 = vadd.f32 0.0, %v4466
    %v4468 = vpop.f32.mrf.mxu0
    %4469 = vdwg.mxu0
    %4470 = vmatpush.bf16.msra.mxu0 %v4422
    %4471 = vmatpush.bf16.msra.mxu0 %v4418
    %4472 = vmatpush.bf16.msra.mxu0 %v4414
    %4473 = vmatpush.bf16.msra.mxu0 %v4410
    %4474 = vmatpush.bf16.msra.mxu0 %v4406
    %4475 = vmatpush.bf16.msra.mxu0 %v4402
    %4476 = vmatpush.bf16.msra.mxu0 %v4398
    %4477 = vmatpush.bf16.msra.mxu0 %v4394
    %4478 = vmatmul.bf16.gmra.mxu0 %v4264
    %v4479 = vpop.f32.mrf.mxu0
    %v4480 = vadd.f32 0.0, %v4479
    %v4481 = vpop.f32.mrf.mxu0
    %4482 = vdwg.mxu0
    %4483 = vmatpush.bf16.msra.mxu0 %v4423
    %4484 = vmatpush.bf16.msra.mxu0 %v4419
    %4485 = vmatpush.bf16.msra.mxu0 %v4415
    %4486 = vmatpush.bf16.msra.mxu0 %v4411
    %4487 = vmatpush.bf16.msra.mxu0 %v4407
    %4488 = vmatpush.bf16.msra.mxu0 %v4403
    %4489 = vmatpush.bf16.msra.mxu0 %v4399
    %4490 = vmatpush.bf16.msra.mxu0 %v4395
    %4491 = vmatmul.bf16.gmra.mxu0 %v4264
    %v4492 = vpop.f32.mrf.mxu0
    %v4493 = vadd.f32 0.0, %v4492
    %v4494 = vpop.f32.mrf.mxu0
    %4495 = vdwg.mxu0
    %4496 = vmatpush.bf16.msra.mxu0 %v4424
    %4497 = vmatpush.bf16.msra.mxu0 %v4420
    %4498 = vmatpush.bf16.msra.mxu0 %v4416
    %4499 = vmatpush.bf16.msra.mxu0 %v4412
    %4500 = vmatpush.bf16.msra.mxu0 %v4408
    %4501 = vmatpush.bf16.msra.mxu0 %v4404
    %4502 = vmatpush.bf16.msra.mxu0 %v4400
    %4503 = vmatpush.bf16.msra.mxu0 %v4396
    %4504 = vmatmul.bf16.gmra.mxu0 %v4264
    %v4505 = vpop.f32.mrf.mxu0
    %v4506 = vadd.f32 0.0, %v4505
    %v4507 = vpop.f32.mrf.mxu0
    %4508 = vdwg.mxu0
    %v4509 = vadd.f32 %v4260, %v4467
    %v4510 = vadd.f32 %v4261, %v4480
    %v4511 = vadd.f32 %v4262, %v4493
    %v4512 = vadd.f32 %v4263, %v4506
    %v4513 = vxor.u32 %v4509, 2147483648
    %v4514 = vmul.f32 %v4513, 1.442695
    %v4515 = vpow.pop %v4514
    %v4516 = vadd.f32 %v4515, 1.0
    %v4517 = vrcp.pop %v4516
    %v4518 = vmul.f32 %v4516, %v4517
    %v4519 = vsub.f32 1.0, %v4518
    %v4520 = vmul.f32 %v4517, %v4519
    %v4521 = vadd.f32 %v4517, %v4520
    %vm4522 = vweird.f32 %v4516
    %vm4523 = vweird.f32 %v4517
    %vm4524 = vmor %vm4522, %vm4523
    %v4525 = vsel %vm4524, %v4517, %v4521
    %v4526 = vand.u32 2147483647, %v4516
    %vm4527 = vcmp.eq.f32.partialorder %v4526, 8.507059e+37
    %v4528 = vand.u32 %v4516, 2147483648
    %v4529 = vor.u32 1.1754944e-38, %v4528
    %v4530 = vsel %vm4527, %v4529, %v4525
    %v4531 = vmul.f32 1.0, %v4530
    %v4532 = vxor.u32 %v4510, 2147483648
    %v4533 = vmul.f32 %v4532, 1.442695
    %v4534 = vpow.pop %v4533
    %v4535 = vadd.f32 %v4534, 1.0
    %v4536 = vrcp.pop %v4535
    %v4537 = vmul.f32 %v4535, %v4536
    %v4538 = vsub.f32 1.0, %v4537
    %v4539 = vmul.f32 %v4536, %v4538
    %v4540 = vadd.f32 %v4536, %v4539
    %vm4541 = vweird.f32 %v4535
    %vm4542 = vweird.f32 %v4536
    %vm4543 = vmor %vm4541, %vm4542
    %v4544 = vsel %vm4543, %v4536, %v4540
    %v4545 = vand.u32 2147483647, %v4535
    %vm4546 = vcmp.eq.f32.partialorder %v4545, 8.507059e+37
    %v4547 = vand.u32 %v4535, 2147483648
    %v4548 = vor.u32 1.1754944e-38, %v4547
    %v4549 = vsel %vm4546, %v4548, %v4544
    %v4550 = vmul.f32 1.0, %v4549
    %v4551 = vtanh.pop %v4511
    %v4552 = vxor.u32 %v4512, 2147483648
    %v4553 = vmul.f32 %v4552, 1.442695
    %v4554 = vpow.pop %v4553
    %v4555 = vadd.f32 %v4554, 1.0
    %v4556 = vrcp.pop %v4555
    %v4557 = vmul.f32 %v4555, %v4556
    %v4558 = vsub.f32 1.0, %v4557
    %v4559 = vmul.f32 %v4556, %v4558
    %v4560 = vadd.f32 %v4556, %v4559
    %vm4561 = vweird.f32 %v4555
    %vm4562 = vweird.f32 %v4556
    %vm4563 = vmor %vm4561, %vm4562
    %v4564 = vsel %vm4563, %v4556, %v4560
    %v4565 = vand.u32 2147483647, %v4555
    %vm4566 = vcmp.eq.f32.partialorder %v4565, 8.507059e+37
    %v4567 = vand.u32 %v4555, 2147483648
    %v4568 = vor.u32 1.1754944e-38, %v4567
    %v4569 = vsel %vm4566, %v4568, %v4564
    %v4570 = vmul.f32 1.0, %v4569
    %v4571 = vmul.f32 %v4550, %v3931
    %v4572 = vmul.f32 %v4531, %v4551
    %v4573 = vadd.f32 %v4571, %v4572
    %v4574 = vtanh.pop %v4573
    %v4575 = vmul.f32 %v4570, %v4574
    %s4576 = sadd.s32 %s85, 6
    %s4577 = smul.u32 %s4576, 8
    %s4578 = sadd.s32 %s87, 1
    %s4579 = smul.u32 %s4578, 8
    %s4580 = scalar_lea.vmem [#allocation2], %s4577
    %4581 = vst [vmem:[%s4580] sm:$0xff] %v4258
    %s4582 = scalar_lea.vmem [#allocation3], %s4579
    %4583 = vst [vmem:[%s4582] sm:$0xff] %v4575
    %s4584 = scalar_lea.vmem %s0, 224
    %v4585 = vld [vmem:[%s4584] sm:$0xff]
    %v4586 = vld [vmem:[%s4584 + $0x8] sm:$0xff]
    %v4587 = vld [vmem:[%s4584 + $0x10] sm:$0xff]
    %v4588 = vld [vmem:[%s4584 + $0x18] sm:$0xff]
    %v4589 = vpack.c.bf16 %v4258, %v4258
    %v4590 = vld [vmem:[#allocation10] sm:$0xff]
    %v4591 = vld [vmem:[#allocation10 + $0x8] sm:$0xff]
    %v4592 = vld [vmem:[#allocation10 + $0x10] sm:$0xff]
    %v4593 = vld [vmem:[#allocation10 + $0x18] sm:$0xff]
    %v4594 = vld [vmem:[#allocation10 + $0x20] sm:$0xff]
    %v4595 = vld [vmem:[#allocation10 + $0x28] sm:$0xff]
    %v4596 = vld [vmem:[#allocation10 + $0x30] sm:$0xff]
    %v4597 = vld [vmem:[#allocation10 + $0x38] sm:$0xff]
    %v4598 = vld [vmem:[#allocation10 + $0x40] sm:$0xff]
    %v4599 = vld [vmem:[#allocation10 + $0x48] sm:$0xff]
    %v4600 = vld [vmem:[#allocation10 + $0x50] sm:$0xff]
    %v4601 = vld [vmem:[#allocation10 + $0x58] sm:$0xff]
    %v4602 = vld [vmem:[#allocation10 + $0x60] sm:$0xff]
    %v4603 = vld [vmem:[#allocation10 + $0x68] sm:$0xff]
    %v4604 = vld [vmem:[#allocation10 + $0x70] sm:$0xff]
    %v4605 = vld [vmem:[#allocation10 + $0x78] sm:$0xff]
    %v4606 = vld [vmem:[#allocation10 + $0x80] sm:$0xff]
    %v4607 = vld [vmem:[#allocation10 + $0x88] sm:$0xff]
    %v4608 = vld [vmem:[#allocation10 + $0x90] sm:$0xff]
    %v4609 = vld [vmem:[#allocation10 + $0x98] sm:$0xff]
    %v4610 = vld [vmem:[#allocation10 + $0xa0] sm:$0xff]
    %v4611 = vld [vmem:[#allocation10 + $0xa8] sm:$0xff]
    %v4612 = vld [vmem:[#allocation10 + $0xb0] sm:$0xff]
    %v4613 = vld [vmem:[#allocation10 + $0xb8] sm:$0xff]
    %v4614 = vld [vmem:[#allocation10 + $0xc0] sm:$0xff]
    %v4615 = vld [vmem:[#allocation10 + $0xc8] sm:$0xff]
    %v4616 = vld [vmem:[#allocation10 + $0xd0] sm:$0xff]
    %v4617 = vld [vmem:[#allocation10 + $0xd8] sm:$0xff]
    %v4618 = vld [vmem:[#allocation10 + $0xe0] sm:$0xff]
    %v4619 = vld [vmem:[#allocation10 + $0xe8] sm:$0xff]
    %v4620 = vld [vmem:[#allocation10 + $0xf0] sm:$0xff]
    %v4621 = vld [vmem:[#allocation10 + $0xf8] sm:$0xff]
    %v4654 = vunpack.c.l.b16 %v4590
    %v4655 = vunpack.c.h.b16 %v4590
    %v4656 = vunpack.c.l.b16 %v4591
    %v4657 = vunpack.c.h.b16 %v4591
    %v4658 = vunpack.c.l.b16 %v4592
    %v4659 = vunpack.c.h.b16 %v4592
    %v4660 = vunpack.c.l.b16 %v4593
    %v4661 = vunpack.c.h.b16 %v4593
    %v4662 = vunpack.c.l.b16 %v4594
    %v4663 = vunpack.c.h.b16 %v4594
    %v4664 = vunpack.c.l.b16 %v4595
    %v4665 = vunpack.c.h.b16 %v4595
    %v4666 = vunpack.c.l.b16 %v4596
    %v4667 = vunpack.c.h.b16 %v4596
    %v4668 = vunpack.c.l.b16 %v4597
    %v4669 = vunpack.c.h.b16 %v4597
    %v4670 = vunpack.c.l.b16 %v4598
    %v4671 = vunpack.c.h.b16 %v4598
    %v4672 = vunpack.c.l.b16 %v4599
    %v4673 = vunpack.c.h.b16 %v4599
    %v4674 = vunpack.c.l.b16 %v4600
    %v4675 = vunpack.c.h.b16 %v4600
    %v4676 = vunpack.c.l.b16 %v4601
    %v4677 = vunpack.c.h.b16 %v4601
    %v4678 = vunpack.c.l.b16 %v4602
    %v4679 = vunpack.c.h.b16 %v4602
    %v4680 = vunpack.c.l.b16 %v4603
    %v4681 = vunpack.c.h.b16 %v4603
    %v4682 = vunpack.c.l.b16 %v4604
    %v4683 = vunpack.c.h.b16 %v4604
    %v4684 = vunpack.c.l.b16 %v4605
    %v4685 = vunpack.c.h.b16 %v4605
    %v4686 = vunpack.c.l.b16 %v4606
    %v4687 = vunpack.c.h.b16 %v4606
    %v4688 = vunpack.c.l.b16 %v4607
    %v4689 = vunpack.c.h.b16 %v4607
    %v4690 = vunpack.c.l.b16 %v4608
    %v4691 = vunpack.c.h.b16 %v4608
    %v4692 = vunpack.c.l.b16 %v4609
    %v4693 = vunpack.c.h.b16 %v4609
    %v4694 = vunpack.c.l.b16 %v4610
    %v4695 = vunpack.c.h.b16 %v4610
    %v4696 = vunpack.c.l.b16 %v4611
    %v4697 = vunpack.c.h.b16 %v4611
    %v4698 = vunpack.c.l.b16 %v4612
    %v4699 = vunpack.c.h.b16 %v4612
    %v4700 = vunpack.c.l.b16 %v4613
    %v4701 = vunpack.c.h.b16 %v4613
    %v4702 = vunpack.c.l.b16 %v4614
    %v4703 = vunpack.c.h.b16 %v4614
    %v4704 = vunpack.c.l.b16 %v4615
    %v4705 = vunpack.c.h.b16 %v4615
    %v4706 = vunpack.c.l.b16 %v4616
    %v4707 = vunpack.c.h.b16 %v4616
    %v4708 = vunpack.c.l.b16 %v4617
    %v4709 = vunpack.c.h.b16 %v4617
    %v4710 = vunpack.c.l.b16 %v4618
    %v4711 = vunpack.c.h.b16 %v4618
    %v4712 = vunpack.c.l.b16 %v4619
    %v4713 = vunpack.c.h.b16 %v4619
    %v4714 = vunpack.c.l.b16 %v4620
    %v4715 = vunpack.c.h.b16 %v4620
    %v4716 = vunpack.c.l.b16 %v4621
    %v4717 = vunpack.c.h.b16 %v4621
    %v4718 = vpack.c.b16 %v4658, %v4654
    %v4719 = vpack.c.b16 %v4659, %v4655
    %v4720 = vpack.c.b16 %v4660, %v4656
    %v4721 = vpack.c.b16 %v4661, %v4657
    %v4722 = vpack.c.b16 %v4666, %v4662
    %v4723 = vpack.c.b16 %v4667, %v4663
    %v4724 = vpack.c.b16 %v4668, %v4664
    %v4725 = vpack.c.b16 %v4669, %v4665
    %v4726 = vpack.c.b16 %v4674, %v4670
    %v4727 = vpack.c.b16 %v4675, %v4671
    %v4728 = vpack.c.b16 %v4676, %v4672
    %v4729 = vpack.c.b16 %v4677, %v4673
    %v4730 = vpack.c.b16 %v4682, %v4678
    %v4731 = vpack.c.b16 %v4683, %v4679
    %v4732 = vpack.c.b16 %v4684, %v4680
    %v4733 = vpack.c.b16 %v4685, %v4681
    %v4734 = vpack.c.b16 %v4690, %v4686
    %v4735 = vpack.c.b16 %v4691, %v4687
    %v4736 = vpack.c.b16 %v4692, %v4688
    %v4737 = vpack.c.b16 %v4693, %v4689
    %v4738 = vpack.c.b16 %v4698, %v4694
    %v4739 = vpack.c.b16 %v4699, %v4695
    %v4740 = vpack.c.b16 %v4700, %v4696
    %v4741 = vpack.c.b16 %v4701, %v4697
    %v4742 = vpack.c.b16 %v4706, %v4702
    %v4743 = vpack.c.b16 %v4707, %v4703
    %v4744 = vpack.c.b16 %v4708, %v4704
    %v4745 = vpack.c.b16 %v4709, %v4705
    %v4746 = vpack.c.b16 %v4714, %v4710
    %v4747 = vpack.c.b16 %v4715, %v4711
    %v4748 = vpack.c.b16 %v4716, %v4712
    %v4749 = vpack.c.b16 %v4717, %v4713
    %4782 = vmatpush.bf16.msra.mxu0 %v4746
    %4783 = vmatpush.bf16.msra.mxu0 %v4742
    %4784 = vmatpush.bf16.msra.mxu0 %v4738
    %4785 = vmatpush.bf16.msra.mxu0 %v4734
    %4786 = vmatpush.bf16.msra.mxu0 %v4730
    %4787 = vmatpush.bf16.msra.mxu0 %v4726
    %4788 = vmatpush.bf16.msra.mxu0 %v4722
    %4789 = vmatpush.bf16.msra.mxu0 %v4718
    %4790 = vmatmul.bf16.gmra.mxu0 %v4589
    %v4791 = vpop.f32.mrf.mxu0
    %v4792 = vadd.f32 0.0, %v4791
    %v4793 = vpop.f32.mrf.mxu0
    %4794 = vdwg.mxu0
    %4795 = vmatpush.bf16.msra.mxu0 %v4747
    %4796 = vmatpush.bf16.msra.mxu0 %v4743
    %4797 = vmatpush.bf16.msra.mxu0 %v4739
    %4798 = vmatpush.bf16.msra.mxu0 %v4735
    %4799 = vmatpush.bf16.msra.mxu0 %v4731
    %4800 = vmatpush.bf16.msra.mxu0 %v4727
    %4801 = vmatpush.bf16.msra.mxu0 %v4723
    %4802 = vmatpush.bf16.msra.mxu0 %v4719
    %4803 = vmatmul.bf16.gmra.mxu0 %v4589
    %v4804 = vpop.f32.mrf.mxu0
    %v4805 = vadd.f32 0.0, %v4804
    %v4806 = vpop.f32.mrf.mxu0
    %4807 = vdwg.mxu0
    %4808 = vmatpush.bf16.msra.mxu0 %v4748
    %4809 = vmatpush.bf16.msra.mxu0 %v4744
    %4810 = vmatpush.bf16.msra.mxu0 %v4740
    %4811 = vmatpush.bf16.msra.mxu0 %v4736
    %4812 = vmatpush.bf16.msra.mxu0 %v4732
    %4813 = vmatpush.bf16.msra.mxu0 %v4728
    %4814 = vmatpush.bf16.msra.mxu0 %v4724
    %4815 = vmatpush.bf16.msra.mxu0 %v4720
    %4816 = vmatmul.bf16.gmra.mxu0 %v4589
    %v4817 = vpop.f32.mrf.mxu0
    %v4818 = vadd.f32 0.0, %v4817
    %v4819 = vpop.f32.mrf.mxu0
    %4820 = vdwg.mxu0
    %4821 = vmatpush.bf16.msra.mxu0 %v4749
    %4822 = vmatpush.bf16.msra.mxu0 %v4745
    %4823 = vmatpush.bf16.msra.mxu0 %v4741
    %4824 = vmatpush.bf16.msra.mxu0 %v4737
    %4825 = vmatpush.bf16.msra.mxu0 %v4733
    %4826 = vmatpush.bf16.msra.mxu0 %v4729
    %4827 = vmatpush.bf16.msra.mxu0 %v4725
    %4828 = vmatpush.bf16.msra.mxu0 %v4721
    %4829 = vmatmul.bf16.gmra.mxu0 %v4589
    %v4830 = vpop.f32.mrf.mxu0
    %v4831 = vadd.f32 0.0, %v4830
    %v4832 = vpop.f32.mrf.mxu0
    %4833 = vdwg.mxu0
    %v4834 = vadd.f32 %v4585, %v4792
    %v4835 = vadd.f32 %v4586, %v4805
    %v4836 = vadd.f32 %v4587, %v4818
    %v4837 = vadd.f32 %v4588, %v4831
    %v4838 = vxor.u32 %v4834, 2147483648
    %v4839 = vmul.f32 %v4838, 1.442695
    %v4840 = vpow.pop %v4839
    %v4841 = vadd.f32 %v4840, 1.0
    %v4842 = vrcp.pop %v4841
    %v4843 = vmul.f32 %v4841, %v4842
    %v4844 = vsub.f32 1.0, %v4843
    %v4845 = vmul.f32 %v4842, %v4844
    %v4846 = vadd.f32 %v4842, %v4845
    %vm4847 = vweird.f32 %v4841
    %vm4848 = vweird.f32 %v4842
    %vm4849 = vmor %vm4847, %vm4848
    %v4850 = vsel %vm4849, %v4842, %v4846
    %v4851 = vand.u32 2147483647, %v4841
    %vm4852 = vcmp.eq.f32.partialorder %v4851, 8.507059e+37
    %v4853 = vand.u32 %v4841, 2147483648
    %v4854 = vor.u32 1.1754944e-38, %v4853
    %v4855 = vsel %vm4852, %v4854, %v4850
    %v4856 = vmul.f32 1.0, %v4855
    %v4857 = vxor.u32 %v4835, 2147483648
    %v4858 = vmul.f32 %v4857, 1.442695
    %v4859 = vpow.pop %v4858
    %v4860 = vadd.f32 %v4859, 1.0
    %v4861 = vrcp.pop %v4860
    %v4862 = vmul.f32 %v4860, %v4861
    %v4863 = vsub.f32 1.0, %v4862
    %v4864 = vmul.f32 %v4861, %v4863
    %v4865 = vadd.f32 %v4861, %v4864
    %vm4866 = vweird.f32 %v4860
    %vm4867 = vweird.f32 %v4861
    %vm4868 = vmor %vm4866, %vm4867
    %v4869 = vsel %vm4868, %v4861, %v4865
    %v4870 = vand.u32 2147483647, %v4860
    %vm4871 = vcmp.eq.f32.partialorder %v4870, 8.507059e+37
    %v4872 = vand.u32 %v4860, 2147483648
    %v4873 = vor.u32 1.1754944e-38, %v4872
    %v4874 = vsel %vm4871, %v4873, %v4869
    %v4875 = vmul.f32 1.0, %v4874
    %v4876 = vtanh.pop %v4836
    %v4877 = vxor.u32 %v4837, 2147483648
    %v4878 = vmul.f32 %v4877, 1.442695
    %v4879 = vpow.pop %v4878
    %v4880 = vadd.f32 %v4879, 1.0
    %v4881 = vrcp.pop %v4880
    %v4882 = vmul.f32 %v4880, %v4881
    %v4883 = vsub.f32 1.0, %v4882
    %v4884 = vmul.f32 %v4881, %v4883
    %v4885 = vadd.f32 %v4881, %v4884
    %vm4886 = vweird.f32 %v4880
    %vm4887 = vweird.f32 %v4881
    %vm4888 = vmor %vm4886, %vm4887
    %v4889 = vsel %vm4888, %v4881, %v4885
    %v4890 = vand.u32 2147483647, %v4880
    %vm4891 = vcmp.eq.f32.partialorder %v4890, 8.507059e+37
    %v4892 = vand.u32 %v4880, 2147483648
    %v4893 = vor.u32 1.1754944e-38, %v4892
    %v4894 = vsel %vm4891, %v4893, %v4889
    %v4895 = vmul.f32 1.0, %v4894
    %v4896 = vmul.f32 %v4875, %v4256
    %v4897 = vmul.f32 %v4856, %v4876
    %v4898 = vadd.f32 %v4896, %v4897
    %v4899 = vtanh.pop %v4898
    %v4900 = vmul.f32 %v4895, %v4899
    %v4901 = vld [vmem:[#allocation8] sm:$0xff]
    %v4902 = vld [vmem:[#allocation8 + $0x8] sm:$0xff]
    %v4903 = vld [vmem:[#allocation8 + $0x10] sm:$0xff]
    %v4904 = vld [vmem:[#allocation8 + $0x18] sm:$0xff]
    %v4905 = vpack.c.bf16 %v4575, %v4575
    %v4906 = vld [vmem:[#allocation12] sm:$0xff]
    %v4907 = vld [vmem:[#allocation12 + $0x8] sm:$0xff]
    %v4908 = vld [vmem:[#allocation12 + $0x10] sm:$0xff]
    %v4909 = vld [vmem:[#allocation12 + $0x18] sm:$0xff]
    %v4910 = vld [vmem:[#allocation12 + $0x20] sm:$0xff]
    %v4911 = vld [vmem:[#allocation12 + $0x28] sm:$0xff]
    %v4912 = vld [vmem:[#allocation12 + $0x30] sm:$0xff]
    %v4913 = vld [vmem:[#allocation12 + $0x38] sm:$0xff]
    %v4914 = vld [vmem:[#allocation12 + $0x40] sm:$0xff]
    %v4915 = vld [vmem:[#allocation12 + $0x48] sm:$0xff]
    %v4916 = vld [vmem:[#allocation12 + $0x50] sm:$0xff]
    %v4917 = vld [vmem:[#allocation12 + $0x58] sm:$0xff]
    %v4918 = vld [vmem:[#allocation12 + $0x60] sm:$0xff]
    %v4919 = vld [vmem:[#allocation12 + $0x68] sm:$0xff]
    %v4920 = vld [vmem:[#allocation12 + $0x70] sm:$0xff]
    %v4921 = vld [vmem:[#allocation12 + $0x78] sm:$0xff]
    %v4922 = vld [vmem:[#allocation12 + $0x80] sm:$0xff]
    %v4923 = vld [vmem:[#allocation12 + $0x88] sm:$0xff]
    %v4924 = vld [vmem:[#allocation12 + $0x90] sm:$0xff]
    %v4925 = vld [vmem:[#allocation12 + $0x98] sm:$0xff]
    %v4926 = vld [vmem:[#allocation12 + $0xa0] sm:$0xff]
    %v4927 = vld [vmem:[#allocation12 + $0xa8] sm:$0xff]
    %v4928 = vld [vmem:[#allocation12 + $0xb0] sm:$0xff]
    %v4929 = vld [vmem:[#allocation12 + $0xb8] sm:$0xff]
    %v4930 = vld [vmem:[#allocation12 + $0xc0] sm:$0xff]
    %v4931 = vld [vmem:[#allocation12 + $0xc8] sm:$0xff]
    %v4932 = vld [vmem:[#allocation12 + $0xd0] sm:$0xff]
    %v4933 = vld [vmem:[#allocation12 + $0xd8] sm:$0xff]
    %v4934 = vld [vmem:[#allocation12 + $0xe0] sm:$0xff]
    %v4935 = vld [vmem:[#allocation12 + $0xe8] sm:$0xff]
    %v4936 = vld [vmem:[#allocation12 + $0xf0] sm:$0xff]
    %v4937 = vld [vmem:[#allocation12 + $0xf8] sm:$0xff]
    %v4970 = vunpack.c.l.b16 %v4906
    %v4971 = vunpack.c.h.b16 %v4906
    %v4972 = vunpack.c.l.b16 %v4907
    %v4973 = vunpack.c.h.b16 %v4907
    %v4974 = vunpack.c.l.b16 %v4908
    %v4975 = vunpack.c.h.b16 %v4908
    %v4976 = vunpack.c.l.b16 %v4909
    %v4977 = vunpack.c.h.b16 %v4909
    %v4978 = vunpack.c.l.b16 %v4910
    %v4979 = vunpack.c.h.b16 %v4910
    %v4980 = vunpack.c.l.b16 %v4911
    %v4981 = vunpack.c.h.b16 %v4911
    %v4982 = vunpack.c.l.b16 %v4912
    %v4983 = vunpack.c.h.b16 %v4912
    %v4984 = vunpack.c.l.b16 %v4913
    %v4985 = vunpack.c.h.b16 %v4913
    %v4986 = vunpack.c.l.b16 %v4914
    %v4987 = vunpack.c.h.b16 %v4914
    %v4988 = vunpack.c.l.b16 %v4915
    %v4989 = vunpack.c.h.b16 %v4915
    %v4990 = vunpack.c.l.b16 %v4916
    %v4991 = vunpack.c.h.b16 %v4916
    %v4992 = vunpack.c.l.b16 %v4917
    %v4993 = vunpack.c.h.b16 %v4917
    %v4994 = vunpack.c.l.b16 %v4918
    %v4995 = vunpack.c.h.b16 %v4918
    %v4996 = vunpack.c.l.b16 %v4919
    %v4997 = vunpack.c.h.b16 %v4919
    %v4998 = vunpack.c.l.b16 %v4920
    %v4999 = vunpack.c.h.b16 %v4920
    %v5000 = vunpack.c.l.b16 %v4921
    %v5001 = vunpack.c.h.b16 %v4921
    %v5002 = vunpack.c.l.b16 %v4922
    %v5003 = vunpack.c.h.b16 %v4922
    %v5004 = vunpack.c.l.b16 %v4923
    %v5005 = vunpack.c.h.b16 %v4923
    %v5006 = vunpack.c.l.b16 %v4924
    %v5007 = vunpack.c.h.b16 %v4924
    %v5008 = vunpack.c.l.b16 %v4925
    %v5009 = vunpack.c.h.b16 %v4925
    %v5010 = vunpack.c.l.b16 %v4926
    %v5011 = vunpack.c.h.b16 %v4926
    %v5012 = vunpack.c.l.b16 %v4927
    %v5013 = vunpack.c.h.b16 %v4927
    %v5014 = vunpack.c.l.b16 %v4928
    %v5015 = vunpack.c.h.b16 %v4928
    %v5016 = vunpack.c.l.b16 %v4929
    %v5017 = vunpack.c.h.b16 %v4929
    %v5018 = vunpack.c.l.b16 %v4930
    %v5019 = vunpack.c.h.b16 %v4930
    %v5020 = vunpack.c.l.b16 %v4931
    %v5021 = vunpack.c.h.b16 %v4931
    %v5022 = vunpack.c.l.b16 %v4932
    %v5023 = vunpack.c.h.b16 %v4932
    %v5024 = vunpack.c.l.b16 %v4933
    %v5025 = vunpack.c.h.b16 %v4933
    %v5026 = vunpack.c.l.b16 %v4934
    %v5027 = vunpack.c.h.b16 %v4934
    %v5028 = vunpack.c.l.b16 %v4935
    %v5029 = vunpack.c.h.b16 %v4935
    %v5030 = vunpack.c.l.b16 %v4936
    %v5031 = vunpack.c.h.b16 %v4936
    %v5032 = vunpack.c.l.b16 %v4937
    %v5033 = vunpack.c.h.b16 %v4937
    %v5034 = vpack.c.b16 %v4974, %v4970
    %v5035 = vpack.c.b16 %v4975, %v4971
    %v5036 = vpack.c.b16 %v4976, %v4972
    %v5037 = vpack.c.b16 %v4977, %v4973
    %v5038 = vpack.c.b16 %v4982, %v4978
    %v5039 = vpack.c.b16 %v4983, %v4979
    %v5040 = vpack.c.b16 %v4984, %v4980
    %v5041 = vpack.c.b16 %v4985, %v4981
    %v5042 = vpack.c.b16 %v4990, %v4986
    %v5043 = vpack.c.b16 %v4991, %v4987
    %v5044 = vpack.c.b16 %v4992, %v4988
    %v5045 = vpack.c.b16 %v4993, %v4989
    %v5046 = vpack.c.b16 %v4998, %v4994
    %v5047 = vpack.c.b16 %v4999, %v4995
    %v5048 = vpack.c.b16 %v5000, %v4996
    %v5049 = vpack.c.b16 %v5001, %v4997
    %v5050 = vpack.c.b16 %v5006, %v5002
    %v5051 = vpack.c.b16 %v5007, %v5003
    %v5052 = vpack.c.b16 %v5008, %v5004
    %v5053 = vpack.c.b16 %v5009, %v5005
    %v5054 = vpack.c.b16 %v5014, %v5010
    %v5055 = vpack.c.b16 %v5015, %v5011
    %v5056 = vpack.c.b16 %v5016, %v5012
    %v5057 = vpack.c.b16 %v5017, %v5013
    %v5058 = vpack.c.b16 %v5022, %v5018
    %v5059 = vpack.c.b16 %v5023, %v5019
    %v5060 = vpack.c.b16 %v5024, %v5020
    %v5061 = vpack.c.b16 %v5025, %v5021
    %v5062 = vpack.c.b16 %v5030, %v5026
    %v5063 = vpack.c.b16 %v5031, %v5027
    %v5064 = vpack.c.b16 %v5032, %v5028
    %v5065 = vpack.c.b16 %v5033, %v5029
    %5098 = vmatpush.bf16.msra.mxu0 %v5062
    %5099 = vmatpush.bf16.msra.mxu0 %v5058
    %5100 = vmatpush.bf16.msra.mxu0 %v5054
    %5101 = vmatpush.bf16.msra.mxu0 %v5050
    %5102 = vmatpush.bf16.msra.mxu0 %v5046
    %5103 = vmatpush.bf16.msra.mxu0 %v5042
    %5104 = vmatpush.bf16.msra.mxu0 %v5038
    %5105 = vmatpush.bf16.msra.mxu0 %v5034
    %5106 = vmatmul.bf16.gmra.mxu0 %v4905
    %v5107 = vpop.f32.mrf.mxu0
    %v5108 = vadd.f32 0.0, %v5107
    %v5109 = vpop.f32.mrf.mxu0
    %5110 = vdwg.mxu0
    %5111 = vmatpush.bf16.msra.mxu0 %v5063
    %5112 = vmatpush.bf16.msra.mxu0 %v5059
    %5113 = vmatpush.bf16.msra.mxu0 %v5055
    %5114 = vmatpush.bf16.msra.mxu0 %v5051
    %5115 = vmatpush.bf16.msra.mxu0 %v5047
    %5116 = vmatpush.bf16.msra.mxu0 %v5043
    %5117 = vmatpush.bf16.msra.mxu0 %v5039
    %5118 = vmatpush.bf16.msra.mxu0 %v5035
    %5119 = vmatmul.bf16.gmra.mxu0 %v4905
    %v5120 = vpop.f32.mrf.mxu0
    %v5121 = vadd.f32 0.0, %v5120
    %v5122 = vpop.f32.mrf.mxu0
    %5123 = vdwg.mxu0
    %5124 = vmatpush.bf16.msra.mxu0 %v5064
    %5125 = vmatpush.bf16.msra.mxu0 %v5060
    %5126 = vmatpush.bf16.msra.mxu0 %v5056
    %5127 = vmatpush.bf16.msra.mxu0 %v5052
    %5128 = vmatpush.bf16.msra.mxu0 %v5048
    %5129 = vmatpush.bf16.msra.mxu0 %v5044
    %5130 = vmatpush.bf16.msra.mxu0 %v5040
    %5131 = vmatpush.bf16.msra.mxu0 %v5036
    %5132 = vmatmul.bf16.gmra.mxu0 %v4905
    %v5133 = vpop.f32.mrf.mxu0
    %v5134 = vadd.f32 0.0, %v5133
    %v5135 = vpop.f32.mrf.mxu0
    %5136 = vdwg.mxu0
    %5137 = vmatpush.bf16.msra.mxu0 %v5065
    %5138 = vmatpush.bf16.msra.mxu0 %v5061
    %5139 = vmatpush.bf16.msra.mxu0 %v5057
    %5140 = vmatpush.bf16.msra.mxu0 %v5053
    %5141 = vmatpush.bf16.msra.mxu0 %v5049
    %5142 = vmatpush.bf16.msra.mxu0 %v5045
    %5143 = vmatpush.bf16.msra.mxu0 %v5041
    %5144 = vmatpush.bf16.msra.mxu0 %v5037
    %5145 = vmatmul.bf16.gmra.mxu0 %v4905
    %v5146 = vpop.f32.mrf.mxu0
    %v5147 = vadd.f32 0.0, %v5146
    %v5148 = vpop.f32.mrf.mxu0
    %5149 = vdwg.mxu0
    %v5150 = vadd.f32 %v4901, %v5108
    %v5151 = vadd.f32 %v4902, %v5121
    %v5152 = vadd.f32 %v4903, %v5134
    %v5153 = vadd.f32 %v4904, %v5147
    %v5154 = vxor.u32 %v5150, 2147483648
    %v5155 = vmul.f32 %v5154, 1.442695
    %v5156 = vpow.pop %v5155
    %v5157 = vadd.f32 %v5156, 1.0
    %v5158 = vrcp.pop %v5157
    %v5159 = vmul.f32 %v5157, %v5158
    %v5160 = vsub.f32 1.0, %v5159
    %v5161 = vmul.f32 %v5158, %v5160
    %v5162 = vadd.f32 %v5158, %v5161
    %vm5163 = vweird.f32 %v5157
    %vm5164 = vweird.f32 %v5158
    %vm5165 = vmor %vm5163, %vm5164
    %v5166 = vsel %vm5165, %v5158, %v5162
    %v5167 = vand.u32 2147483647, %v5157
    %vm5168 = vcmp.eq.f32.partialorder %v5167, 8.507059e+37
    %v5169 = vand.u32 %v5157, 2147483648
    %v5170 = vor.u32 1.1754944e-38, %v5169
    %v5171 = vsel %vm5168, %v5170, %v5166
    %v5172 = vmul.f32 1.0, %v5171
    %v5173 = vxor.u32 %v5151, 2147483648
    %v5174 = vmul.f32 %v5173, 1.442695
    %v5175 = vpow.pop %v5174
    %v5176 = vadd.f32 %v5175, 1.0
    %v5177 = vrcp.pop %v5176
    %v5178 = vmul.f32 %v5176, %v5177
    %v5179 = vsub.f32 1.0, %v5178
    %v5180 = vmul.f32 %v5177, %v5179
    %v5181 = vadd.f32 %v5177, %v5180
    %vm5182 = vweird.f32 %v5176
    %vm5183 = vweird.f32 %v5177
    %vm5184 = vmor %vm5182, %vm5183
    %v5185 = vsel %vm5184, %v5177, %v5181
    %v5186 = vand.u32 2147483647, %v5176
    %vm5187 = vcmp.eq.f32.partialorder %v5186, 8.507059e+37
    %v5188 = vand.u32 %v5176, 2147483648
    %v5189 = vor.u32 1.1754944e-38, %v5188
    %v5190 = vsel %vm5187, %v5189, %v5185
    %v5191 = vmul.f32 1.0, %v5190
    %v5192 = vtanh.pop %v5152
    %v5193 = vxor.u32 %v5153, 2147483648
    %v5194 = vmul.f32 %v5193, 1.442695
    %v5195 = vpow.pop %v5194
    %v5196 = vadd.f32 %v5195, 1.0
    %v5197 = vrcp.pop %v5196
    %v5198 = vmul.f32 %v5196, %v5197
    %v5199 = vsub.f32 1.0, %v5198
    %v5200 = vmul.f32 %v5197, %v5199
    %v5201 = vadd.f32 %v5197, %v5200
    %vm5202 = vweird.f32 %v5196
    %vm5203 = vweird.f32 %v5197
    %vm5204 = vmor %vm5202, %vm5203
    %v5205 = vsel %vm5204, %v5197, %v5201
    %v5206 = vand.u32 2147483647, %v5196
    %vm5207 = vcmp.eq.f32.partialorder %v5206, 8.507059e+37
    %v5208 = vand.u32 %v5196, 2147483648
    %v5209 = vor.u32 1.1754944e-38, %v5208
    %v5210 = vsel %vm5207, %v5209, %v5205
    %v5211 = vmul.f32 1.0, %v5210
    %v5212 = vmul.f32 %v5191, %v4573
    %v5213 = vmul.f32 %v5172, %v5192
    %v5214 = vadd.f32 %v5212, %v5213
    %v5215 = vtanh.pop %v5214
    %v5216 = vmul.f32 %v5211, %v5215
    %s5217 = sadd.s32 %s85, 7
    %s5218 = smul.u32 %s5217, 8
    %s5219 = smul.u32 %s86, 64
    %s5220 = scalar_lea.vmem [#allocation2], %s5218
    %5221 = vst [vmem:[%s5220] sm:$0xff] %v4900
    %s5222 = scalar_lea.vmem [#allocation3], %s5219
    %5223 = vst [vmem:[%s5222] sm:$0xff] %v5216
    %5224 = vst [vmem:[#allocation4] sm:$0xff] %v4900
    %5225 = vst [vmem:[#allocation5] sm:$0xff] %v4898
    %5226 = vst [vmem:[#allocation6] sm:$0xff] %v5216
    %5227 = vst [vmem:[#allocation7] sm:$0xff] %v5214
    // Predicated region
    $region42: #{tpu_custom_call.1} parent=1 // pred_check
      %p5228 = pneg %p77
    $region43: #{tpu_custom_call.1} parent=1 // pred_check_branch
      %5230 = sbr.rel (%p5228) target = $region45
    $region44: #{tpu_custom_call.1} parent=1 // pred_region
      %v5231 = vld [vmem:[#allocation2] sm:$0xff]
      %v5232 = vld [vmem:[#allocation2 + $0x8] sm:$0xff]
      %v5233 = vld [vmem:[#allocation2 + $0x10] sm:$0xff]
      %v5234 = vld [vmem:[#allocation2 + $0x18] sm:$0xff]
      %v5235 = vld [vmem:[#allocation2 + $0x20] sm:$0xff]
      %v5236 = vld [vmem:[#allocation2 + $0x28] sm:$0xff]
      %v5237 = vld [vmem:[#allocation2 + $0x30] sm:$0xff]
      %v5238 = vld [vmem:[#allocation2 + $0x38] sm:$0xff]
      %v5239 = vld [vmem:[%s4] sm:$0xff]
      %v5240 = vld [vmem:[%s4 + $0x8] sm:$0xff]
      %v5241 = vld [vmem:[%s4 + $0x10] sm:$0xff]
      %v5242 = vld [vmem:[%s4 + $0x18] sm:$0xff]
      %v5243 = vld [vmem:[%s4 + $0x20] sm:$0xff]
      %v5244 = vld [vmem:[%s4 + $0x28] sm:$0xff]
      %v5245 = vld [vmem:[%s4 + $0x30] sm:$0xff]
      %v5246 = vld [vmem:[%s4 + $0x38] sm:$0xff]
      %v5247 = vld [vmem:[%s4 + $0x40] sm:$0xff]
      %v5248 = vld [vmem:[%s4 + $0x48] sm:$0xff]
      %v5249 = vld [vmem:[%s4 + $0x50] sm:$0xff]
      %v5250 = vld [vmem:[%s4 + $0x58] sm:$0xff]
      %v5251 = vld [vmem:[%s4 + $0x60] sm:$0xff]
      %v5252 = vld [vmem:[%s4 + $0x68] sm:$0xff]
      %v5253 = vld [vmem:[%s4 + $0x70] sm:$0xff]
      %v5254 = vld [vmem:[%s4 + $0x78] sm:$0xff]
      %v5255 = vld [vmem:[#allocation3] sm:$0xff]
      %v5256 = vld [vmem:[#allocation3 + $0x8] sm:$0xff]
      %v5257 = vld [vmem:[#allocation3 + $0x10] sm:$0xff]
      %v5258 = vld [vmem:[#allocation3 + $0x18] sm:$0xff]
      %v5259 = vld [vmem:[#allocation3 + $0x20] sm:$0xff]
      %v5260 = vld [vmem:[#allocation3 + $0x28] sm:$0xff]
      %v5261 = vld [vmem:[#allocation3 + $0x30] sm:$0xff]
      %v5262 = vld [vmem:[#allocation3 + $0x38] sm:$0xff]
      %v5263 = vld [vmem:[%s4 + $0x80] sm:$0xff]
      %v5264 = vld [vmem:[%s4 + $0x88] sm:$0xff]
      %v5265 = vld [vmem:[%s4 + $0x90] sm:$0xff]
      %v5266 = vld [vmem:[%s4 + $0x98] sm:$0xff]
      %v5267 = vld [vmem:[%s4 + $0xa0] sm:$0xff]
      %v5268 = vld [vmem:[%s4 + $0xa8] sm:$0xff]
      %v5269 = vld [vmem:[%s4 + $0xb0] sm:$0xff]
      %v5270 = vld [vmem:[%s4 + $0xb8] sm:$0xff]
      %v5271 = vld [vmem:[%s4 + $0xc0] sm:$0xff]
      %v5272 = vld [vmem:[%s4 + $0xc8] sm:$0xff]
      %v5273 = vld [vmem:[%s4 + $0xd0] sm:$0xff]
      %v5274 = vld [vmem:[%s4 + $0xd8] sm:$0xff]
      %v5275 = vld [vmem:[%s4 + $0xe0] sm:$0xff]
      %v5276 = vld [vmem:[%s4 + $0xe8] sm:$0xff]
      %v5277 = vld [vmem:[%s4 + $0xf0] sm:$0xff]
      %v5278 = vld [vmem:[%s4 + $0xf8] sm:$0xff]
      %5279 = vmatpush.msra.mxu0 %v5278
      %5280 = vmatpush.msra.mxu0 %v5277
      %5281 = vmatpush.msra.mxu0 %v5276
      %5282 = vmatpush.msra.mxu0 %v5275
      %5283 = vmatpush.msra.mxu0 %v5274
      %5284 = vmatpush.msra.mxu0 %v5273
      %5285 = vmatpush.msra.mxu0 %v5272
      %5286 = vmatpush.msra.mxu0 %v5271
      %5287 = vmatpush.msra.mxu0 %v5270
      %5288 = vmatpush.msra.mxu0 %v5269
      %5289 = vmatpush.msra.mxu0 %v5268
      %5290 = vmatpush.msra.mxu0 %v5267
      %5291 = vmatpush.msra.mxu0 %v5266
      %5292 = vmatpush.msra.mxu0 %v5265
      %5293 = vmatpush.msra.mxu0 %v5264
      %5294 = vmatpush.msra.mxu0 %v5263
      %5295 = vmatmul.f32.gmra.mxu0 %v5255
      %v5296 = vpop.f32.mrf.mxu0
      %v5297 = vadd.f32 0.0, %v5296
      %5298 = vmatmul.f32.gmra.mxu0 %v5256
      %v5299 = vpop.f32.mrf.mxu0
      %v5300 = vadd.f32 0.0, %v5299
      %5301 = vmatmul.f32.gmra.mxu0 %v5257
      %v5302 = vpop.f32.mrf.mxu0
      %v5303 = vadd.f32 0.0, %v5302
      %5304 = vmatmul.f32.gmra.mxu0 %v5258
      %v5305 = vpop.f32.mrf.mxu0
      %v5306 = vadd.f32 0.0, %v5305
      %5307 = vmatmul.f32.gmra.mxu0 %v5259
      %v5308 = vpop.f32.mrf.mxu0
      %v5309 = vadd.f32 0.0, %v5308
      %5310 = vmatmul.f32.gmra.mxu0 %v5260
      %v5311 = vpop.f32.mrf.mxu0
      %v5312 = vadd.f32 0.0, %v5311
      %5313 = vmatmul.f32.gmra.mxu0 %v5261
      %v5314 = vpop.f32.mrf.mxu0
      %v5315 = vadd.f32 0.0, %v5314
      %5316 = vmatmul.f32.gmra.mxu0 %v5262
      %v5317 = vpop.f32.mrf.mxu0
      %v5318 = vadd.f32 0.0, %v5317
      %5319 = vdwg.mxu0
      %5320 = vmatpush.msra.mxu0 %v5254
      %5321 = vmatpush.msra.mxu0 %v5253
      %5322 = vmatpush.msra.mxu0 %v5252
      %5323 = vmatpush.msra.mxu0 %v5251
      %5324 = vmatpush.msra.mxu0 %v5250
      %5325 = vmatpush.msra.mxu0 %v5249
      %5326 = vmatpush.msra.mxu0 %v5248
      %5327 = vmatpush.msra.mxu0 %v5247
      %5328 = vmatpush.msra.mxu0 %v5246
      %5329 = vmatpush.msra.mxu0 %v5245
      %5330 = vmatpush.msra.mxu0 %v5244
      %5331 = vmatpush.msra.mxu0 %v5243
      %5332 = vmatpush.msra.mxu0 %v5242
      %5333 = vmatpush.msra.mxu0 %v5241
      %5334 = vmatpush.msra.mxu0 %v5240
      %5335 = vmatpush.msra.mxu0 %v5239
      %5336 = vmatmul.f32.gmra.mxu0 %v5231
      %v5337 = vpop.f32.mrf.mxu0
      %v5338 = vadd.f32 %v5297, %v5337
      %5339 = vmatmul.f32.gmra.mxu0 %v5232
      %v5340 = vpop.f32.mrf.mxu0
      %v5341 = vadd.f32 %v5300, %v5340
      %5342 = vmatmul.f32.gmra.mxu0 %v5233
      %v5343 = vpop.f32.mrf.mxu0
      %v5344 = vadd.f32 %v5303, %v5343
      %5345 = vmatmul.f32.gmra.mxu0 %v5234
      %v5346 = vpop.f32.mrf.mxu0
      %v5347 = vadd.f32 %v5306, %v5346
      %5348 = vmatmul.f32.gmra.mxu0 %v5235
      %v5349 = vpop.f32.mrf.mxu0
      %v5350 = vadd.f32 %v5309, %v5349
      %5351 = vmatmul.f32.gmra.mxu0 %v5236
      %v5352 = vpop.f32.mrf.mxu0
      %v5353 = vadd.f32 %v5312, %v5352
      %5354 = vmatmul.f32.gmra.mxu0 %v5237
      %v5355 = vpop.f32.mrf.mxu0
      %v5356 = vadd.f32 %v5315, %v5355
      %5357 = vmatmul.f32.gmra.mxu0 %v5238
      %v5358 = vpop.f32.mrf.mxu0
      %v5359 = vadd.f32 %v5318, %v5358
      %5360 = vdwg.mxu0
      %v5361 = vld [vmem:[%s5] sm:$0x1]
      %v5363 = vperm.slane %v5361, 0
      %v5365 = vadd.f32 %v5338, %v5363
      %v5366 = vadd.f32 %v5341, %v5363
      %v5367 = vadd.f32 %v5344, %v5363
      %v5368 = vadd.f32 %v5347, %v5363
      %v5369 = vadd.f32 %v5350, %v5363
      %v5370 = vadd.f32 %v5353, %v5363
      %v5371 = vadd.f32 %v5356, %v5363
      %v5372 = vadd.f32 %v5359, %v5363
      %vm5373 = vcmask 15360
      %5374 = vst.msk [vmem:[%s6] sm:$0xff] %vm5373, %v5365
      %5375 = vst.msk [vmem:[%s6 + $0x8] sm:$0xff] %vm5373, %v5366
      %5376 = vst.msk [vmem:[%s6 + $0x10] sm:$0xff] %vm5373, %v5367
      %5377 = vst.msk [vmem:[%s6 + $0x18] sm:$0xff] %vm5373, %v5368
      %5378 = vst.msk [vmem:[%s6 + $0x20] sm:$0xff] %vm5373, %v5369
      %5379 = vst.msk [vmem:[%s6 + $0x28] sm:$0xff] %vm5373, %v5370
      %5380 = vst.msk [vmem:[%s6 + $0x30] sm:$0xff] %vm5373, %v5371
      %5381 = vst.msk [vmem:[%s6 + $0x38] sm:$0xff] %vm5373, %v5372
    $region45: #{tpu_custom_call.1} parent=1 // pred_fallthru
      _
    // Predicated region
    $region46: #{tpu_custom_call.1} parent=1 // pred_check
      _
    $region47: #{tpu_custom_call.1} parent=1 // pred_check_branch
      %5383 = sbr.rel (0) target = $region49
    $region48: #{tpu_custom_call.1} parent=1 // pred_region
      _
    $region49: #{tpu_custom_call.1} parent=1 // pred_fallthru
      _
    // Predicated region
    $region50: #{tpu_custom_call.1} parent=1 // pred_check
      _
    $region51: #{tpu_custom_call.1} parent=1 // pred_check_branch
      %5385 = sbr.rel (0) target = $region53
    $region52: #{tpu_custom_call.1} parent=1 // pred_region
      _
    $region53: #{tpu_custom_call.1} parent=1 // pred_fallthru
      _
    %5386 = vsyncpa [#allocation9], 1
    %5387 = vsyncpa [#allocation11], 1

</llo_original>
